<compile_context>
chip_gen: v5e
topology: v5e:2x2
jax: 0.10.0
libtpu: 0.0.40
codegen_flags: <defaults>
</compile_context>

<pallas_src>
import jax
import jax.numpy as jnp
from jax.experimental import pallas as pl
from jax.experimental.pallas import tpu as pltpu


# ----------------------------------------------------------------------------
# Weight layout helper (glue JAX, runs once).
# Gate-major / direction-minor column layout:
#   [i_f, i_b, f_f, f_b, g_f, g_b, o_f, o_b], each block H wide (G = 8H).
# ----------------------------------------------------------------------------
def _combine_dir_cols(m_fwd, m_bwd, hidden):
    """m_fwd/m_bwd: (rows, 4H) in PyTorch gate order [i,f,g,o] -> (rows, 8H)."""
    rows = m_fwd.shape[0]
    stacked = jnp.stack(
        [m_fwd.reshape(rows, 4, hidden), m_bwd.reshape(rows, 4, hidden)], axis=2
    )
    return stacked.reshape(rows, 8 * hidden)


# ----------------------------------------------------------------------------
# Fused kernel factory.
# refs: emb(T,B,D) f32, fwd_mask(1,G) i32,
#       per layer: W_ih(in,G) bf16, W_hh(2H,G) bf16 block-diag, bias(1,G) f32,
#       W_fc_emb(D,C) f32, W_fc_lstm(2H,C) f32, b_fc(1,C) f32,
#       out(B,C) f32,
#       scratch: gx(T,B,G) f32, h_fwd(T,B,H) f32, h_bwd(T,B,H) f32.
# ----------------------------------------------------------------------------
def _make_fused_kernel(num_layers, T, B, H):
    H2 = 2 * H          # concat(fwd, bwd) hidden width
    G = 8 * H           # 4 gates x 2 directions

    def kernel(*refs):
        emb_ref, mask_ref = refs[0], refs[1]
        layer_refs = []
        p = 2
        for _ in range(num_layers):
            layer_refs.append((refs[p], refs[p + 1], refs[p + 2]))
            p += 3
        wfce_ref, wfcl_ref, bfc_ref = refs[p], refs[p + 1], refs[p + 2]
        out_ref = refs[p + 3]
        gx_ref, hf_ref, hb_ref = refs[p + 4], refs[p + 5], refs[p + 6]

        # Hoisted loop-invariant values.
        fwd_cols = mask_ref[...] != 0                    # (1, G) fwd-direction columns
        h0 = jnp.zeros((B, H2), jnp.float32)
        c0 = jnp.zeros((B, H2), jnp.float32)
        pool0 = jnp.zeros((B, H2), jnp.float32)

        lstm_pool = pool0
        for layer in range(num_layers):
            wih_ref, whh_ref, b_ref = layer_refs[layer]
            is_last = layer == num_layers - 1

            # ---- Time-independent input projection, hoisted out of the
            #      recurrence as one big matmul (bias folded in). ----
            if layer == 0:
                x2d = emb_ref[...].reshape(T * B, -1).astype(jnp.bfloat16)
                gx = jnp.dot(x2d, wih_ref[...],
                             preferred_element_type=jnp.float32)
            else:
                w = wih_ref[...]                                     # (2H, G) bf16
                xf = hf_ref[...].reshape(T * B, H).astype(jnp.bfloat16)
                xb = hb_ref[...].reshape(T * B, H).astype(jnp.bfloat16)
                gx = (jnp.dot(xf, w[:H], preferred_element_type=jnp.float32)
                      + jnp.dot(xb, w[H:], preferred_element_type=jnp.float32))
            gx_ref[...] = (gx + b_ref[...]).reshape(T, B, G)

            whh = whh_ref[...]      # (2H, G) bf16 block-diagonal, hoisted

            def step(t, carry, whh=whh, is_last=is_last):
                h, c, pool = carry
                # fwd direction reads time t, bwd direction reads time T-1-t.
                pre = jnp.where(fwd_cols, gx_ref[t], gx_ref[T - 1 - t])   # (B, G)
                gates = pre + jnp.dot(h.astype(jnp.bfloat16), whh,
                                      preferred_element_type=jnp.float32)
                sig = jax.nn.sigmoid(gates)       # one full-width EUP pass
                tah = jnp.tanh(gates)             # one full-width EUP pass
                i_g = sig[:, 0 * H2:1 * H2]
                f_g = sig[:, 1 * H2:2 * H2]
                g_g = tah[:, 2 * H2:3 * H2]
                o_g = sig[:, 3 * H2:4 * H2]
                c_new = f_g * c + i_g * g_g
                h_new = o_g * jnp.tanh(c_new)     # (B, 2H) = [h_fwd(t) | h_bwd(T-1-t)]
                if is_last:
                    # Running ReLU-max pool: no per-timestep writeback needed.
                    pool = jnp.maximum(pool, h_new)
                else:
                    hf_ref[t] = h_new[:, :H]             # output at time t
                    hb_ref[T - 1 - t] = h_new[:, H:]     # output at time T-1-t
                return h_new, c_new, pool

            carry = jax.lax.fori_loop(0, T, step, (h0, c0, pool0), unroll=True)
            if is_last:
                lstm_pool = carry[2]
            # TODO(synk): inter-layer dropout (training mode) intentionally
            # omitted (eval semantics).

        # ---- Head: ReLU + max-pool over T + Linear + log_softmax. ----
        emb_pool = jnp.maximum(jnp.max(emb_ref[...], axis=0), 0.0)        # (B, D)
        logits = (jnp.dot(emb_pool, wfce_ref[...],
                          preferred_element_type=jnp.float32)
                  + jnp.dot(lstm_pool, wfcl_ref[...],
                            preferred_element_type=jnp.float32)
                  + bfc_ref[...])                                         # (B, C)
        m = jnp.max(logits, axis=1, keepdims=True)
        lse = m + jnp.log(jnp.sum(jnp.exp(logits - m), axis=1, keepdims=True))
        out_ref[...] = logits - lse

    return kernel


# ----------------------------------------------------------------------------
# Full forward pass (wrapper).
# ----------------------------------------------------------------------------
def rnn_forward(x_ids, embed_w, lstm_params, fc_w, fc_b):
    """
    x_ids:       (B, T) int32 token ids
    embed_w:     (num_word, D)
    lstm_params: list (per layer) of dicts 'fwd'/'bwd' -> (w_ih, w_hh, b_ih, b_hh)
                 in PyTorch layout (w_ih: (4H, in), w_hh: (4H, H), biases: (4H,))
    fc_w:        (num_class, D + 2H)   (PyTorch nn.Linear layout)
    fc_b:        (num_class,)
    returns:     (B, num_class) log-probabilities
    """
    B, T = x_ids.shape
    D = embed_w.shape[1]
    H = lstm_params[0]["fwd"][1].shape[1]     # w_hh: (4H, H)
    C = fc_w.shape[0]
    L = len(lstm_params)
    G = 8 * H

    # Embedding gather stays in glue JAX; gather straight into the time-major
    # layout the kernel consumes so no big-tensor transpose/reverse is emitted.
    emb_tbd = embed_w[x_ids.T].astype(jnp.float32)                  # (T, B, D)

    # Column mask: True (1) on forward-direction gate columns.
    fwd_mask = (
        (jnp.arange(G, dtype=jnp.int32) % (2 * H)) < H
    ).astype(jnp.int32)[None, :]                                    # (1, G)

    inputs = [emb_tbd, fwd_mask]
    for p in lstm_params:
        w_ih_f, w_hh_f, b_ih_f, b_hh_f = p["fwd"]
        w_ih_b, w_hh_b, b_ih_b, b_hh_b = p["bwd"]
        wih = _combine_dir_cols(w_ih_f.T, w_ih_b.T, H).astype(jnp.bfloat16)
        zeros_h = jnp.zeros_like(w_hh_f.T)                          # (H, 4H)
        whh = jnp.concatenate(
            [_combine_dir_cols(w_hh_f.T, zeros_h, H),
             _combine_dir_cols(zeros_h, w_hh_b.T, H)], axis=0
        ).astype(jnp.bfloat16)                                      # (2H, G) block-diag
        bias = _combine_dir_cols(
            (b_ih_f + b_hh_f)[None, :], (b_ih_b + b_hh_b)[None, :], H
        ).astype(jnp.float32)                                       # (1, G)
        inputs += [wih, whh, bias]

    fc_t = fc_w.T.astype(jnp.float32)                               # (D + 2H, C)
    inputs += [fc_t[:D], fc_t[D:], fc_b[None, :].astype(jnp.float32)]

    kernel = _make_fused_kernel(L, T, B, H)
    vmem = pl.BlockSpec(memory_space=pltpu.MemorySpace.VMEM)
    # TODO(synk): at production sizes (T=179, large B) add a batch grid axis with
    # dimension_semantics=("parallel",) and set vmem_limit_bytes for v7x's 64 MiB.
    return pl.pallas_call(
        kernel,
        out_shape=jax.ShapeDtypeStruct((B, C), jnp.float32),
        in_specs=[vmem] * len(inputs),
        out_specs=vmem,
        scratch_shapes=[
            pltpu.VMEM((T, B, G), jnp.float32),   # per-timestep input-projection gates
            pltpu.VMEM((T, B, H), jnp.float32),   # fwd outputs of non-final layers
            pltpu.VMEM((T, B, H), jnp.float32),   # bwd outputs of non-final layers
        ],
    )(*inputs)


# ----------------------------------------------------------------------------
# Pure-JAX reference (PyTorch eval semantics) for correctness checking.
# ----------------------------------------------------------------------------
def _reference_forward(x_ids, embed_w, lstm_params, fc_w, fc_b):
    emb = embed_w[x_ids]                                  # (B, T, D)

    def cell(x_seq, w_ih, w_hh, b_ih, b_hh):              # x_seq: (T, B, in)
        T_, B_, _ = x_seq.shape
        H_ = w_hh.shape[1]
        h = jnp.zeros((B_, H_), jnp.float32)
        c = jnp.zeros((B_, H_), jnp.float32)
        outs = []
        for t in range(T_):
            gates = x_seq[t] @ w_ih.T + h @ w_hh.T + b_ih + b_hh
            i = jax.nn.sigmoid(gates[:, 0 * H_:1 * H_])
            f = jax.nn.sigmoid(gates[:, 1 * H_:2 * H_])
            g = jnp.tanh(gates[:, 2 * H_:3 * H_])
            o = jax.nn.sigmoid(gates[:, 3 * H_:4 * H_])
            c = f * c + i * g
            h = o * jnp.tanh(c)
            outs.append(h)
        return jnp.stack(outs)                            # (T, B, H)

    x_t = jnp.transpose(emb, (1, 0, 2))
    for p in lstm_params:
        hf = cell(x_t, *p["fwd"])
        hb = cell(x_t[::-1], *p["bwd"])[::-1]
        x_t = jnp.concatenate([hf, hb], axis=-1)
    feat = jnp.concatenate([emb, jnp.transpose(x_t, (1, 0, 2))], axis=-1)
    pooled = jnp.max(jax.nn.relu(feat), axis=1)
    logits = pooled @ fc_w.T + fc_b
    return jax.nn.log_softmax(logits, axis=1)


# ----------------------------------------------------------------------------
# Deterministic parameter construction + smoke test.
# ----------------------------------------------------------------------------
def _make_params(key, num_word, dim, hidden, num_layers, num_class):
    ks = iter(jax.random.split(key, 4 + num_layers * 16 + 4))

    def nxt(shape, scale=0.1):
        return jax.random.normal(next(ks), shape, jnp.float32) * scale

    embed_w = nxt((num_word, dim))

    lstm_params = []
    in_dim = dim
    for _ in range(num_layers):
        layer = {}
        for d in ("fwd", "bwd"):
            layer[d] = (
                nxt((4 * hidden, in_dim)),   # w_ih
                nxt((4 * hidden, hidden)),   # w_hh
                nxt((4 * hidden,)),          # b_ih
                nxt((4 * hidden,)),          # b_hh
            )
        lstm_params.append(layer)
        in_dim = 2 * hidden

    fc_w = nxt((num_class, 2 * hidden + dim))
    fc_b = nxt((num_class,))
    return embed_w, lstm_params, fc_w, fc_b


if __name__ == "__main__":
    num_word = 50      # args.num_word
    dim = 16           # args.dim (embedding size)
    hidden = 32        # args.hidden_size
    num_layers = 2     # args.num_layers
    num_class = 4      # args.num_class
    B, T = 2, 8        # batch, seq_len (== max-pool window; 179 in original)

    key = jax.random.PRNGKey(0)
    k_param, k_ids = jax.random.split(key)
    embed_w, lstm_params, fc_w, fc_b = _make_params(
        k_param, num_word, dim, hidden, num_layers, num_class
    )
    x_ids = jax.random.randint(k_ids, (B, T), 0, num_word, dtype=jnp.int32)

    out = rnn_forward(x_ids, embed_w, lstm_params, fc_w, fc_b)
    out = jax.block_until_ready(out)

    assert out.shape == (B, num_class), out.shape
    # log_softmax rows must sum to ~1 in probability space
    assert jnp.allclose(jnp.sum(jnp.exp(out), axis=1), 1.0, atol=1e-4)
    # Match the pure-JAX (f32) reference within bf16-matmul tolerance.
    ref = _reference_forward(x_ids, embed_w, lstm_params, fc_w, fc_b)
    assert jnp.allclose(out, ref, atol=2e-2), jnp.max(jnp.abs(out - ref))
    print("KERNEL_OK")
</pallas_src>

<mosaic_0001>
module attributes {stable_mosaic.version = 11 : i64} {
  func.func @kernel(%arg0: memref<8x2x16xf32, #tpu.memory_space<vmem>>, %arg1: memref<1x256xi32, #tpu.memory_space<vmem>>, %arg2: memref<16x256xbf16, #tpu.memory_space<vmem>>, %arg3: memref<64x256xbf16, #tpu.memory_space<vmem>>, %arg4: memref<1x256xf32, #tpu.memory_space<vmem>>, %arg5: memref<64x256xbf16, #tpu.memory_space<vmem>>, %arg6: memref<64x256xbf16, #tpu.memory_space<vmem>>, %arg7: memref<1x256xf32, #tpu.memory_space<vmem>>, %arg8: memref<16x4xf32, #tpu.memory_space<vmem>>, %arg9: memref<64x4xf32, #tpu.memory_space<vmem>>, %arg10: memref<1x4xf32, #tpu.memory_space<vmem>>, %arg11: memref<2x4xf32, #tpu.memory_space<vmem>>, %arg12: memref<8x2x256xf32, #tpu.memory_space<vmem>>, %arg13: memref<8x2x32xf32, #tpu.memory_space<vmem>>, %arg14: memref<8x2x32xf32, #tpu.memory_space<vmem>>) attributes {dimension_semantics = [], scalar_prefetch = 0 : i64, scratch_operands = 3 : i64, tpu.core_type = #tpu.core_type<tc>} {
    %c0 = arith.constant 0 : index
    %c0_0 = arith.constant 0 : index
    %0 = vector.load %arg1[%c0, %c0_0] : memref<1x256xi32, #tpu.memory_space<vmem>>, vector<1x256xi32>
    %c0_i32 = arith.constant 0 : i32
    %1 = vector.broadcast %c0_i32 : i32 to vector<1x256xi32>
    %2 = arith.cmpi ne, %0, %1 : vector<1x256xi32>
    %cst = arith.constant 0.000000e+00 : f32
    %3 = vector.broadcast %cst : f32 to vector<2x64xf32>
    %cst_1 = arith.constant 0.000000e+00 : f32
    %4 = vector.broadcast %cst_1 : f32 to vector<2x64xf32>
    %cst_2 = arith.constant 0.000000e+00 : f32
    %5 = vector.broadcast %cst_2 : f32 to vector<2x64xf32>
    %c0_3 = arith.constant 0 : index
    %c0_4 = arith.constant 0 : index
    %c0_5 = arith.constant 0 : index
    %6 = vector.load %arg0[%c0_3, %c0_4, %c0_5] : memref<8x2x16xf32, #tpu.memory_space<vmem>>, vector<8x2x16xf32>
    %7 = vector.shape_cast %6 : vector<8x2x16xf32> to vector<16x16xf32>
    %8 = arith.truncf %7 : vector<16x16xf32> to vector<16x16xbf16>
    %c0_6 = arith.constant 0 : index
    %c0_7 = arith.constant 0 : index
    %9 = vector.load %arg2[%c0_6, %c0_7] : memref<16x256xbf16, #tpu.memory_space<vmem>>, vector<16x256xbf16>
    %cst_8 = arith.constant dense<0.000000e+00> : vector<16x256xf32>
    %10 = tpu.matmul %8, %9, %cst_8 {dimension_numbers = #tpu.dot_dimension_numbers<[1], [0], [0], [1], [0, 0, 1, 1], [], []>} : vector<16x16xbf16>, vector<16x256xbf16>, vector<16x256xf32> -> vector<16x256xf32>
    %c0_9 = arith.constant 0 : index
    %c0_10 = arith.constant 0 : index
    %11 = vector.load %arg4[%c0_9, %c0_10] : memref<1x256xf32, #tpu.memory_space<vmem>>, vector<1x256xf32>
    %12 = vector.broadcast %11 : vector<1x256xf32> to vector<16x256xf32>
    %13 = arith.addf %10, %12 : vector<16x256xf32>
    %14 = vector.shape_cast %13 : vector<16x256xf32> to vector<8x2x256xf32>
    %c0_11 = arith.constant 0 : index
    %c0_12 = arith.constant 0 : index
    %c0_13 = arith.constant 0 : index
    %15 = vector.load %arg12[%c0_11, %c0_12, %c0_13] : memref<8x2x256xf32, #tpu.memory_space<vmem>>, vector<8x2x256xf32>
    tpu.vector_store %arg12[%c0_11, %c0_12, %c0_13], %14 {strides = array<i32>} : memref<8x2x256xf32, #tpu.memory_space<vmem>>, vector<8x2x256xf32>,
    %c0_14 = arith.constant 0 : index
    %c0_15 = arith.constant 0 : index
    %16 = vector.load %arg3[%c0_14, %c0_15] : memref<64x256xbf16, #tpu.memory_space<vmem>>, vector<64x256xbf16>
    %c0_i32_16 = arith.constant 0 : i32
    %17 = arith.index_cast %c0_i32_16 : i32 to index
    %c0_17 = arith.constant 0 : index
    %c0_18 = arith.constant 0 : index
    %18 = vector.load %arg12[%17, %c0_17, %c0_18] : memref<8x2x256xf32, #tpu.memory_space<vmem>>, vector<1x2x256xf32>
    %19 = vector.shape_cast %18 : vector<1x2x256xf32> to vector<2x256xf32>
    %c7_i32 = arith.constant 7 : i32
    %20 = arith.subi %c7_i32, %c0_i32_16 : i32
    %21 = arith.index_cast %20 : i32 to index
    %c0_19 = arith.constant 0 : index
    %c0_20 = arith.constant 0 : index
    %22 = vector.load %arg12[%21, %c0_19, %c0_20] : memref<8x2x256xf32, #tpu.memory_space<vmem>>, vector<1x2x256xf32>
    %23 = vector.shape_cast %22 : vector<1x2x256xf32> to vector<2x256xf32>
    %24 = vector.shape_cast %2 : vector<1x256xi1> to vector<1x256xi1>
    %25 = vector.broadcast %24 : vector<1x256xi1> to vector<2x256xi1>
    %26 = arith.select %25, %19, %23 : vector<2x256xi1>, vector<2x256xf32>
    %27 = arith.truncf %3 : vector<2x64xf32> to vector<2x64xbf16>
    %cst_21 = arith.constant dense<0.000000e+00> : vector<2x256xf32>
    %28 = tpu.matmul %27, %16, %cst_21 {dimension_numbers = #tpu.dot_dimension_numbers<[1], [0], [0], [1], [0, 0, 1, 1], [], []>} : vector<2x64xbf16>, vector<64x256xbf16>, vector<2x256xf32> -> vector<2x256xf32>
    %29 = arith.addf %26, %28 : vector<2x256xf32>
    %30 = arith.negf %29 : vector<2x256xf32>
    %31 = math.exp %30 : vector<2x256xf32>
    %cst_22 = arith.constant 1.000000e+00 : f32
    %32 = vector.broadcast %cst_22 : f32 to vector<2x256xf32>
    %33 = arith.addf %32, %31 : vector<2x256xf32>
    %34 = arith.divf %32, %33 : vector<2x256xf32>
    %35 = math.tanh %29 : vector<2x256xf32>
    %36 = vector.extract_strided_slice %34 {offsets = [0, 0], sizes = [2, 64], strides = [1, 1]} : vector<2x256xf32> to vector<2x64xf32>
    %37 = vector.extract_strided_slice %34 {offsets = [0, 64], sizes = [2, 64], strides = [1, 1]} : vector<2x256xf32> to vector<2x64xf32>
    %38 = vector.extract_strided_slice %35 {offsets = [0, 128], sizes = [2, 64], strides = [1, 1]} : vector<2x256xf32> to vector<2x64xf32>
    %39 = vector.extract_strided_slice %34 {offsets = [0, 192], sizes = [2, 64], strides = [1, 1]} : vector<2x256xf32> to vector<2x64xf32>
    %40 = arith.mulf %37, %4 : vector<2x64xf32>
    %41 = arith.mulf %36, %38 : vector<2x64xf32>
    %42 = arith.addf %40, %41 : vector<2x64xf32>
    %43 = math.tanh %42 : vector<2x64xf32>
    %44 = arith.mulf %39, %43 : vector<2x64xf32>
    %45 = vector.extract_strided_slice %44 {offsets = [0, 0], sizes = [2, 32], strides = [1, 1]} : vector<2x64xf32> to vector<2x32xf32>
    %46 = arith.index_cast %c0_i32_16 : i32 to index
    %c0_23 = arith.constant 0 : index
    %c0_24 = arith.constant 0 : index
    %47 = vector.load %arg13[%46, %c0_23, %c0_24] : memref<8x2x32xf32, #tpu.memory_space<vmem>>, vector<1x2x32xf32>
    %48 = vector.shape_cast %47 : vector<1x2x32xf32> to vector<2x32xf32>
    %49 = vector.shape_cast %45 : vector<2x32xf32> to vector<1x2x32xf32>
    tpu.vector_store %arg13[%46, %c0_23, %c0_24], %49 {strides = array<i32>} : memref<8x2x32xf32, #tpu.memory_space<vmem>>, vector<1x2x32xf32>,
    %50 = vector.extract_strided_slice %44 {offsets = [0, 32], sizes = [2, 32], strides = [1, 1]} : vector<2x64xf32> to vector<2x32xf32>
    %c7_i32_25 = arith.constant 7 : i32
    %51 = arith.subi %c7_i32_25, %c0_i32_16 : i32
    %52 = arith.index_cast %51 : i32 to index
    %c0_26 = arith.constant 0 : index
    %c0_27 = arith.constant 0 : index
    %53 = vector.load %arg14[%52, %c0_26, %c0_27] : memref<8x2x32xf32, #tpu.memory_space<vmem>>, vector<1x2x32xf32>
    %54 = vector.shape_cast %53 : vector<1x2x32xf32> to vector<2x32xf32>
    %55 = vector.shape_cast %50 : vector<2x32xf32> to vector<1x2x32xf32>
    tpu.vector_store %arg14[%52, %c0_26, %c0_27], %55 {strides = array<i32>} : memref<8x2x32xf32, #tpu.memory_space<vmem>>, vector<1x2x32xf32>,
    %c1_i32 = arith.constant 1 : i32
    %56 = arith.index_cast %c1_i32 : i32 to index
    %c0_28 = arith.constant 0 : index
    %c0_29 = arith.constant 0 : index
    %57 = vector.load %arg12[%56, %c0_28, %c0_29] : memref<8x2x256xf32, #tpu.memory_space<vmem>>, vector<1x2x256xf32>
    %58 = vector.shape_cast %57 : vector<1x2x256xf32> to vector<2x256xf32>
    %c7_i32_30 = arith.constant 7 : i32
    %59 = arith.subi %c7_i32_30, %c1_i32 : i32
    %60 = arith.index_cast %59 : i32 to index
    %c0_31 = arith.constant 0 : index
    %c0_32 = arith.constant 0 : index
    %61 = vector.load %arg12[%60, %c0_31, %c0_32] : memref<8x2x256xf32, #tpu.memory_space<vmem>>, vector<1x2x256xf32>
    %62 = vector.shape_cast %61 : vector<1x2x256xf32> to vector<2x256xf32>
    %63 = vector.shape_cast %2 : vector<1x256xi1> to vector<1x256xi1>
    %64 = vector.broadcast %63 : vector<1x256xi1> to vector<2x256xi1>
    %65 = arith.select %64, %58, %62 : vector<2x256xi1>, vector<2x256xf32>
    %66 = arith.truncf %44 : vector<2x64xf32> to vector<2x64xbf16>
    %cst_33 = arith.constant dense<0.000000e+00> : vector<2x256xf32>
    %67 = tpu.matmul %66, %16, %cst_33 {dimension_numbers = #tpu.dot_dimension_numbers<[1], [0], [0], [1], [0, 0, 1, 1], [], []>} : vector<2x64xbf16>, vector<64x256xbf16>, vector<2x256xf32> -> vector<2x256xf32>
    %68 = arith.addf %65, %67 : vector<2x256xf32>
    %69 = arith.negf %68 : vector<2x256xf32>
    %70 = math.exp %69 : vector<2x256xf32>
    %cst_34 = arith.constant 1.000000e+00 : f32
    %71 = vector.broadcast %cst_34 : f32 to vector<2x256xf32>
    %72 = arith.addf %71, %70 : vector<2x256xf32>
    %73 = arith.divf %71, %72 : vector<2x256xf32>
    %74 = math.tanh %68 : vector<2x256xf32>
    %75 = vector.extract_strided_slice %73 {offsets = [0, 0], sizes = [2, 64], strides = [1, 1]} : vector<2x256xf32> to vector<2x64xf32>
    %76 = vector.extract_strided_slice %73 {offsets = [0, 64], sizes = [2, 64], strides = [1, 1]} : vector<2x256xf32> to vector<2x64xf32>
    %77 = vector.extract_strided_slice %74 {offsets = [0, 128], sizes = [2, 64], strides = [1, 1]} : vector<2x256xf32> to vector<2x64xf32>
    %78 = vector.extract_strided_slice %73 {offsets = [0, 192], sizes = [2, 64], strides = [1, 1]} : vector<2x256xf32> to vector<2x64xf32>
    %79 = arith.mulf %76, %42 : vector<2x64xf32>
    %80 = arith.mulf %75, %77 : vector<2x64xf32>
    %81 = arith.addf %79, %80 : vector<2x64xf32>
    %82 = math.tanh %81 : vector<2x64xf32>
    %83 = arith.mulf %78, %82 : vector<2x64xf32>
    %84 = vector.extract_strided_slice %83 {offsets = [0, 0], sizes = [2, 32], strides = [1, 1]} : vector<2x64xf32> to vector<2x32xf32>
    %85 = arith.index_cast %c1_i32 : i32 to index
    %c0_35 = arith.constant 0 : index
    %c0_36 = arith.constant 0 : index
    %86 = vector.load %arg13[%85, %c0_35, %c0_36] : memref<8x2x32xf32, #tpu.memory_space<vmem>>, vector<1x2x32xf32>
    %87 = vector.shape_cast %86 : vector<1x2x32xf32> to vector<2x32xf32>
    %88 = vector.shape_cast %84 : vector<2x32xf32> to vector<1x2x32xf32>
    tpu.vector_store %arg13[%85, %c0_35, %c0_36], %88 {strides = array<i32>} : memref<8x2x32xf32, #tpu.memory_space<vmem>>, vector<1x2x32xf32>,
    %89 = vector.extract_strided_slice %83 {offsets = [0, 32], sizes = [2, 32], strides = [1, 1]} : vector<2x64xf32> to vector<2x32xf32>
    %c7_i32_37 = arith.constant 7 : i32
    %90 = arith.subi %c7_i32_37, %c1_i32 : i32
    %91 = arith.index_cast %90 : i32 to index
    %c0_38 = arith.constant 0 : index
    %c0_39 = arith.constant 0 : index
    %92 = vector.load %arg14[%91, %c0_38, %c0_39] : memref<8x2x32xf32, #tpu.memory_space<vmem>>, vector<1x2x32xf32>
    %93 = vector.shape_cast %92 : vector<1x2x32xf32> to vector<2x32xf32>
    %94 = vector.shape_cast %89 : vector<2x32xf32> to vector<1x2x32xf32>
    tpu.vector_store %arg14[%91, %c0_38, %c0_39], %94 {strides = array<i32>} : memref<8x2x32xf32, #tpu.memory_space<vmem>>, vector<1x2x32xf32>,
    %c2_i32 = arith.constant 2 : i32
    %95 = arith.index_cast %c2_i32 : i32 to index
    %c0_40 = arith.constant 0 : index
    %c0_41 = arith.constant 0 : index
    %96 = vector.load %arg12[%95, %c0_40, %c0_41] : memref<8x2x256xf32, #tpu.memory_space<vmem>>, vector<1x2x256xf32>
    %97 = vector.shape_cast %96 : vector<1x2x256xf32> to vector<2x256xf32>
    %c7_i32_42 = arith.constant 7 : i32
    %98 = arith.subi %c7_i32_42, %c2_i32 : i32
    %99 = arith.index_cast %98 : i32 to index
    %c0_43 = arith.constant 0 : index
    %c0_44 = arith.constant 0 : index
    %100 = vector.load %arg12[%99, %c0_43, %c0_44] : memref<8x2x256xf32, #tpu.memory_space<vmem>>, vector<1x2x256xf32>
    %101 = vector.shape_cast %100 : vector<1x2x256xf32> to vector<2x256xf32>
    %102 = vector.shape_cast %2 : vector<1x256xi1> to vector<1x256xi1>
    %103 = vector.broadcast %102 : vector<1x256xi1> to vector<2x256xi1>
    %104 = arith.select %103, %97, %101 : vector<2x256xi1>, vector<2x256xf32>
    %105 = arith.truncf %83 : vector<2x64xf32> to vector<2x64xbf16>
    %cst_45 = arith.constant dense<0.000000e+00> : vector<2x256xf32>
    %106 = tpu.matmul %105, %16, %cst_45 {dimension_numbers = #tpu.dot_dimension_numbers<[1], [0], [0], [1], [0, 0, 1, 1], [], []>} : vector<2x64xbf16>, vector<64x256xbf16>, vector<2x256xf32> -> vector<2x256xf32>
    %107 = arith.addf %104, %106 : vector<2x256xf32>
    %108 = arith.negf %107 : vector<2x256xf32>
    %109 = math.exp %108 : vector<2x256xf32>
    %cst_46 = arith.constant 1.000000e+00 : f32
    %110 = vector.broadcast %cst_46 : f32 to vector<2x256xf32>
    %111 = arith.addf %110, %109 : vector<2x256xf32>
    %112 = arith.divf %110, %111 : vector<2x256xf32>
    %113 = math.tanh %107 : vector<2x256xf32>
    %114 = vector.extract_strided_slice %112 {offsets = [0, 0], sizes = [2, 64], strides = [1, 1]} : vector<2x256xf32> to vector<2x64xf32>
    %115 = vector.extract_strided_slice %112 {offsets = [0, 64], sizes = [2, 64], strides = [1, 1]} : vector<2x256xf32> to vector<2x64xf32>
    %116 = vector.extract_strided_slice %113 {offsets = [0, 128], sizes = [2, 64], strides = [1, 1]} : vector<2x256xf32> to vector<2x64xf32>
    %117 = vector.extract_strided_slice %112 {offsets = [0, 192], sizes = [2, 64], strides = [1, 1]} : vector<2x256xf32> to vector<2x64xf32>
    %118 = arith.mulf %115, %81 : vector<2x64xf32>
    %119 = arith.mulf %114, %116 : vector<2x64xf32>
    %120 = arith.addf %118, %119 : vector<2x64xf32>
    %121 = math.tanh %120 : vector<2x64xf32>
    %122 = arith.mulf %117, %121 : vector<2x64xf32>
    %123 = vector.extract_strided_slice %122 {offsets = [0, 0], sizes = [2, 32], strides = [1, 1]} : vector<2x64xf32> to vector<2x32xf32>
    %124 = arith.index_cast %c2_i32 : i32 to index
    %c0_47 = arith.constant 0 : index
    %c0_48 = arith.constant 0 : index
    %125 = vector.load %arg13[%124, %c0_47, %c0_48] : memref<8x2x32xf32, #tpu.memory_space<vmem>>, vector<1x2x32xf32>
    %126 = vector.shape_cast %125 : vector<1x2x32xf32> to vector<2x32xf32>
    %127 = vector.shape_cast %123 : vector<2x32xf32> to vector<1x2x32xf32>
    tpu.vector_store %arg13[%124, %c0_47, %c0_48], %127 {strides = array<i32>} : memref<8x2x32xf32, #tpu.memory_space<vmem>>, vector<1x2x32xf32>,
    %128 = vector.extract_strided_slice %122 {offsets = [0, 32], sizes = [2, 32], strides = [1, 1]} : vector<2x64xf32> to vector<2x32xf32>
    %c7_i32_49 = arith.constant 7 : i32
    %129 = arith.subi %c7_i32_49, %c2_i32 : i32
    %130 = arith.index_cast %129 : i32 to index
    %c0_50 = arith.constant 0 : index
    %c0_51 = arith.constant 0 : index
    %131 = vector.load %arg14[%130, %c0_50, %c0_51] : memref<8x2x32xf32, #tpu.memory_space<vmem>>, vector<1x2x32xf32>
    %132 = vector.shape_cast %131 : vector<1x2x32xf32> to vector<2x32xf32>
    %133 = vector.shape_cast %128 : vector<2x32xf32> to vector<1x2x32xf32>
    tpu.vector_store %arg14[%130, %c0_50, %c0_51], %133 {strides = array<i32>} : memref<8x2x32xf32, #tpu.memory_space<vmem>>, vector<1x2x32xf32>,
    %c3_i32 = arith.constant 3 : i32
    %134 = arith.index_cast %c3_i32 : i32 to index
    %c0_52 = arith.constant 0 : index
    %c0_53 = arith.constant 0 : index
    %135 = vector.load %arg12[%134, %c0_52, %c0_53] : memref<8x2x256xf32, #tpu.memory_space<vmem>>, vector<1x2x256xf32>
    %136 = vector.shape_cast %135 : vector<1x2x256xf32> to vector<2x256xf32>
    %c7_i32_54 = arith.constant 7 : i32
    %137 = arith.subi %c7_i32_54, %c3_i32 : i32
    %138 = arith.index_cast %137 : i32 to index
    %c0_55 = arith.constant 0 : index
    %c0_56 = arith.constant 0 : index
    %139 = vector.load %arg12[%138, %c0_55, %c0_56] : memref<8x2x256xf32, #tpu.memory_space<vmem>>, vector<1x2x256xf32>
    %140 = vector.shape_cast %139 : vector<1x2x256xf32> to vector<2x256xf32>
    %141 = vector.shape_cast %2 : vector<1x256xi1> to vector<1x256xi1>
    %142 = vector.broadcast %141 : vector<1x256xi1> to vector<2x256xi1>
    %143 = arith.select %142, %136, %140 : vector<2x256xi1>, vector<2x256xf32>
    %144 = arith.truncf %122 : vector<2x64xf32> to vector<2x64xbf16>
    %cst_57 = arith.constant dense<0.000000e+00> : vector<2x256xf32>
    %145 = tpu.matmul %144, %16, %cst_57 {dimension_numbers = #tpu.dot_dimension_numbers<[1], [0], [0], [1], [0, 0, 1, 1], [], []>} : vector<2x64xbf16>, vector<64x256xbf16>, vector<2x256xf32> -> vector<2x256xf32>
    %146 = arith.addf %143, %145 : vector<2x256xf32>
    %147 = arith.negf %146 : vector<2x256xf32>
    %148 = math.exp %147 : vector<2x256xf32>
    %cst_58 = arith.constant 1.000000e+00 : f32
    %149 = vector.broadcast %cst_58 : f32 to vector<2x256xf32>
    %150 = arith.addf %149, %148 : vector<2x256xf32>
    %151 = arith.divf %149, %150 : vector<2x256xf32>
    %152 = math.tanh %146 : vector<2x256xf32>
    %153 = vector.extract_strided_slice %151 {offsets = [0, 0], sizes = [2, 64], strides = [1, 1]} : vector<2x256xf32> to vector<2x64xf32>
    %154 = vector.extract_strided_slice %151 {offsets = [0, 64], sizes = [2, 64], strides = [1, 1]} : vector<2x256xf32> to vector<2x64xf32>
    %155 = vector.extract_strided_slice %152 {offsets = [0, 128], sizes = [2, 64], strides = [1, 1]} : vector<2x256xf32> to vector<2x64xf32>
    %156 = vector.extract_strided_slice %151 {offsets = [0, 192], sizes = [2, 64], strides = [1, 1]} : vector<2x256xf32> to vector<2x64xf32>
    %157 = arith.mulf %154, %120 : vector<2x64xf32>
    %158 = arith.mulf %153, %155 : vector<2x64xf32>
    %159 = arith.addf %157, %158 : vector<2x64xf32>
    %160 = math.tanh %159 : vector<2x64xf32>
    %161 = arith.mulf %156, %160 : vector<2x64xf32>
    %162 = vector.extract_strided_slice %161 {offsets = [0, 0], sizes = [2, 32], strides = [1, 1]} : vector<2x64xf32> to vector<2x32xf32>
    %163 = arith.index_cast %c3_i32 : i32 to index
    %c0_59 = arith.constant 0 : index
    %c0_60 = arith.constant 0 : index
    %164 = vector.load %arg13[%163, %c0_59, %c0_60] : memref<8x2x32xf32, #tpu.memory_space<vmem>>, vector<1x2x32xf32>
    %165 = vector.shape_cast %164 : vector<1x2x32xf32> to vector<2x32xf32>
    %166 = vector.shape_cast %162 : vector<2x32xf32> to vector<1x2x32xf32>
    tpu.vector_store %arg13[%163, %c0_59, %c0_60], %166 {strides = array<i32>} : memref<8x2x32xf32, #tpu.memory_space<vmem>>, vector<1x2x32xf32>,
    %167 = vector.extract_strided_slice %161 {offsets = [0, 32], sizes = [2, 32], strides = [1, 1]} : vector<2x64xf32> to vector<2x32xf32>
    %c7_i32_61 = arith.constant 7 : i32
    %168 = arith.subi %c7_i32_61, %c3_i32 : i32
    %169 = arith.index_cast %168 : i32 to index
    %c0_62 = arith.constant 0 : index
    %c0_63 = arith.constant 0 : index
    %170 = vector.load %arg14[%169, %c0_62, %c0_63] : memref<8x2x32xf32, #tpu.memory_space<vmem>>, vector<1x2x32xf32>
    %171 = vector.shape_cast %170 : vector<1x2x32xf32> to vector<2x32xf32>
    %172 = vector.shape_cast %167 : vector<2x32xf32> to vector<1x2x32xf32>
    tpu.vector_store %arg14[%169, %c0_62, %c0_63], %172 {strides = array<i32>} : memref<8x2x32xf32, #tpu.memory_space<vmem>>, vector<1x2x32xf32>,
    %c4_i32 = arith.constant 4 : i32
    %173 = arith.index_cast %c4_i32 : i32 to index
    %c0_64 = arith.constant 0 : index
    %c0_65 = arith.constant 0 : index
    %174 = vector.load %arg12[%173, %c0_64, %c0_65] : memref<8x2x256xf32, #tpu.memory_space<vmem>>, vector<1x2x256xf32>
    %175 = vector.shape_cast %174 : vector<1x2x256xf32> to vector<2x256xf32>
    %c7_i32_66 = arith.constant 7 : i32
    %176 = arith.subi %c7_i32_66, %c4_i32 : i32
    %177 = arith.index_cast %176 : i32 to index
    %c0_67 = arith.constant 0 : index
    %c0_68 = arith.constant 0 : index
    %178 = vector.load %arg12[%177, %c0_67, %c0_68] : memref<8x2x256xf32, #tpu.memory_space<vmem>>, vector<1x2x256xf32>
    %179 = vector.shape_cast %178 : vector<1x2x256xf32> to vector<2x256xf32>
    %180 = vector.shape_cast %2 : vector<1x256xi1> to vector<1x256xi1>
    %181 = vector.broadcast %180 : vector<1x256xi1> to vector<2x256xi1>
    %182 = arith.select %181, %175, %179 : vector<2x256xi1>, vector<2x256xf32>
    %183 = arith.truncf %161 : vector<2x64xf32> to vector<2x64xbf16>
    %cst_69 = arith.constant dense<0.000000e+00> : vector<2x256xf32>
    %184 = tpu.matmul %183, %16, %cst_69 {dimension_numbers = #tpu.dot_dimension_numbers<[1], [0], [0], [1], [0, 0, 1, 1], [], []>} : vector<2x64xbf16>, vector<64x256xbf16>, vector<2x256xf32> -> vector<2x256xf32>
    %185 = arith.addf %182, %184 : vector<2x256xf32>
    %186 = arith.negf %185 : vector<2x256xf32>
    %187 = math.exp %186 : vector<2x256xf32>
    %cst_70 = arith.constant 1.000000e+00 : f32
    %188 = vector.broadcast %cst_70 : f32 to vector<2x256xf32>
    %189 = arith.addf %188, %187 : vector<2x256xf32>
    %190 = arith.divf %188, %189 : vector<2x256xf32>
    %191 = math.tanh %185 : vector<2x256xf32>
    %192 = vector.extract_strided_slice %190 {offsets = [0, 0], sizes = [2, 64], strides = [1, 1]} : vector<2x256xf32> to vector<2x64xf32>
    %193 = vector.extract_strided_slice %190 {offsets = [0, 64], sizes = [2, 64], strides = [1, 1]} : vector<2x256xf32> to vector<2x64xf32>
    %194 = vector.extract_strided_slice %191 {offsets = [0, 128], sizes = [2, 64], strides = [1, 1]} : vector<2x256xf32> to vector<2x64xf32>
    %195 = vector.extract_strided_slice %190 {offsets = [0, 192], sizes = [2, 64], strides = [1, 1]} : vector<2x256xf32> to vector<2x64xf32>
    %196 = arith.mulf %193, %159 : vector<2x64xf32>
    %197 = arith.mulf %192, %194 : vector<2x64xf32>
    %198 = arith.addf %196, %197 : vector<2x64xf32>
    %199 = math.tanh %198 : vector<2x64xf32>
    %200 = arith.mulf %195, %199 : vector<2x64xf32>
    %201 = vector.extract_strided_slice %200 {offsets = [0, 0], sizes = [2, 32], strides = [1, 1]} : vector<2x64xf32> to vector<2x32xf32>
    %202 = arith.index_cast %c4_i32 : i32 to index
    %c0_71 = arith.constant 0 : index
    %c0_72 = arith.constant 0 : index
    %203 = vector.load %arg13[%202, %c0_71, %c0_72] : memref<8x2x32xf32, #tpu.memory_space<vmem>>, vector<1x2x32xf32>
    %204 = vector.shape_cast %203 : vector<1x2x32xf32> to vector<2x32xf32>
    %205 = vector.shape_cast %201 : vector<2x32xf32> to vector<1x2x32xf32>
    tpu.vector_store %arg13[%202, %c0_71, %c0_72], %205 {strides = array<i32>} : memref<8x2x32xf32, #tpu.memory_space<vmem>>, vector<1x2x32xf32>,
    %206 = vector.extract_strided_slice %200 {offsets = [0, 32], sizes = [2, 32], strides = [1, 1]} : vector<2x64xf32> to vector<2x32xf32>
    %c7_i32_73 = arith.constant 7 : i32
    %207 = arith.subi %c7_i32_73, %c4_i32 : i32
    %208 = arith.index_cast %207 : i32 to index
    %c0_74 = arith.constant 0 : index
    %c0_75 = arith.constant 0 : index
    %209 = vector.load %arg14[%208, %c0_74, %c0_75] : memref<8x2x32xf32, #tpu.memory_space<vmem>>, vector<1x2x32xf32>
    %210 = vector.shape_cast %209 : vector<1x2x32xf32> to vector<2x32xf32>
    %211 = vector.shape_cast %206 : vector<2x32xf32> to vector<1x2x32xf32>
    tpu.vector_store %arg14[%208, %c0_74, %c0_75], %211 {strides = array<i32>} : memref<8x2x32xf32, #tpu.memory_space<vmem>>, vector<1x2x32xf32>,
    %c5_i32 = arith.constant 5 : i32
    %212 = arith.index_cast %c5_i32 : i32 to index
    %c0_76 = arith.constant 0 : index
    %c0_77 = arith.constant 0 : index
    %213 = vector.load %arg12[%212, %c0_76, %c0_77] : memref<8x2x256xf32, #tpu.memory_space<vmem>>, vector<1x2x256xf32>
    %214 = vector.shape_cast %213 : vector<1x2x256xf32> to vector<2x256xf32>
    %c7_i32_78 = arith.constant 7 : i32
    %215 = arith.subi %c7_i32_78, %c5_i32 : i32
    %216 = arith.index_cast %215 : i32 to index
    %c0_79 = arith.constant 0 : index
    %c0_80 = arith.constant 0 : index
    %217 = vector.load %arg12[%216, %c0_79, %c0_80] : memref<8x2x256xf32, #tpu.memory_space<vmem>>, vector<1x2x256xf32>
    %218 = vector.shape_cast %217 : vector<1x2x256xf32> to vector<2x256xf32>
    %219 = vector.shape_cast %2 : vector<1x256xi1> to vector<1x256xi1>
    %220 = vector.broadcast %219 : vector<1x256xi1> to vector<2x256xi1>
    %221 = arith.select %220, %214, %218 : vector<2x256xi1>, vector<2x256xf32>
    %222 = arith.truncf %200 : vector<2x64xf32> to vector<2x64xbf16>
    %cst_81 = arith.constant dense<0.000000e+00> : vector<2x256xf32>
    %223 = tpu.matmul %222, %16, %cst_81 {dimension_numbers = #tpu.dot_dimension_numbers<[1], [0], [0], [1], [0, 0, 1, 1], [], []>} : vector<2x64xbf16>, vector<64x256xbf16>, vector<2x256xf32> -> vector<2x256xf32>
    %224 = arith.addf %221, %223 : vector<2x256xf32>
    %225 = arith.negf %224 : vector<2x256xf32>
    %226 = math.exp %225 : vector<2x256xf32>
    %cst_82 = arith.constant 1.000000e+00 : f32
    %227 = vector.broadcast %cst_82 : f32 to vector<2x256xf32>
    %228 = arith.addf %227, %226 : vector<2x256xf32>
    %229 = arith.divf %227, %228 : vector<2x256xf32>
    %230 = math.tanh %224 : vector<2x256xf32>
    %231 = vector.extract_strided_slice %229 {offsets = [0, 0], sizes = [2, 64], strides = [1, 1]} : vector<2x256xf32> to vector<2x64xf32>
    %232 = vector.extract_strided_slice %229 {offsets = [0, 64], sizes = [2, 64], strides = [1, 1]} : vector<2x256xf32> to vector<2x64xf32>
    %233 = vector.extract_strided_slice %230 {offsets = [0, 128], sizes = [2, 64], strides = [1, 1]} : vector<2x256xf32> to vector<2x64xf32>
    %234 = vector.extract_strided_slice %229 {offsets = [0, 192], sizes = [2, 64], strides = [1, 1]} : vector<2x256xf32> to vector<2x64xf32>
    %235 = arith.mulf %232, %198 : vector<2x64xf32>
    %236 = arith.mulf %231, %233 : vector<2x64xf32>
    %237 = arith.addf %235, %236 : vector<2x64xf32>
    %238 = math.tanh %237 : vector<2x64xf32>
    %239 = arith.mulf %234, %238 : vector<2x64xf32>
    %240 = vector.extract_strided_slice %239 {offsets = [0, 0], sizes = [2, 32], strides = [1, 1]} : vector<2x64xf32> to vector<2x32xf32>
    %241 = arith.index_cast %c5_i32 : i32 to index
    %c0_83 = arith.constant 0 : index
    %c0_84 = arith.constant 0 : index
    %242 = vector.load %arg13[%241, %c0_83, %c0_84] : memref<8x2x32xf32, #tpu.memory_space<vmem>>, vector<1x2x32xf32>
    %243 = vector.shape_cast %242 : vector<1x2x32xf32> to vector<2x32xf32>
    %244 = vector.shape_cast %240 : vector<2x32xf32> to vector<1x2x32xf32>
    tpu.vector_store %arg13[%241, %c0_83, %c0_84], %244 {strides = array<i32>} : memref<8x2x32xf32, #tpu.memory_space<vmem>>, vector<1x2x32xf32>,
    %245 = vector.extract_strided_slice %239 {offsets = [0, 32], sizes = [2, 32], strides = [1, 1]} : vector<2x64xf32> to vector<2x32xf32>
    %c7_i32_85 = arith.constant 7 : i32
    %246 = arith.subi %c7_i32_85, %c5_i32 : i32
    %247 = arith.index_cast %246 : i32 to index
    %c0_86 = arith.constant 0 : index
    %c0_87 = arith.constant 0 : index
    %248 = vector.load %arg14[%247, %c0_86, %c0_87] : memref<8x2x32xf32, #tpu.memory_space<vmem>>, vector<1x2x32xf32>
    %249 = vector.shape_cast %248 : vector<1x2x32xf32> to vector<2x32xf32>
    %250 = vector.shape_cast %245 : vector<2x32xf32> to vector<1x2x32xf32>
    tpu.vector_store %arg14[%247, %c0_86, %c0_87], %250 {strides = array<i32>} : memref<8x2x32xf32, #tpu.memory_space<vmem>>, vector<1x2x32xf32>,
    %c6_i32 = arith.constant 6 : i32
    %251 = arith.index_cast %c6_i32 : i32 to index
    %c0_88 = arith.constant 0 : index
    %c0_89 = arith.constant 0 : index
    %252 = vector.load %arg12[%251, %c0_88, %c0_89] : memref<8x2x256xf32, #tpu.memory_space<vmem>>, vector<1x2x256xf32>
    %253 = vector.shape_cast %252 : vector<1x2x256xf32> to vector<2x256xf32>
    %c7_i32_90 = arith.constant 7 : i32
    %254 = arith.subi %c7_i32_90, %c6_i32 : i32
    %255 = arith.index_cast %254 : i32 to index
    %c0_91 = arith.constant 0 : index
    %c0_92 = arith.constant 0 : index
    %256 = vector.load %arg12[%255, %c0_91, %c0_92] : memref<8x2x256xf32, #tpu.memory_space<vmem>>, vector<1x2x256xf32>
    %257 = vector.shape_cast %256 : vector<1x2x256xf32> to vector<2x256xf32>
    %258 = vector.shape_cast %2 : vector<1x256xi1> to vector<1x256xi1>
    %259 = vector.broadcast %258 : vector<1x256xi1> to vector<2x256xi1>
    %260 = arith.select %259, %253, %257 : vector<2x256xi1>, vector<2x256xf32>
    %261 = arith.truncf %239 : vector<2x64xf32> to vector<2x64xbf16>
    %cst_93 = arith.constant dense<0.000000e+00> : vector<2x256xf32>
    %262 = tpu.matmul %261, %16, %cst_93 {dimension_numbers = #tpu.dot_dimension_numbers<[1], [0], [0], [1], [0, 0, 1, 1], [], []>} : vector<2x64xbf16>, vector<64x256xbf16>, vector<2x256xf32> -> vector<2x256xf32>
    %263 = arith.addf %260, %262 : vector<2x256xf32>
    %264 = arith.negf %263 : vector<2x256xf32>
    %265 = math.exp %264 : vector<2x256xf32>
    %cst_94 = arith.constant 1.000000e+00 : f32
    %266 = vector.broadcast %cst_94 : f32 to vector<2x256xf32>
    %267 = arith.addf %266, %265 : vector<2x256xf32>
    %268 = arith.divf %266, %267 : vector<2x256xf32>
    %269 = math.tanh %263 : vector<2x256xf32>
    %270 = vector.extract_strided_slice %268 {offsets = [0, 0], sizes = [2, 64], strides = [1, 1]} : vector<2x256xf32> to vector<2x64xf32>
    %271 = vector.extract_strided_slice %268 {offsets = [0, 64], sizes = [2, 64], strides = [1, 1]} : vector<2x256xf32> to vector<2x64xf32>
    %272 = vector.extract_strided_slice %269 {offsets = [0, 128], sizes = [2, 64], strides = [1, 1]} : vector<2x256xf32> to vector<2x64xf32>
    %273 = vector.extract_strided_slice %268 {offsets = [0, 192], sizes = [2, 64], strides = [1, 1]} : vector<2x256xf32> to vector<2x64xf32>
    %274 = arith.mulf %271, %237 : vector<2x64xf32>
    %275 = arith.mulf %270, %272 : vector<2x64xf32>
    %276 = arith.addf %274, %275 : vector<2x64xf32>
    %277 = math.tanh %276 : vector<2x64xf32>
    %278 = arith.mulf %273, %277 : vector<2x64xf32>
    %279 = vector.extract_strided_slice %278 {offsets = [0, 0], sizes = [2, 32], strides = [1, 1]} : vector<2x64xf32> to vector<2x32xf32>
    %280 = arith.index_cast %c6_i32 : i32 to index
    %c0_95 = arith.constant 0 : index
    %c0_96 = arith.constant 0 : index
    %281 = vector.load %arg13[%280, %c0_95, %c0_96] : memref<8x2x32xf32, #tpu.memory_space<vmem>>, vector<1x2x32xf32>
    %282 = vector.shape_cast %281 : vector<1x2x32xf32> to vector<2x32xf32>
    %283 = vector.shape_cast %279 : vector<2x32xf32> to vector<1x2x32xf32>
    tpu.vector_store %arg13[%280, %c0_95, %c0_96], %283 {strides = array<i32>} : memref<8x2x32xf32, #tpu.memory_space<vmem>>, vector<1x2x32xf32>,
    %284 = vector.extract_strided_slice %278 {offsets = [0, 32], sizes = [2, 32], strides = [1, 1]} : vector<2x64xf32> to vector<2x32xf32>
    %c7_i32_97 = arith.constant 7 : i32
    %285 = arith.subi %c7_i32_97, %c6_i32 : i32
    %286 = arith.index_cast %285 : i32 to index
    %c0_98 = arith.constant 0 : index
    %c0_99 = arith.constant 0 : index
    %287 = vector.load %arg14[%286, %c0_98, %c0_99] : memref<8x2x32xf32, #tpu.memory_space<vmem>>, vector<1x2x32xf32>
    %288 = vector.shape_cast %287 : vector<1x2x32xf32> to vector<2x32xf32>
    %289 = vector.shape_cast %284 : vector<2x32xf32> to vector<1x2x32xf32>
    tpu.vector_store %arg14[%286, %c0_98, %c0_99], %289 {strides = array<i32>} : memref<8x2x32xf32, #tpu.memory_space<vmem>>, vector<1x2x32xf32>,
    %c7_i32_100 = arith.constant 7 : i32
    %290 = arith.index_cast %c7_i32_100 : i32 to index
    %c0_101 = arith.constant 0 : index
    %c0_102 = arith.constant 0 : index
    %291 = vector.load %arg12[%290, %c0_101, %c0_102] : memref<8x2x256xf32, #tpu.memory_space<vmem>>, vector<1x2x256xf32>
    %292 = vector.shape_cast %291 : vector<1x2x256xf32> to vector<2x256xf32>
    %c7_i32_103 = arith.constant 7 : i32
    %293 = arith.subi %c7_i32_103, %c7_i32_100 : i32
    %294 = arith.index_cast %293 : i32 to index
    %c0_104 = arith.constant 0 : index
    %c0_105 = arith.constant 0 : index
    %295 = vector.load %arg12[%294, %c0_104, %c0_105] : memref<8x2x256xf32, #tpu.memory_space<vmem>>, vector<1x2x256xf32>
    %296 = vector.shape_cast %295 : vector<1x2x256xf32> to vector<2x256xf32>
    %297 = vector.shape_cast %2 : vector<1x256xi1> to vector<1x256xi1>
    %298 = vector.broadcast %297 : vector<1x256xi1> to vector<2x256xi1>
    %299 = arith.select %298, %292, %296 : vector<2x256xi1>, vector<2x256xf32>
    %300 = arith.truncf %278 : vector<2x64xf32> to vector<2x64xbf16>
    %cst_106 = arith.constant dense<0.000000e+00> : vector<2x256xf32>
    %301 = tpu.matmul %300, %16, %cst_106 {dimension_numbers = #tpu.dot_dimension_numbers<[1], [0], [0], [1], [0, 0, 1, 1], [], []>} : vector<2x64xbf16>, vector<64x256xbf16>, vector<2x256xf32> -> vector<2x256xf32>
    %302 = arith.addf %299, %301 : vector<2x256xf32>
    %303 = arith.negf %302 : vector<2x256xf32>
    %304 = math.exp %303 : vector<2x256xf32>
    %cst_107 = arith.constant 1.000000e+00 : f32
    %305 = vector.broadcast %cst_107 : f32 to vector<2x256xf32>
    %306 = arith.addf %305, %304 : vector<2x256xf32>
    %307 = arith.divf %305, %306 : vector<2x256xf32>
    %308 = math.tanh %302 : vector<2x256xf32>
    %309 = vector.extract_strided_slice %307 {offsets = [0, 0], sizes = [2, 64], strides = [1, 1]} : vector<2x256xf32> to vector<2x64xf32>
    %310 = vector.extract_strided_slice %307 {offsets = [0, 64], sizes = [2, 64], strides = [1, 1]} : vector<2x256xf32> to vector<2x64xf32>
    %311 = vector.extract_strided_slice %308 {offsets = [0, 128], sizes = [2, 64], strides = [1, 1]} : vector<2x256xf32> to vector<2x64xf32>
    %312 = vector.extract_strided_slice %307 {offsets = [0, 192], sizes = [2, 64], strides = [1, 1]} : vector<2x256xf32> to vector<2x64xf32>
    %313 = arith.mulf %310, %276 : vector<2x64xf32>
    %314 = arith.mulf %309, %311 : vector<2x64xf32>
    %315 = arith.addf %313, %314 : vector<2x64xf32>
    %316 = math.tanh %315 : vector<2x64xf32>
    %317 = arith.mulf %312, %316 : vector<2x64xf32>
    %318 = vector.extract_strided_slice %317 {offsets = [0, 0], sizes = [2, 32], strides = [1, 1]} : vector<2x64xf32> to vector<2x32xf32>
    %319 = arith.index_cast %c7_i32_100 : i32 to index
    %c0_108 = arith.constant 0 : index
    %c0_109 = arith.constant 0 : index
    %320 = vector.load %arg13[%319, %c0_108, %c0_109] : memref<8x2x32xf32, #tpu.memory_space<vmem>>, vector<1x2x32xf32>
    %321 = vector.shape_cast %320 : vector<1x2x32xf32> to vector<2x32xf32>
    %322 = vector.shape_cast %318 : vector<2x32xf32> to vector<1x2x32xf32>
    tpu.vector_store %arg13[%319, %c0_108, %c0_109], %322 {strides = array<i32>} : memref<8x2x32xf32, #tpu.memory_space<vmem>>, vector<1x2x32xf32>,
    %323 = vector.extract_strided_slice %317 {offsets = [0, 32], sizes = [2, 32], strides = [1, 1]} : vector<2x64xf32> to vector<2x32xf32>
    %c7_i32_110 = arith.constant 7 : i32
    %324 = arith.subi %c7_i32_110, %c7_i32_100 : i32
    %325 = arith.index_cast %324 : i32 to index
    %c0_111 = arith.constant 0 : index
    %c0_112 = arith.constant 0 : index
    %326 = vector.load %arg14[%325, %c0_111, %c0_112] : memref<8x2x32xf32, #tpu.memory_space<vmem>>, vector<1x2x32xf32>
    %327 = vector.shape_cast %326 : vector<1x2x32xf32> to vector<2x32xf32>
    %328 = vector.shape_cast %323 : vector<2x32xf32> to vector<1x2x32xf32>
    tpu.vector_store %arg14[%325, %c0_111, %c0_112], %328 {strides = array<i32>} : memref<8x2x32xf32, #tpu.memory_space<vmem>>, vector<1x2x32xf32>,
    %c8_i32 = arith.constant 8 : i32
    %c0_113 = arith.constant 0 : index
    %c0_114 = arith.constant 0 : index
    %329 = vector.load %arg5[%c0_113, %c0_114] : memref<64x256xbf16, #tpu.memory_space<vmem>>, vector<64x256xbf16>
    %c0_115 = arith.constant 0 : index
    %c0_116 = arith.constant 0 : index
    %c0_117 = arith.constant 0 : index
    %330 = vector.load %arg13[%c0_115, %c0_116, %c0_117] : memref<8x2x32xf32, #tpu.memory_space<vmem>>, vector<8x2x32xf32>
    %331 = vector.shape_cast %330 : vector<8x2x32xf32> to vector<16x32xf32>
    %332 = arith.truncf %331 : vector<16x32xf32> to vector<16x32xbf16>
    %c0_118 = arith.constant 0 : index
    %c0_119 = arith.constant 0 : index
    %c0_120 = arith.constant 0 : index
    %333 = vector.load %arg14[%c0_118, %c0_119, %c0_120] : memref<8x2x32xf32, #tpu.memory_space<vmem>>, vector<8x2x32xf32>
    %334 = vector.shape_cast %333 : vector<8x2x32xf32> to vector<16x32xf32>
    %335 = arith.truncf %334 : vector<16x32xf32> to vector<16x32xbf16>
    %336 = vector.extract_strided_slice %329 {offsets = [0, 0], sizes = [32, 256], strides = [1, 1]} : vector<64x256xbf16> to vector<32x256xbf16>
    %cst_121 = arith.constant dense<0.000000e+00> : vector<16x256xf32>
    %337 = tpu.matmul %332, %336, %cst_121 {dimension_numbers = #tpu.dot_dimension_numbers<[1], [0], [0], [1], [0, 0, 1, 1], [], []>} : vector<16x32xbf16>, vector<32x256xbf16>, vector<16x256xf32> -> vector<16x256xf32>
    %338 = vector.extract_strided_slice %329 {offsets = [32, 0], sizes = [32, 256], strides = [1, 1]} : vector<64x256xbf16> to vector<32x256xbf16>
    %cst_122 = arith.constant dense<0.000000e+00> : vector<16x256xf32>
    %339 = tpu.matmul %335, %338, %cst_122 {dimension_numbers = #tpu.dot_dimension_numbers<[1], [0], [0], [1], [0, 0, 1, 1], [], []>} : vector<16x32xbf16>, vector<32x256xbf16>, vector<16x256xf32> -> vector<16x256xf32>
    %340 = arith.addf %337, %339 : vector<16x256xf32>
    %c0_123 = arith.constant 0 : index
    %c0_124 = arith.constant 0 : index
    %341 = vector.load %arg7[%c0_123, %c0_124] : memref<1x256xf32, #tpu.memory_space<vmem>>, vector<1x256xf32>
    %342 = vector.broadcast %341 : vector<1x256xf32> to vector<16x256xf32>
    %343 = arith.addf %340, %342 : vector<16x256xf32>
    %344 = vector.shape_cast %343 : vector<16x256xf32> to vector<8x2x256xf32>
    %c0_125 = arith.constant 0 : index
    %c0_126 = arith.constant 0 : index
    %c0_127 = arith.constant 0 : index
    %345 = vector.load %arg12[%c0_125, %c0_126, %c0_127] : memref<8x2x256xf32, #tpu.memory_space<vmem>>, vector<8x2x256xf32>
    tpu.vector_store %arg12[%c0_125, %c0_126, %c0_127], %344 {strides = array<i32>} : memref<8x2x256xf32, #tpu.memory_space<vmem>>, vector<8x2x256xf32>,
    %c0_128 = arith.constant 0 : index
    %c0_129 = arith.constant 0 : index
    %346 = vector.load %arg6[%c0_128, %c0_129] : memref<64x256xbf16, #tpu.memory_space<vmem>>, vector<64x256xbf16>
    %c0_i32_130 = arith.constant 0 : i32
    %347 = arith.index_cast %c0_i32_130 : i32 to index
    %c0_131 = arith.constant 0 : index
    %c0_132 = arith.constant 0 : index
    %348 = vector.load %arg12[%347, %c0_131, %c0_132] : memref<8x2x256xf32, #tpu.memory_space<vmem>>, vector<1x2x256xf32>
    %349 = vector.shape_cast %348 : vector<1x2x256xf32> to vector<2x256xf32>
    %c7_i32_133 = arith.constant 7 : i32
    %350 = arith.subi %c7_i32_133, %c0_i32_130 : i32
    %351 = arith.index_cast %350 : i32 to index
    %c0_134 = arith.constant 0 : index
    %c0_135 = arith.constant 0 : index
    %352 = vector.load %arg12[%351, %c0_134, %c0_135] : memref<8x2x256xf32, #tpu.memory_space<vmem>>, vector<1x2x256xf32>
    %353 = vector.shape_cast %352 : vector<1x2x256xf32> to vector<2x256xf32>
    %354 = vector.shape_cast %2 : vector<1x256xi1> to vector<1x256xi1>
    %355 = vector.broadcast %354 : vector<1x256xi1> to vector<2x256xi1>
    %356 = arith.select %355, %349, %353 : vector<2x256xi1>, vector<2x256xf32>
    %357 = arith.truncf %3 : vector<2x64xf32> to vector<2x64xbf16>
    %cst_136 = arith.constant dense<0.000000e+00> : vector<2x256xf32>
    %358 = tpu.matmul %357, %346, %cst_136 {dimension_numbers = #tpu.dot_dimension_numbers<[1], [0], [0], [1], [0, 0, 1, 1], [], []>} : vector<2x64xbf16>, vector<64x256xbf16>, vector<2x256xf32> -> vector<2x256xf32>
    %359 = arith.addf %356, %358 : vector<2x256xf32>
    %360 = arith.negf %359 : vector<2x256xf32>
    %361 = math.exp %360 : vector<2x256xf32>
    %cst_137 = arith.constant 1.000000e+00 : f32
    %362 = vector.broadcast %cst_137 : f32 to vector<2x256xf32>
    %363 = arith.addf %362, %361 : vector<2x256xf32>
    %364 = arith.divf %362, %363 : vector<2x256xf32>
    %365 = math.tanh %359 : vector<2x256xf32>
    %366 = vector.extract_strided_slice %364 {offsets = [0, 0], sizes = [2, 64], strides = [1, 1]} : vector<2x256xf32> to vector<2x64xf32>
    %367 = vector.extract_strided_slice %364 {offsets = [0, 64], sizes = [2, 64], strides = [1, 1]} : vector<2x256xf32> to vector<2x64xf32>
    %368 = vector.extract_strided_slice %365 {offsets = [0, 128], sizes = [2, 64], strides = [1, 1]} : vector<2x256xf32> to vector<2x64xf32>
    %369 = vector.extract_strided_slice %364 {offsets = [0, 192], sizes = [2, 64], strides = [1, 1]} : vector<2x256xf32> to vector<2x64xf32>
    %370 = arith.mulf %367, %4 : vector<2x64xf32>
    %371 = arith.mulf %366, %368 : vector<2x64xf32>
    %372 = arith.addf %370, %371 : vector<2x64xf32>
    %373 = math.tanh %372 : vector<2x64xf32>
    %374 = arith.mulf %369, %373 : vector<2x64xf32>
    %375 = arith.maximumf %5, %374 : vector<2x64xf32>
    %c1_i32_138 = arith.constant 1 : i32
    %376 = arith.index_cast %c1_i32_138 : i32 to index
    %c0_139 = arith.constant 0 : index
    %c0_140 = arith.constant 0 : index
    %377 = vector.load %arg12[%376, %c0_139, %c0_140] : memref<8x2x256xf32, #tpu.memory_space<vmem>>, vector<1x2x256xf32>
    %378 = vector.shape_cast %377 : vector<1x2x256xf32> to vector<2x256xf32>
    %c7_i32_141 = arith.constant 7 : i32
    %379 = arith.subi %c7_i32_141, %c1_i32_138 : i32
    %380 = arith.index_cast %379 : i32 to index
    %c0_142 = arith.constant 0 : index
    %c0_143 = arith.constant 0 : index
    %381 = vector.load %arg12[%380, %c0_142, %c0_143] : memref<8x2x256xf32, #tpu.memory_space<vmem>>, vector<1x2x256xf32>
    %382 = vector.shape_cast %381 : vector<1x2x256xf32> to vector<2x256xf32>
    %383 = vector.shape_cast %2 : vector<1x256xi1> to vector<1x256xi1>
    %384 = vector.broadcast %383 : vector<1x256xi1> to vector<2x256xi1>
    %385 = arith.select %384, %378, %382 : vector<2x256xi1>, vector<2x256xf32>
    %386 = arith.truncf %374 : vector<2x64xf32> to vector<2x64xbf16>
    %cst_144 = arith.constant dense<0.000000e+00> : vector<2x256xf32>
    %387 = tpu.matmul %386, %346, %cst_144 {dimension_numbers = #tpu.dot_dimension_numbers<[1], [0], [0], [1], [0, 0, 1, 1], [], []>} : vector<2x64xbf16>, vector<64x256xbf16>, vector<2x256xf32> -> vector<2x256xf32>
    %388 = arith.addf %385, %387 : vector<2x256xf32>
    %389 = arith.negf %388 : vector<2x256xf32>
    %390 = math.exp %389 : vector<2x256xf32>
    %cst_145 = arith.constant 1.000000e+00 : f32
    %391 = vector.broadcast %cst_145 : f32 to vector<2x256xf32>
    %392 = arith.addf %391, %390 : vector<2x256xf32>
    %393 = arith.divf %391, %392 : vector<2x256xf32>
    %394 = math.tanh %388 : vector<2x256xf32>
    %395 = vector.extract_strided_slice %393 {offsets = [0, 0], sizes = [2, 64], strides = [1, 1]} : vector<2x256xf32> to vector<2x64xf32>
    %396 = vector.extract_strided_slice %393 {offsets = [0, 64], sizes = [2, 64], strides = [1, 1]} : vector<2x256xf32> to vector<2x64xf32>
    %397 = vector.extract_strided_slice %394 {offsets = [0, 128], sizes = [2, 64], strides = [1, 1]} : vector<2x256xf32> to vector<2x64xf32>
    %398 = vector.extract_strided_slice %393 {offsets = [0, 192], sizes = [2, 64], strides = [1, 1]} : vector<2x256xf32> to vector<2x64xf32>
    %399 = arith.mulf %396, %372 : vector<2x64xf32>
    %400 = arith.mulf %395, %397 : vector<2x64xf32>
    %401 = arith.addf %399, %400 : vector<2x64xf32>
    %402 = math.tanh %401 : vector<2x64xf32>
    %403 = arith.mulf %398, %402 : vector<2x64xf32>
    %404 = arith.maximumf %375, %403 : vector<2x64xf32>
    %c2_i32_146 = arith.constant 2 : i32
    %405 = arith.index_cast %c2_i32_146 : i32 to index
    %c0_147 = arith.constant 0 : index
    %c0_148 = arith.constant 0 : index
    %406 = vector.load %arg12[%405, %c0_147, %c0_148] : memref<8x2x256xf32, #tpu.memory_space<vmem>>, vector<1x2x256xf32>
    %407 = vector.shape_cast %406 : vector<1x2x256xf32> to vector<2x256xf32>
    %c7_i32_149 = arith.constant 7 : i32
    %408 = arith.subi %c7_i32_149, %c2_i32_146 : i32
    %409 = arith.index_cast %408 : i32 to index
    %c0_150 = arith.constant 0 : index
    %c0_151 = arith.constant 0 : index
    %410 = vector.load %arg12[%409, %c0_150, %c0_151] : memref<8x2x256xf32, #tpu.memory_space<vmem>>, vector<1x2x256xf32>
    %411 = vector.shape_cast %410 : vector<1x2x256xf32> to vector<2x256xf32>
    %412 = vector.shape_cast %2 : vector<1x256xi1> to vector<1x256xi1>
    %413 = vector.broadcast %412 : vector<1x256xi1> to vector<2x256xi1>
    %414 = arith.select %413, %407, %411 : vector<2x256xi1>, vector<2x256xf32>
    %415 = arith.truncf %403 : vector<2x64xf32> to vector<2x64xbf16>
    %cst_152 = arith.constant dense<0.000000e+00> : vector<2x256xf32>
    %416 = tpu.matmul %415, %346, %cst_152 {dimension_numbers = #tpu.dot_dimension_numbers<[1], [0], [0], [1], [0, 0, 1, 1], [], []>} : vector<2x64xbf16>, vector<64x256xbf16>, vector<2x256xf32> -> vector<2x256xf32>
    %417 = arith.addf %414, %416 : vector<2x256xf32>
    %418 = arith.negf %417 : vector<2x256xf32>
    %419 = math.exp %418 : vector<2x256xf32>
    %cst_153 = arith.constant 1.000000e+00 : f32
    %420 = vector.broadcast %cst_153 : f32 to vector<2x256xf32>
    %421 = arith.addf %420, %419 : vector<2x256xf32>
    %422 = arith.divf %420, %421 : vector<2x256xf32>
    %423 = math.tanh %417 : vector<2x256xf32>
    %424 = vector.extract_strided_slice %422 {offsets = [0, 0], sizes = [2, 64], strides = [1, 1]} : vector<2x256xf32> to vector<2x64xf32>
    %425 = vector.extract_strided_slice %422 {offsets = [0, 64], sizes = [2, 64], strides = [1, 1]} : vector<2x256xf32> to vector<2x64xf32>
    %426 = vector.extract_strided_slice %423 {offsets = [0, 128], sizes = [2, 64], strides = [1, 1]} : vector<2x256xf32> to vector<2x64xf32>
    %427 = vector.extract_strided_slice %422 {offsets = [0, 192], sizes = [2, 64], strides = [1, 1]} : vector<2x256xf32> to vector<2x64xf32>
    %428 = arith.mulf %425, %401 : vector<2x64xf32>
    %429 = arith.mulf %424, %426 : vector<2x64xf32>
    %430 = arith.addf %428, %429 : vector<2x64xf32>
    %431 = math.tanh %430 : vector<2x64xf32>
    %432 = arith.mulf %427, %431 : vector<2x64xf32>
    %433 = arith.maximumf %404, %432 : vector<2x64xf32>
    %c3_i32_154 = arith.constant 3 : i32
    %434 = arith.index_cast %c3_i32_154 : i32 to index
    %c0_155 = arith.constant 0 : index
    %c0_156 = arith.constant 0 : index
    %435 = vector.load %arg12[%434, %c0_155, %c0_156] : memref<8x2x256xf32, #tpu.memory_space<vmem>>, vector<1x2x256xf32>
    %436 = vector.shape_cast %435 : vector<1x2x256xf32> to vector<2x256xf32>
    %c7_i32_157 = arith.constant 7 : i32
    %437 = arith.subi %c7_i32_157, %c3_i32_154 : i32
    %438 = arith.index_cast %437 : i32 to index
    %c0_158 = arith.constant 0 : index
    %c0_159 = arith.constant 0 : index
    %439 = vector.load %arg12[%438, %c0_158, %c0_159] : memref<8x2x256xf32, #tpu.memory_space<vmem>>, vector<1x2x256xf32>
    %440 = vector.shape_cast %439 : vector<1x2x256xf32> to vector<2x256xf32>
    %441 = vector.shape_cast %2 : vector<1x256xi1> to vector<1x256xi1>
    %442 = vector.broadcast %441 : vector<1x256xi1> to vector<2x256xi1>
    %443 = arith.select %442, %436, %440 : vector<2x256xi1>, vector<2x256xf32>
    %444 = arith.truncf %432 : vector<2x64xf32> to vector<2x64xbf16>
    %cst_160 = arith.constant dense<0.000000e+00> : vector<2x256xf32>
    %445 = tpu.matmul %444, %346, %cst_160 {dimension_numbers = #tpu.dot_dimension_numbers<[1], [0], [0], [1], [0, 0, 1, 1], [], []>} : vector<2x64xbf16>, vector<64x256xbf16>, vector<2x256xf32> -> vector<2x256xf32>
    %446 = arith.addf %443, %445 : vector<2x256xf32>
    %447 = arith.negf %446 : vector<2x256xf32>
    %448 = math.exp %447 : vector<2x256xf32>
    %cst_161 = arith.constant 1.000000e+00 : f32
    %449 = vector.broadcast %cst_161 : f32 to vector<2x256xf32>
    %450 = arith.addf %449, %448 : vector<2x256xf32>
    %451 = arith.divf %449, %450 : vector<2x256xf32>
    %452 = math.tanh %446 : vector<2x256xf32>
    %453 = vector.extract_strided_slice %451 {offsets = [0, 0], sizes = [2, 64], strides = [1, 1]} : vector<2x256xf32> to vector<2x64xf32>
    %454 = vector.extract_strided_slice %451 {offsets = [0, 64], sizes = [2, 64], strides = [1, 1]} : vector<2x256xf32> to vector<2x64xf32>
    %455 = vector.extract_strided_slice %452 {offsets = [0, 128], sizes = [2, 64], strides = [1, 1]} : vector<2x256xf32> to vector<2x64xf32>
    %456 = vector.extract_strided_slice %451 {offsets = [0, 192], sizes = [2, 64], strides = [1, 1]} : vector<2x256xf32> to vector<2x64xf32>
    %457 = arith.mulf %454, %430 : vector<2x64xf32>
    %458 = arith.mulf %453, %455 : vector<2x64xf32>
    %459 = arith.addf %457, %458 : vector<2x64xf32>
    %460 = math.tanh %459 : vector<2x64xf32>
    %461 = arith.mulf %456, %460 : vector<2x64xf32>
    %462 = arith.maximumf %433, %461 : vector<2x64xf32>
    %c4_i32_162 = arith.constant 4 : i32
    %463 = arith.index_cast %c4_i32_162 : i32 to index
    %c0_163 = arith.constant 0 : index
    %c0_164 = arith.constant 0 : index
    %464 = vector.load %arg12[%463, %c0_163, %c0_164] : memref<8x2x256xf32, #tpu.memory_space<vmem>>, vector<1x2x256xf32>
    %465 = vector.shape_cast %464 : vector<1x2x256xf32> to vector<2x256xf32>
    %c7_i32_165 = arith.constant 7 : i32
    %466 = arith.subi %c7_i32_165, %c4_i32_162 : i32
    %467 = arith.index_cast %466 : i32 to index
    %c0_166 = arith.constant 0 : index
    %c0_167 = arith.constant 0 : index
    %468 = vector.load %arg12[%467, %c0_166, %c0_167] : memref<8x2x256xf32, #tpu.memory_space<vmem>>, vector<1x2x256xf32>
    %469 = vector.shape_cast %468 : vector<1x2x256xf32> to vector<2x256xf32>
    %470 = vector.shape_cast %2 : vector<1x256xi1> to vector<1x256xi1>
    %471 = vector.broadcast %470 : vector<1x256xi1> to vector<2x256xi1>
    %472 = arith.select %471, %465, %469 : vector<2x256xi1>, vector<2x256xf32>
    %473 = arith.truncf %461 : vector<2x64xf32> to vector<2x64xbf16>
    %cst_168 = arith.constant dense<0.000000e+00> : vector<2x256xf32>
    %474 = tpu.matmul %473, %346, %cst_168 {dimension_numbers = #tpu.dot_dimension_numbers<[1], [0], [0], [1], [0, 0, 1, 1], [], []>} : vector<2x64xbf16>, vector<64x256xbf16>, vector<2x256xf32> -> vector<2x256xf32>
    %475 = arith.addf %472, %474 : vector<2x256xf32>
    %476 = arith.negf %475 : vector<2x256xf32>
    %477 = math.exp %476 : vector<2x256xf32>
    %cst_169 = arith.constant 1.000000e+00 : f32
    %478 = vector.broadcast %cst_169 : f32 to vector<2x256xf32>
    %479 = arith.addf %478, %477 : vector<2x256xf32>
    %480 = arith.divf %478, %479 : vector<2x256xf32>
    %481 = math.tanh %475 : vector<2x256xf32>
    %482 = vector.extract_strided_slice %480 {offsets = [0, 0], sizes = [2, 64], strides = [1, 1]} : vector<2x256xf32> to vector<2x64xf32>
    %483 = vector.extract_strided_slice %480 {offsets = [0, 64], sizes = [2, 64], strides = [1, 1]} : vector<2x256xf32> to vector<2x64xf32>
    %484 = vector.extract_strided_slice %481 {offsets = [0, 128], sizes = [2, 64], strides = [1, 1]} : vector<2x256xf32> to vector<2x64xf32>
    %485 = vector.extract_strided_slice %480 {offsets = [0, 192], sizes = [2, 64], strides = [1, 1]} : vector<2x256xf32> to vector<2x64xf32>
    %486 = arith.mulf %483, %459 : vector<2x64xf32>
    %487 = arith.mulf %482, %484 : vector<2x64xf32>
    %488 = arith.addf %486, %487 : vector<2x64xf32>
    %489 = math.tanh %488 : vector<2x64xf32>
    %490 = arith.mulf %485, %489 : vector<2x64xf32>
    %491 = arith.maximumf %462, %490 : vector<2x64xf32>
    %c5_i32_170 = arith.constant 5 : i32
    %492 = arith.index_cast %c5_i32_170 : i32 to index
    %c0_171 = arith.constant 0 : index
    %c0_172 = arith.constant 0 : index
    %493 = vector.load %arg12[%492, %c0_171, %c0_172] : memref<8x2x256xf32, #tpu.memory_space<vmem>>, vector<1x2x256xf32>
    %494 = vector.shape_cast %493 : vector<1x2x256xf32> to vector<2x256xf32>
    %c7_i32_173 = arith.constant 7 : i32
    %495 = arith.subi %c7_i32_173, %c5_i32_170 : i32
    %496 = arith.index_cast %495 : i32 to index
    %c0_174 = arith.constant 0 : index
    %c0_175 = arith.constant 0 : index
    %497 = vector.load %arg12[%496, %c0_174, %c0_175] : memref<8x2x256xf32, #tpu.memory_space<vmem>>, vector<1x2x256xf32>
    %498 = vector.shape_cast %497 : vector<1x2x256xf32> to vector<2x256xf32>
    %499 = vector.shape_cast %2 : vector<1x256xi1> to vector<1x256xi1>
    %500 = vector.broadcast %499 : vector<1x256xi1> to vector<2x256xi1>
    %501 = arith.select %500, %494, %498 : vector<2x256xi1>, vector<2x256xf32>
    %502 = arith.truncf %490 : vector<2x64xf32> to vector<2x64xbf16>
    %cst_176 = arith.constant dense<0.000000e+00> : vector<2x256xf32>
    %503 = tpu.matmul %502, %346, %cst_176 {dimension_numbers = #tpu.dot_dimension_numbers<[1], [0], [0], [1], [0, 0, 1, 1], [], []>} : vector<2x64xbf16>, vector<64x256xbf16>, vector<2x256xf32> -> vector<2x256xf32>
    %504 = arith.addf %501, %503 : vector<2x256xf32>
    %505 = arith.negf %504 : vector<2x256xf32>
    %506 = math.exp %505 : vector<2x256xf32>
    %cst_177 = arith.constant 1.000000e+00 : f32
    %507 = vector.broadcast %cst_177 : f32 to vector<2x256xf32>
    %508 = arith.addf %507, %506 : vector<2x256xf32>
    %509 = arith.divf %507, %508 : vector<2x256xf32>
    %510 = math.tanh %504 : vector<2x256xf32>
    %511 = vector.extract_strided_slice %509 {offsets = [0, 0], sizes = [2, 64], strides = [1, 1]} : vector<2x256xf32> to vector<2x64xf32>
    %512 = vector.extract_strided_slice %509 {offsets = [0, 64], sizes = [2, 64], strides = [1, 1]} : vector<2x256xf32> to vector<2x64xf32>
    %513 = vector.extract_strided_slice %510 {offsets = [0, 128], sizes = [2, 64], strides = [1, 1]} : vector<2x256xf32> to vector<2x64xf32>
    %514 = vector.extract_strided_slice %509 {offsets = [0, 192], sizes = [2, 64], strides = [1, 1]} : vector<2x256xf32> to vector<2x64xf32>
    %515 = arith.mulf %512, %488 : vector<2x64xf32>
    %516 = arith.mulf %511, %513 : vector<2x64xf32>
    %517 = arith.addf %515, %516 : vector<2x64xf32>
    %518 = math.tanh %517 : vector<2x64xf32>
    %519 = arith.mulf %514, %518 : vector<2x64xf32>
    %520 = arith.maximumf %491, %519 : vector<2x64xf32>
    %c6_i32_178 = arith.constant 6 : i32
    %521 = arith.index_cast %c6_i32_178 : i32 to index
    %c0_179 = arith.constant 0 : index
    %c0_180 = arith.constant 0 : index
    %522 = vector.load %arg12[%521, %c0_179, %c0_180] : memref<8x2x256xf32, #tpu.memory_space<vmem>>, vector<1x2x256xf32>
    %523 = vector.shape_cast %522 : vector<1x2x256xf32> to vector<2x256xf32>
    %c7_i32_181 = arith.constant 7 : i32
    %524 = arith.subi %c7_i32_181, %c6_i32_178 : i32
    %525 = arith.index_cast %524 : i32 to index
    %c0_182 = arith.constant 0 : index
    %c0_183 = arith.constant 0 : index
    %526 = vector.load %arg12[%525, %c0_182, %c0_183] : memref<8x2x256xf32, #tpu.memory_space<vmem>>, vector<1x2x256xf32>
    %527 = vector.shape_cast %526 : vector<1x2x256xf32> to vector<2x256xf32>
    %528 = vector.shape_cast %2 : vector<1x256xi1> to vector<1x256xi1>
    %529 = vector.broadcast %528 : vector<1x256xi1> to vector<2x256xi1>
    %530 = arith.select %529, %523, %527 : vector<2x256xi1>, vector<2x256xf32>
    %531 = arith.truncf %519 : vector<2x64xf32> to vector<2x64xbf16>
    %cst_184 = arith.constant dense<0.000000e+00> : vector<2x256xf32>
    %532 = tpu.matmul %531, %346, %cst_184 {dimension_numbers = #tpu.dot_dimension_numbers<[1], [0], [0], [1], [0, 0, 1, 1], [], []>} : vector<2x64xbf16>, vector<64x256xbf16>, vector<2x256xf32> -> vector<2x256xf32>
    %533 = arith.addf %530, %532 : vector<2x256xf32>
    %534 = arith.negf %533 : vector<2x256xf32>
    %535 = math.exp %534 : vector<2x256xf32>
    %cst_185 = arith.constant 1.000000e+00 : f32
    %536 = vector.broadcast %cst_185 : f32 to vector<2x256xf32>
    %537 = arith.addf %536, %535 : vector<2x256xf32>
    %538 = arith.divf %536, %537 : vector<2x256xf32>
    %539 = math.tanh %533 : vector<2x256xf32>
    %540 = vector.extract_strided_slice %538 {offsets = [0, 0], sizes = [2, 64], strides = [1, 1]} : vector<2x256xf32> to vector<2x64xf32>
    %541 = vector.extract_strided_slice %538 {offsets = [0, 64], sizes = [2, 64], strides = [1, 1]} : vector<2x256xf32> to vector<2x64xf32>
    %542 = vector.extract_strided_slice %539 {offsets = [0, 128], sizes = [2, 64], strides = [1, 1]} : vector<2x256xf32> to vector<2x64xf32>
    %543 = vector.extract_strided_slice %538 {offsets = [0, 192], sizes = [2, 64], strides = [1, 1]} : vector<2x256xf32> to vector<2x64xf32>
    %544 = arith.mulf %541, %517 : vector<2x64xf32>
    %545 = arith.mulf %540, %542 : vector<2x64xf32>
    %546 = arith.addf %544, %545 : vector<2x64xf32>
    %547 = math.tanh %546 : vector<2x64xf32>
    %548 = arith.mulf %543, %547 : vector<2x64xf32>
    %549 = arith.maximumf %520, %548 : vector<2x64xf32>
    %c7_i32_186 = arith.constant 7 : i32
    %550 = arith.index_cast %c7_i32_186 : i32 to index
    %c0_187 = arith.constant 0 : index
    %c0_188 = arith.constant 0 : index
    %551 = vector.load %arg12[%550, %c0_187, %c0_188] : memref<8x2x256xf32, #tpu.memory_space<vmem>>, vector<1x2x256xf32>
    %552 = vector.shape_cast %551 : vector<1x2x256xf32> to vector<2x256xf32>
    %c7_i32_189 = arith.constant 7 : i32
    %553 = arith.subi %c7_i32_189, %c7_i32_186 : i32
    %554 = arith.index_cast %553 : i32 to index
    %c0_190 = arith.constant 0 : index
    %c0_191 = arith.constant 0 : index
    %555 = vector.load %arg12[%554, %c0_190, %c0_191] : memref<8x2x256xf32, #tpu.memory_space<vmem>>, vector<1x2x256xf32>
    %556 = vector.shape_cast %555 : vector<1x2x256xf32> to vector<2x256xf32>
    %557 = vector.shape_cast %2 : vector<1x256xi1> to vector<1x256xi1>
    %558 = vector.broadcast %557 : vector<1x256xi1> to vector<2x256xi1>
    %559 = arith.select %558, %552, %556 : vector<2x256xi1>, vector<2x256xf32>
    %560 = arith.truncf %548 : vector<2x64xf32> to vector<2x64xbf16>
    %cst_192 = arith.constant dense<0.000000e+00> : vector<2x256xf32>
    %561 = tpu.matmul %560, %346, %cst_192 {dimension_numbers = #tpu.dot_dimension_numbers<[1], [0], [0], [1], [0, 0, 1, 1], [], []>} : vector<2x64xbf16>, vector<64x256xbf16>, vector<2x256xf32> -> vector<2x256xf32>
    %562 = arith.addf %559, %561 : vector<2x256xf32>
    %563 = arith.negf %562 : vector<2x256xf32>
    %564 = math.exp %563 : vector<2x256xf32>
    %cst_193 = arith.constant 1.000000e+00 : f32
    %565 = vector.broadcast %cst_193 : f32 to vector<2x256xf32>
    %566 = arith.addf %565, %564 : vector<2x256xf32>
    %567 = arith.divf %565, %566 : vector<2x256xf32>
    %568 = math.tanh %562 : vector<2x256xf32>
    %569 = vector.extract_strided_slice %567 {offsets = [0, 0], sizes = [2, 64], strides = [1, 1]} : vector<2x256xf32> to vector<2x64xf32>
    %570 = vector.extract_strided_slice %567 {offsets = [0, 64], sizes = [2, 64], strides = [1, 1]} : vector<2x256xf32> to vector<2x64xf32>
    %571 = vector.extract_strided_slice %568 {offsets = [0, 128], sizes = [2, 64], strides = [1, 1]} : vector<2x256xf32> to vector<2x64xf32>
    %572 = vector.extract_strided_slice %567 {offsets = [0, 192], sizes = [2, 64], strides = [1, 1]} : vector<2x256xf32> to vector<2x64xf32>
    %573 = arith.mulf %570, %546 : vector<2x64xf32>
    %574 = arith.mulf %569, %571 : vector<2x64xf32>
    %575 = arith.addf %573, %574 : vector<2x64xf32>
    %576 = math.tanh %575 : vector<2x64xf32>
    %577 = arith.mulf %572, %576 : vector<2x64xf32>
    %578 = arith.maximumf %549, %577 : vector<2x64xf32>
    %c8_i32_194 = arith.constant 8 : i32
    %c0_195 = arith.constant 0 : index
    %c0_196 = arith.constant 0 : index
    %c0_197 = arith.constant 0 : index
    %579 = vector.load %arg0[%c0_195, %c0_196, %c0_197] : memref<8x2x16xf32, #tpu.memory_space<vmem>>, vector<8x2x16xf32>
    %cst_198 = arith.constant dense<0xFF800000> : vector<2x16xf32>
    %580 = vector.multi_reduction <maximumf>, %579, %cst_198 [0] : vector<8x2x16xf32> to vector<2x16xf32>
    %cst_199 = arith.constant 0.000000e+00 : f32
    %581 = vector.broadcast %cst_199 : f32 to vector<2x16xf32>
    %582 = arith.maximumf %580, %581 : vector<2x16xf32>
    %c0_200 = arith.constant 0 : index
    %c0_201 = arith.constant 0 : index
    %583 = vector.load %arg8[%c0_200, %c0_201] : memref<16x4xf32, #tpu.memory_space<vmem>>, vector<16x4xf32>
    %cst_202 = arith.constant dense<0.000000e+00> : vector<2x4xf32>
    %584 = tpu.matmul %582, %583, %cst_202 {dimension_numbers = #tpu.dot_dimension_numbers<[1], [0], [0], [1], [0, 0, 1, 1], [], []>} : vector<2x16xf32>, vector<16x4xf32>, vector<2x4xf32> -> vector<2x4xf32>
    %c0_203 = arith.constant 0 : index
    %c0_204 = arith.constant 0 : index
    %585 = vector.load %arg9[%c0_203, %c0_204] : memref<64x4xf32, #tpu.memory_space<vmem>>, vector<64x4xf32>
    %cst_205 = arith.constant dense<0.000000e+00> : vector<2x4xf32>
    %586 = tpu.matmul %578, %585, %cst_205 {dimension_numbers = #tpu.dot_dimension_numbers<[1], [0], [0], [1], [0, 0, 1, 1], [], []>} : vector<2x64xf32>, vector<64x4xf32>, vector<2x4xf32> -> vector<2x4xf32>
    %587 = arith.addf %584, %586 : vector<2x4xf32>
    %c0_206 = arith.constant 0 : index
    %c0_207 = arith.constant 0 : index
    %588 = vector.load %arg10[%c0_206, %c0_207] : memref<1x4xf32, #tpu.memory_space<vmem>>, vector<1x4xf32>
    %589 = vector.broadcast %588 : vector<1x4xf32> to vector<2x4xf32>
    %590 = arith.addf %587, %589 : vector<2x4xf32>
    %cst_208 = arith.constant dense<0xFF800000> : vector<2xf32>
    %591 = vector.multi_reduction <maximumf>, %590, %cst_208 [1] : vector<2x4xf32> to vector<2xf32>
    %592 = vector.shape_cast %591 : vector<2xf32> to vector<2x1xf32>
    %593 = vector.broadcast %592 : vector<2x1xf32> to vector<2x4xf32>
    %594 = arith.subf %590, %593 : vector<2x4xf32>
    %595 = math.exp %594 : vector<2x4xf32>
    %cst_209 = arith.constant dense<0.000000e+00> : vector<2xf32>
    %596 = vector.multi_reduction <add>, %595, %cst_209 [1] : vector<2x4xf32> to vector<2xf32>
    %597 = vector.shape_cast %596 : vector<2xf32> to vector<2x1xf32>
    %598 = math.log %597 : vector<2x1xf32>
    %599 = arith.addf %592, %598 : vector<2x1xf32>
    %600 = vector.broadcast %599 : vector<2x1xf32> to vector<2x4xf32>
    %601 = arith.subf %590, %600 : vector<2x4xf32>
    %c0_210 = arith.constant 0 : index
    %c0_211 = arith.constant 0 : index
    %602 = vector.load %arg11[%c0_210, %c0_211] : memref<2x4xf32, #tpu.memory_space<vmem>>, vector<2x4xf32>
    tpu.vector_store %arg11[%c0_210, %c0_211], %601 {strides = array<i32>} : memref<2x4xf32, #tpu.memory_space<vmem>>, vector<2x4xf32>,
    return
  }
}

</mosaic_0001>

<llo_original>
// kernel: tpu_custom_call.1
$region0: #{tpu_custom_call.1}
  #allocation0 [shape = 'u32[]', space=smem, size = 0x4, offset = 0x4, fixed_abs, tag = 'smem constant byte address 0x4 - core index']
  #allocation1 [shape = 'u32[72,128]{1,0:T(1,128)}', space=vmem, size = 0x9000, scoped, tag = 'internal scratch']
  #allocation2 [shape = 'f32[8,2,256]{2,1,0:T(2,128)}', space=vmem, size = 0x4000, scoped, tag = 'scratch operand']
  #allocation3 [shape = 'f32[8,2,32]{2,1,0:T(2,128)}', space=vmem, size = 0x2000, scoped, tag = 'scratch operand']
  #allocation4 [shape = 'f32[8,2,32]{2,1,0:T(2,128)}', space=vmem, size = 0x2000, scoped, tag = 'scratch operand']
  %s0 = inlined_call_operand.vmem [shape: f32[8,2,16], index: 0, kind: input, shape index: {}]
  %s1 = inlined_call_operand.vmem [shape: s32[1,256], index: 1, kind: input, shape index: {}]
  %s2 = inlined_call_operand.hbm [shape: bf16[16,256], index: 2, kind: input, shape index: {}]
  %s3 = inlined_call_operand.vmem [shape: bf16[64,256], index: 3, kind: input, shape index: {}]
  %s4 = inlined_call_operand.vmem [shape: f32[1,256], index: 4, kind: input, shape index: {}]
  %s5 = inlined_call_operand.hbm [shape: bf16[64,256], index: 5, kind: input, shape index: {}]
  %s6 = inlined_call_operand.hbm [shape: bf16[64,256], index: 6, kind: input, shape index: {}]
  %s7 = inlined_call_operand.vmem [shape: f32[1,256], index: 7, kind: input, shape index: {}]
  %s8 = inlined_call_operand.vmem [shape: f32[16,4], index: 8, kind: input, shape index: {}]
  %s9 = inlined_call_operand.vmem [shape: f32[64,4], index: 9, kind: input, shape index: {}]
  %s10 = inlined_call_operand.vmem [shape: f32[1,4], index: 10, kind: input, shape index: {}]
  %s11 = inlined_call_operand.hbm [shape: f32[2,4], index: 11, kind: output, shape index: {}]
  %s12 = sld [smem:[#allocation0]]
  $region66: #{tpu_custom_call.1} parent=0
    _
  %s14 = ssub.s32 1, %s12
  %s15 = scalar_select 0, %s14, %s12
  $region1: #{tpu_custom_call.1} parent=0
    #allocation5 [shape = 'u8[8192]{0}', space=vmem, size = 0x2000, scoped, tag = 'input window, operand 2, single buffered']
    #allocation6 [shape = 's32[1]{0}', space=sflag, size = 0x4, scoped, tag = 'scoped memory for tpu_custom_call.1']
    #allocation7 [shape = 's32[1]{0}', space=sflag, size = 0x4, scoped, tag = 'scoped memory for tpu_custom_call.1']
    #allocation8 [shape = 'u8[32768]{0}', space=vmem, size = 0x8000, scoped, tag = 'input window, operand 5, single buffered']
    #allocation9 [shape = 's32[1]{0}', space=sflag, size = 0x4, scoped, tag = 'scoped memory for tpu_custom_call.1']
    #allocation10 [shape = 'u8[32768]{0}', space=vmem, size = 0x8000, scoped, tag = 'input window, operand 6, single buffered']
    #allocation11 [shape = 'u8[1024]{0}', space=vmem, size = 0x400, scoped, tag = 'output window, operand 0, single buffered']
    %16 = vsyncpa [#allocation6], 0
    %17 = vsyncpa [#allocation9], 0
    %18 = vsyncpa [#allocation7], 0
    // Predicated region
    $region2: #{tpu_custom_call.1} parent=1 // pred_check
      _
    $region3: #{tpu_custom_call.1} parent=1 // pred_check_branch
      %20 = sbr.rel (0) target = $region5
    $region4: #{tpu_custom_call.1} parent=1 // pred_region
      _
    $region5: #{tpu_custom_call.1} parent=1 // pred_fallthru
      _
    // Predicated region
    $region6: #{tpu_custom_call.1} parent=1 // pred_check
      _
    $region7: #{tpu_custom_call.1} parent=1 // pred_check_branch
      %22 = sbr.rel (0) target = $region9
    $region8: #{tpu_custom_call.1} parent=1 // pred_region
      _
    $region9: #{tpu_custom_call.1} parent=1 // pred_fallthru
      _
    // Predicated region
    $region10: #{tpu_custom_call.1} parent=1 // pred_check
      _
    $region11: #{tpu_custom_call.1} parent=1 // pred_check_branch
      %24 = sbr.rel (0) target = $region13
    $region12: #{tpu_custom_call.1} parent=1 // pred_region
      %26 = vsyncadd [#allocation6], 0
      %s27 = sshll.u32 %s2, 4
      %s28 = int_to_ptr.hbm [resolvable:$true] %s27
      %s29 = sshll.u32 [#allocation5], 4
      %s30 = int_to_ptr.vmem [resolvable:$true] %s29
      %35 = dma.hbm_to_vmem [thread:$0]  %s28, 256, %s30, [#allocation6], 128, 128, 8
    $region13: #{tpu_custom_call.1} parent=1 // pred_fallthru
      _
    // Predicated region
    $region14: #{tpu_custom_call.1} parent=1 // pred_check
      _
    $region15: #{tpu_custom_call.1} parent=1 // pred_check_branch
      %37 = sbr.rel (0) target = $region17
    $region16: #{tpu_custom_call.1} parent=1 // pred_region
      _
    $region17: #{tpu_custom_call.1} parent=1 // pred_fallthru
      _
    // Predicated region
    $region18: #{tpu_custom_call.1} parent=1 // pred_check
      _
    $region19: #{tpu_custom_call.1} parent=1 // pred_check_branch
      %39 = sbr.rel (0) target = $region21
    $region20: #{tpu_custom_call.1} parent=1 // pred_region
      _
    $region21: #{tpu_custom_call.1} parent=1 // pred_fallthru
      _
    // Predicated region
    $region22: #{tpu_custom_call.1} parent=1 // pred_check
      _
    $region23: #{tpu_custom_call.1} parent=1 // pred_check_branch
      %41 = sbr.rel (0) target = $region25
    $region24: #{tpu_custom_call.1} parent=1 // pred_region
      %43 = vsyncadd [#allocation9], 0
      %s44 = sshll.u32 %s5, 4
      %s45 = int_to_ptr.hbm [resolvable:$true] %s44
      %s46 = sshll.u32 [#allocation8], 4
      %s47 = int_to_ptr.vmem [resolvable:$true] %s46
      %52 = dma.hbm_to_vmem [thread:$0]  %s45, 1024, %s47, [#allocation9], 128, 128, 8
    $region25: #{tpu_custom_call.1} parent=1 // pred_fallthru
      _
    // Predicated region
    $region26: #{tpu_custom_call.1} parent=1 // pred_check
      _
    $region27: #{tpu_custom_call.1} parent=1 // pred_check_branch
      %54 = sbr.rel (0) target = $region29
    $region28: #{tpu_custom_call.1} parent=1 // pred_region
      %56 = vsyncadd [#allocation9], 0
      %s57 = sshll.u32 %s6, 4
      %s58 = int_to_ptr.hbm [resolvable:$true] %s57
      %s59 = sshll.u32 [#allocation10], 4
      %s60 = int_to_ptr.vmem [resolvable:$true] %s59
      %65 = dma.hbm_to_vmem [thread:$0]  %s58, 1024, %s60, [#allocation9], 128, 128, 8
    $region29: #{tpu_custom_call.1} parent=1 // pred_fallthru
      _
    // Predicated region
    $region30: #{tpu_custom_call.1} parent=1 // pred_check
      _
    $region31: #{tpu_custom_call.1} parent=1 // pred_check_branch
      %67 = sbr.rel (0) target = $region33
    $region32: #{tpu_custom_call.1} parent=1 // pred_region
      _
    $region33: #{tpu_custom_call.1} parent=1 // pred_fallthru
      _
    // Predicated region
    $region34: #{tpu_custom_call.1} parent=1 // pred_check
      _
    $region35: #{tpu_custom_call.1} parent=1 // pred_check_branch
      %69 = sbr.rel (0) target = $region37
    $region36: #{tpu_custom_call.1} parent=1 // pred_region
      _
    $region37: #{tpu_custom_call.1} parent=1 // pred_fallthru
      _
    // Predicated region
    $region38: #{tpu_custom_call.1} parent=1 // pred_check
      _
    $region39: #{tpu_custom_call.1} parent=1 // pred_check_branch
      %71 = sbr.rel (0) target = $region41
    $region40: #{tpu_custom_call.1} parent=1 // pred_region
      _
    $region41: #{tpu_custom_call.1} parent=1 // pred_fallthru
      _
    // Predicated region
    $region42: #{tpu_custom_call.1} parent=1 // pred_check
      _
    $region43: #{tpu_custom_call.1} parent=1 // pred_check_branch
      %73 = sbr.rel (0) target = $region45
    $region44: #{tpu_custom_call.1} parent=1 // pred_region
      _
    $region45: #{tpu_custom_call.1} parent=1 // pred_fallthru
      _
    // Predicated region
    $region46: #{tpu_custom_call.1} parent=1 // pred_check
      _
    $region47: #{tpu_custom_call.1} parent=1 // pred_check_branch
      %75 = sbr.rel (0) target = $region49
    $region48: #{tpu_custom_call.1} parent=1 // pred_region
      %77 = dma.done [#allocation6], 256
    $region49: #{tpu_custom_call.1} parent=1 // pred_fallthru
      _
    // Predicated region
    $region50: #{tpu_custom_call.1} parent=1 // pred_check
      _
    $region51: #{tpu_custom_call.1} parent=1 // pred_check_branch
      %79 = sbr.rel (0) target = $region53
    $region52: #{tpu_custom_call.1} parent=1 // pred_region
      %81 = dma.done [#allocation9], 1024
    $region53: #{tpu_custom_call.1} parent=1 // pred_fallthru
      _
    // Predicated region
    $region54: #{tpu_custom_call.1} parent=1 // pred_check
      _
    $region55: #{tpu_custom_call.1} parent=1 // pred_check_branch
      %83 = sbr.rel (0) target = $region57
    $region56: #{tpu_custom_call.1} parent=1 // pred_region
      %85 = dma.done [#allocation9], 1024
    $region57: #{tpu_custom_call.1} parent=1 // pred_fallthru
      _
    %v87 = vld [vmem:[%s1] sm:$0x3]
    %vm88 = vcmp.ne.s32.totalorder %v87, 0
    %v89 = vld [vmem:[%s0] sm:$0x3]
    %v90 = vld [vmem:[%s0 + $0x2] sm:$0x3]
    %v91 = vld [vmem:[%s0 + $0x4] sm:$0x3]
    %v92 = vld [vmem:[%s0 + $0x6] sm:$0x3]
    %v93 = vld [vmem:[%s0 + $0x8] sm:$0x3]
    %v94 = vld [vmem:[%s0 + $0xa] sm:$0x3]
    %v95 = vld [vmem:[%s0 + $0xc] sm:$0x3]
    %v96 = vld [vmem:[%s0 + $0xe] sm:$0x3]
    %105 = vst [vmem:[#allocation1] ss:$4 sm:$0xff] %v89
    %s106 = scalar_lea.vmem [#allocation1], 1
    %107 = vst [vmem:[%s106] ss:$4 sm:$0xff] %v90
    %s108 = scalar_lea.vmem [#allocation1], 2
    %109 = vst [vmem:[%s108] ss:$4 sm:$0xff] %v91
    %s110 = scalar_lea.vmem [#allocation1], 3
    %111 = vst [vmem:[%s110] ss:$4 sm:$0xff] %v92
    %s112 = scalar_lea.vmem [#allocation1], 32
    %113 = vst [vmem:[%s112] ss:$4 sm:$0xff] %v93
    %s114 = scalar_lea.vmem [#allocation1], 33
    %115 = vst [vmem:[%s114] ss:$4 sm:$0xff] %v94
    %s116 = scalar_lea.vmem [#allocation1], 34
    %117 = vst [vmem:[%s116] ss:$4 sm:$0xff] %v95
    %s118 = scalar_lea.vmem [#allocation1], 35
    %119 = vst [vmem:[%s118] ss:$4 sm:$0xff] %v96
    %v120 = vld.sshfl [vmem:[#allocation1] sm:$0xff pattern:$0x73625140]
    %v121 = vld.sshfl [vmem:[#allocation1 + $0x20] sm:$0xff pattern:$0x73625140]
    %v124 = vpack.c.bf16 %v121, %v120
    %v125 = vld [vmem:[#allocation5] sm:$0xff]
    %v126 = vld [vmem:[#allocation5 + $0x8] sm:$0xff]
    %v127 = vld [vmem:[%s4] sm:$0x3]
    %v129 = vperm.slane %v127, 0
    %v130 = vperm.slane %v127, 1
    %v135 = vunpack.c.l.b16 %v125
    %v136 = vunpack.c.h.b16 %v125
    %v137 = vunpack.c.l.b16 %v126
    %v138 = vunpack.c.h.b16 %v126
    %v139 = vpack.c.b16 %v137, %v135
    %v140 = vpack.c.b16 %v138, %v136
    %vm143 = vcmask 130048
    %v145 = vsel %vm143, %v124, 0
    %147 = vmatpush.bf16.msra.mxu0 0
    %148 = vmatpush.bf16.msra.mxu0 0
    %149 = vmatpush.bf16.msra.mxu0 0
    %150 = vmatpush.bf16.msra.mxu0 0
    %151 = vmatpush.bf16.msra.mxu0 0
    %152 = vmatpush.bf16.msra.mxu0 0
    %153 = vmatpush.bf16.msra.mxu0 0
    %154 = vmatpush.bf16.msra.mxu0 %v139
    %155 = vmatmul.bf16.gmra.mxu0 %v145
    %v156 = vpop.f32.mrf.mxu0
    %v157 = vadd.f32 %v129, %v156
    %v158 = vpop.f32.mrf.mxu0
    %v159 = vadd.f32 %v129, %v158
    %160 = vdwg.mxu0
    %161 = vmatpush.bf16.msra.mxu0 0
    %162 = vmatpush.bf16.msra.mxu0 0
    %163 = vmatpush.bf16.msra.mxu0 0
    %164 = vmatpush.bf16.msra.mxu0 0
    %165 = vmatpush.bf16.msra.mxu0 0
    %166 = vmatpush.bf16.msra.mxu0 0
    %167 = vmatpush.bf16.msra.mxu0 0
    %168 = vmatpush.bf16.msra.mxu0 %v140
    %169 = vmatmul.bf16.gmra.mxu0 %v145
    %v170 = vpop.f32.mrf.mxu0
    %v171 = vadd.f32 %v130, %v170
    %v172 = vpop.f32.mrf.mxu0
    %v173 = vadd.f32 %v130, %v172
    %174 = vdwg.mxu0
    %v179 = vrot.slane %v171, 6
    %v180 = vrot.slane %v173, 6
    %vm181 = vcmask 1041408
    %v182 = vsel %vm181, %v157, %v179
    %vm183 = vcmask 1043458
    %v184 = vsel %vm183, %v157, %v179
    %v185 = vrot.slane %v184, 2
    %vm186 = vcmask 1045508
    %v187 = vsel %vm186, %v157, %v179
    %v188 = vrot.slane %v187, 4
    %vm189 = vcmask 1045504
    %v190 = vsel %vm189, %v179, %v157
    %v191 = vrot.slane %v190, 6
    %v192 = vsel %vm181, %v159, %v180
    %v193 = vsel %vm183, %v159, %v180
    %v194 = vrot.slane %v193, 2
    %v195 = vsel %vm186, %v159, %v180
    %v196 = vrot.slane %v195, 4
    %v197 = vsel %vm189, %v180, %v159
    %v198 = vrot.slane %v197, 6
    %207 = vst [vmem:[#allocation2] sm:$0xf] %v182
    %208 = vst [vmem:[#allocation2 + $0x4] sm:$0xf] %v185
    %209 = vst [vmem:[#allocation2 + $0x8] sm:$0xf] %v188
    %210 = vst [vmem:[#allocation2 + $0xc] sm:$0xf] %v191
    %211 = vst [vmem:[#allocation2 + $0x10] sm:$0xf] %v192
    %212 = vst [vmem:[#allocation2 + $0x14] sm:$0xf] %v194
    %213 = vst [vmem:[#allocation2 + $0x18] sm:$0xf] %v196
    %214 = vst [vmem:[#allocation2 + $0x1c] sm:$0xf] %v198
    %v215 = vld [vmem:[%s3] sm:$0xff]
    %v216 = vld [vmem:[%s3 + $0x8] sm:$0xff]
    %v217 = vld [vmem:[%s3 + $0x10] sm:$0xff]
    %v218 = vld [vmem:[%s3 + $0x18] sm:$0xff]
    %v219 = vld [vmem:[%s3 + $0x20] sm:$0xff]
    %v220 = vld [vmem:[%s3 + $0x28] sm:$0xff]
    %v221 = vld [vmem:[%s3 + $0x30] sm:$0xff]
    %v222 = vld [vmem:[%s3 + $0x38] sm:$0xff]
    %v223 = vld [vmem:[#allocation2] sm:$0xf]
    %s224 = scalar_lea.vmem [#allocation2], 28
    %v225 = vld [vmem:[%s224] sm:$0xf]
    %v226 = vsel %vm88, 1, 0
    %v227 = vperm.slane %v226, 0
    %v228 = vperm.slane %v226, 1
    %vm229 = vcmp.eq.s32.totalorder %v227, 1
    %vm230 = vcmp.eq.s32.totalorder %v228, 1
    %232 = vst [vmem:[#allocation1] ss:$4 sm:$0xff] %v223
    %v233 = vld.sshfl [vmem:[#allocation1] sm:$0xff pattern:$0x73625140]
    %v234 = vld.sshfl [vmem:[#allocation1 + $0x8] sm:$0xff pattern:$0x73625140]
    %238 = vst [vmem:[#allocation1] ss:$4 sm:$0xff] %v225
    %v239 = vld.sshfl [vmem:[#allocation1] sm:$0xff pattern:$0x73625140]
    %v240 = vld.sshfl [vmem:[#allocation1 + $0x8] sm:$0xff pattern:$0x73625140]
    %v243 = vsel %vm229, %v233, %v239
    %v244 = vsel %vm230, %v234, %v240
    %v253 = vunpack.c.l.b16 %v215
    %v254 = vunpack.c.h.b16 %v215
    %v255 = vunpack.c.l.b16 %v216
    %v256 = vunpack.c.h.b16 %v216
    %v257 = vunpack.c.l.b16 %v217
    %v258 = vunpack.c.h.b16 %v217
    %v259 = vunpack.c.l.b16 %v218
    %v260 = vunpack.c.h.b16 %v218
    %v261 = vunpack.c.l.b16 %v219
    %v262 = vunpack.c.h.b16 %v219
    %v263 = vunpack.c.l.b16 %v220
    %v264 = vunpack.c.h.b16 %v220
    %v265 = vunpack.c.l.b16 %v221
    %v266 = vunpack.c.h.b16 %v221
    %v267 = vunpack.c.l.b16 %v222
    %v268 = vunpack.c.h.b16 %v222
    %v269 = vpack.c.b16 %v255, %v253
    %v270 = vpack.c.b16 %v256, %v254
    %v271 = vpack.c.b16 %v259, %v257
    %v272 = vpack.c.b16 %v260, %v258
    %v273 = vpack.c.b16 %v263, %v261
    %v274 = vpack.c.b16 %v264, %v262
    %v275 = vpack.c.b16 %v267, %v265
    %v276 = vpack.c.b16 %v268, %v266
    %vm285 = vcmask 523264
    %v287 = vsel %vm285, 0, 0
    %289 = vmatpush.bf16.msra.mxu0 0
    %290 = vmatpush.bf16.msra.mxu0 0
    %291 = vmatpush.bf16.msra.mxu0 0
    %292 = vmatpush.bf16.msra.mxu0 0
    %293 = vmatpush.bf16.msra.mxu0 %v275
    %294 = vmatpush.bf16.msra.mxu0 %v273
    %295 = vmatpush.bf16.msra.mxu0 %v271
    %296 = vmatpush.bf16.msra.mxu0 %v269
    %297 = vmatmul.bf16.gmra.mxu0 %v287
    %v298 = vpop.f32.mrf.mxu0
    %v299 = vadd.f32 0.0, %v298
    %v300 = vpop.f32.mrf.mxu0
    %301 = vdwg.mxu0
    %302 = vmatpush.bf16.msra.mxu0 0
    %303 = vmatpush.bf16.msra.mxu0 0
    %304 = vmatpush.bf16.msra.mxu0 0
    %305 = vmatpush.bf16.msra.mxu0 0
    %306 = vmatpush.bf16.msra.mxu0 %v276
    %307 = vmatpush.bf16.msra.mxu0 %v274
    %308 = vmatpush.bf16.msra.mxu0 %v272
    %309 = vmatpush.bf16.msra.mxu0 %v270
    %310 = vmatmul.bf16.gmra.mxu0 %v287
    %v311 = vpop.f32.mrf.mxu0
    %v312 = vadd.f32 0.0, %v311
    %v313 = vpop.f32.mrf.mxu0
    %314 = vdwg.mxu0
    %v315 = vadd.f32 %v243, %v299
    %v316 = vadd.f32 %v244, %v312
    %v317 = vxor.u32 %v315, 2147483648
    %v318 = vxor.u32 %v316, 2147483648
    %v319 = vmul.f32 %v317, 1.442695
    %v320 = vpow.pop %v319
    %v321 = vmul.f32 %v318, 1.442695
    %v322 = vpow.pop %v321
    %v323 = vadd.f32 %v320, 1.0
    %v324 = vadd.f32 %v322, 1.0
    %v325 = vrcp.pop %v323
    %v326 = vmul.f32 %v323, %v325
    %v327 = vsub.f32 1.0, %v326
    %v328 = vmul.f32 %v325, %v327
    %v329 = vadd.f32 %v325, %v328
    %vm330 = vweird.f32 %v323
    %vm331 = vweird.f32 %v325
    %vm332 = vmor %vm330, %vm331
    %v333 = vsel %vm332, %v325, %v329
    %v334 = vand.u32 2147483647, %v323
    %vm335 = vcmp.eq.f32.partialorder %v334, 8.507059e+37
    %v336 = vand.u32 %v323, 2147483648
    %v337 = vor.u32 1.1754944e-38, %v336
    %v338 = vsel %vm335, %v337, %v333
    %v339 = vmul.f32 1.0, %v338
    %v340 = vrcp.pop %v324
    %v341 = vmul.f32 %v324, %v340
    %v342 = vsub.f32 1.0, %v341
    %v343 = vmul.f32 %v340, %v342
    %v344 = vadd.f32 %v340, %v343
    %vm345 = vweird.f32 %v324
    %vm346 = vweird.f32 %v340
    %vm347 = vmor %vm345, %vm346
    %v348 = vsel %vm347, %v340, %v344
    %v349 = vand.u32 2147483647, %v324
    %vm350 = vcmp.eq.f32.partialorder %v349, 8.507059e+37
    %v351 = vand.u32 %v324, 2147483648
    %v352 = vor.u32 1.1754944e-38, %v351
    %v353 = vsel %vm350, %v352, %v348
    %v354 = vmul.f32 1.0, %v353
    %v355 = vtanh.pop %v316
    %v356 = vmul.f32 %v339, 0.0
    %v357 = vmul.f32 %v339, %v355
    %359 = vrot.lane.b32.xlu0 %v357, 64
    %v360 = vpop.permute.xlu0 %359
    %v362 = vadd.f32 %v356, %v360
    %v363 = vtanh.pop %v362
    %v364 = vmul.f32 %v354, %v363
    %366 = vrot.lane.b32.xlu0 %v364, 64
    %v367 = vpop.permute.xlu0 %366
    %vm369 = vcmask 254976
    %370 = vst.msk [vmem:[#allocation3] sm:$0x3] %vm369, %v367
    %371 = vrot.lane.b32.xlu0 %v364, 32
    %v372 = vpop.permute.xlu0 %371
    %s374 = scalar_lea.vmem [#allocation4], 14
    %375 = vst.msk [vmem:[%s374] sm:$0x3] %vm369, %v372
    %s376 = scalar_lea.vmem [#allocation2], 4
    %v377 = vld [vmem:[%s376] sm:$0xf]
    %s378 = scalar_lea.vmem [#allocation2], 24
    %v379 = vld [vmem:[%s378] sm:$0xf]
    %381 = vst [vmem:[#allocation1] ss:$4 sm:$0xff] %v377
    %v382 = vld.sshfl [vmem:[#allocation1] sm:$0xff pattern:$0x73625140]
    %v383 = vld.sshfl [vmem:[#allocation1 + $0x8] sm:$0xff pattern:$0x73625140]
    %387 = vst [vmem:[#allocation1] ss:$4 sm:$0xff] %v379
    %v388 = vld.sshfl [vmem:[#allocation1] sm:$0xff pattern:$0x73625140]
    %v389 = vld.sshfl [vmem:[#allocation1 + $0x8] sm:$0xff pattern:$0x73625140]
    %v392 = vsel %vm229, %v382, %v388
    %v393 = vsel %vm230, %v383, %v389
    %v394 = vpack.c.bf16 %v364, %v364
    %396 = vrot.lane.b32.xlu0 %v394, 64
    %v397 = vpop.permute.xlu0 %396
    %v399 = vsel %vm285, %v397, 0
    %401 = vmatpush.bf16.msra.mxu0 0
    %402 = vmatpush.bf16.msra.mxu0 0
    %403 = vmatpush.bf16.msra.mxu0 0
    %404 = vmatpush.bf16.msra.mxu0 0
    %405 = vmatpush.bf16.msra.mxu0 %v275
    %406 = vmatpush.bf16.msra.mxu0 %v273
    %407 = vmatpush.bf16.msra.mxu0 %v271
    %408 = vmatpush.bf16.msra.mxu0 %v269
    %409 = vmatmul.bf16.gmra.mxu0 %v399
    %v410 = vpop.f32.mrf.mxu0
    %v411 = vadd.f32 0.0, %v410
    %v412 = vpop.f32.mrf.mxu0
    %413 = vdwg.mxu0
    %414 = vmatpush.bf16.msra.mxu0 0
    %415 = vmatpush.bf16.msra.mxu0 0
    %416 = vmatpush.bf16.msra.mxu0 0
    %417 = vmatpush.bf16.msra.mxu0 0
    %418 = vmatpush.bf16.msra.mxu0 %v276
    %419 = vmatpush.bf16.msra.mxu0 %v274
    %420 = vmatpush.bf16.msra.mxu0 %v272
    %421 = vmatpush.bf16.msra.mxu0 %v270
    %422 = vmatmul.bf16.gmra.mxu0 %v399
    %v423 = vpop.f32.mrf.mxu0
    %v424 = vadd.f32 0.0, %v423
    %v425 = vpop.f32.mrf.mxu0
    %426 = vdwg.mxu0
    %v427 = vadd.f32 %v392, %v411
    %v428 = vadd.f32 %v393, %v424
    %v429 = vxor.u32 %v427, 2147483648
    %v430 = vxor.u32 %v428, 2147483648
    %v431 = vmul.f32 %v429, 1.442695
    %v432 = vpow.pop %v431
    %v433 = vmul.f32 %v430, 1.442695
    %v434 = vpow.pop %v433
    %v435 = vadd.f32 %v432, 1.0
    %v436 = vadd.f32 %v434, 1.0
    %v437 = vrcp.pop %v435
    %v438 = vmul.f32 %v435, %v437
    %v439 = vsub.f32 1.0, %v438
    %v440 = vmul.f32 %v437, %v439
    %v441 = vadd.f32 %v437, %v440
    %vm442 = vweird.f32 %v435
    %vm443 = vweird.f32 %v437
    %vm444 = vmor %vm442, %vm443
    %v445 = vsel %vm444, %v437, %v441
    %v446 = vand.u32 2147483647, %v435
    %vm447 = vcmp.eq.f32.partialorder %v446, 8.507059e+37
    %v448 = vand.u32 %v435, 2147483648
    %v449 = vor.u32 1.1754944e-38, %v448
    %v450 = vsel %vm447, %v449, %v445
    %v451 = vmul.f32 1.0, %v450
    %v452 = vrcp.pop %v436
    %v453 = vmul.f32 %v436, %v452
    %v454 = vsub.f32 1.0, %v453
    %v455 = vmul.f32 %v452, %v454
    %v456 = vadd.f32 %v452, %v455
    %vm457 = vweird.f32 %v436
    %vm458 = vweird.f32 %v452
    %vm459 = vmor %vm457, %vm458
    %v460 = vsel %vm459, %v452, %v456
    %v461 = vand.u32 2147483647, %v436
    %vm462 = vcmp.eq.f32.partialorder %v461, 8.507059e+37
    %v463 = vand.u32 %v436, 2147483648
    %v464 = vor.u32 1.1754944e-38, %v463
    %v465 = vsel %vm462, %v464, %v460
    %v466 = vmul.f32 1.0, %v465
    %v467 = vtanh.pop %v428
    %v468 = vmul.f32 %v451, %v362
    %v469 = vmul.f32 %v451, %v467
    %471 = vrot.lane.b32.xlu0 %v469, 64
    %v472 = vpop.permute.xlu0 %471
    %v474 = vadd.f32 %v468, %v472
    %v475 = vtanh.pop %v474
    %v476 = vmul.f32 %v466, %v475
    %478 = vrot.lane.b32.xlu0 %v476, 64
    %v479 = vpop.permute.xlu0 %478
    %s481 = scalar_lea.vmem [#allocation3], 2
    %482 = vst.msk [vmem:[%s481] sm:$0x3] %vm369, %v479
    %483 = vrot.lane.b32.xlu0 %v476, 32
    %v484 = vpop.permute.xlu0 %483
    %s486 = scalar_lea.vmem [#allocation4], 12
    %487 = vst.msk [vmem:[%s486] sm:$0x3] %vm369, %v484
    %s488 = scalar_lea.vmem [#allocation2], 8
    %v489 = vld [vmem:[%s488] sm:$0xf]
    %s490 = scalar_lea.vmem [#allocation2], 20
    %v491 = vld [vmem:[%s490] sm:$0xf]
    %493 = vst [vmem:[#allocation1] ss:$4 sm:$0xff] %v489
    %v494 = vld.sshfl [vmem:[#allocation1] sm:$0xff pattern:$0x73625140]
    %v495 = vld.sshfl [vmem:[#allocation1 + $0x8] sm:$0xff pattern:$0x73625140]
    %499 = vst [vmem:[#allocation1] ss:$4 sm:$0xff] %v491
    %v500 = vld.sshfl [vmem:[#allocation1] sm:$0xff pattern:$0x73625140]
    %v501 = vld.sshfl [vmem:[#allocation1 + $0x8] sm:$0xff pattern:$0x73625140]
    %v504 = vsel %vm229, %v494, %v500
    %v505 = vsel %vm230, %v495, %v501
    %v506 = vpack.c.bf16 %v476, %v476
    %508 = vrot.lane.b32.xlu0 %v506, 64
    %v509 = vpop.permute.xlu0 %508
    %v511 = vsel %vm285, %v509, 0
    %513 = vmatpush.bf16.msra.mxu0 0
    %514 = vmatpush.bf16.msra.mxu0 0
    %515 = vmatpush.bf16.msra.mxu0 0
    %516 = vmatpush.bf16.msra.mxu0 0
    %517 = vmatpush.bf16.msra.mxu0 %v275
    %518 = vmatpush.bf16.msra.mxu0 %v273
    %519 = vmatpush.bf16.msra.mxu0 %v271
    %520 = vmatpush.bf16.msra.mxu0 %v269
    %521 = vmatmul.bf16.gmra.mxu0 %v511
    %v522 = vpop.f32.mrf.mxu0
    %v523 = vadd.f32 0.0, %v522
    %v524 = vpop.f32.mrf.mxu0
    %525 = vdwg.mxu0
    %526 = vmatpush.bf16.msra.mxu0 0
    %527 = vmatpush.bf16.msra.mxu0 0
    %528 = vmatpush.bf16.msra.mxu0 0
    %529 = vmatpush.bf16.msra.mxu0 0
    %530 = vmatpush.bf16.msra.mxu0 %v276
    %531 = vmatpush.bf16.msra.mxu0 %v274
    %532 = vmatpush.bf16.msra.mxu0 %v272
    %533 = vmatpush.bf16.msra.mxu0 %v270
    %534 = vmatmul.bf16.gmra.mxu0 %v511
    %v535 = vpop.f32.mrf.mxu0
    %v536 = vadd.f32 0.0, %v535
    %v537 = vpop.f32.mrf.mxu0
    %538 = vdwg.mxu0
    %v539 = vadd.f32 %v504, %v523
    %v540 = vadd.f32 %v505, %v536
    %v541 = vxor.u32 %v539, 2147483648
    %v542 = vxor.u32 %v540, 2147483648
    %v543 = vmul.f32 %v541, 1.442695
    %v544 = vpow.pop %v543
    %v545 = vmul.f32 %v542, 1.442695
    %v546 = vpow.pop %v545
    %v547 = vadd.f32 %v544, 1.0
    %v548 = vadd.f32 %v546, 1.0
    %v549 = vrcp.pop %v547
    %v550 = vmul.f32 %v547, %v549
    %v551 = vsub.f32 1.0, %v550
    %v552 = vmul.f32 %v549, %v551
    %v553 = vadd.f32 %v549, %v552
    %vm554 = vweird.f32 %v547
    %vm555 = vweird.f32 %v549
    %vm556 = vmor %vm554, %vm555
    %v557 = vsel %vm556, %v549, %v553
    %v558 = vand.u32 2147483647, %v547
    %vm559 = vcmp.eq.f32.partialorder %v558, 8.507059e+37
    %v560 = vand.u32 %v547, 2147483648
    %v561 = vor.u32 1.1754944e-38, %v560
    %v562 = vsel %vm559, %v561, %v557
    %v563 = vmul.f32 1.0, %v562
    %v564 = vrcp.pop %v548
    %v565 = vmul.f32 %v548, %v564
    %v566 = vsub.f32 1.0, %v565
    %v567 = vmul.f32 %v564, %v566
    %v568 = vadd.f32 %v564, %v567
    %vm569 = vweird.f32 %v548
    %vm570 = vweird.f32 %v564
    %vm571 = vmor %vm569, %vm570
    %v572 = vsel %vm571, %v564, %v568
    %v573 = vand.u32 2147483647, %v548
    %vm574 = vcmp.eq.f32.partialorder %v573, 8.507059e+37
    %v575 = vand.u32 %v548, 2147483648
    %v576 = vor.u32 1.1754944e-38, %v575
    %v577 = vsel %vm574, %v576, %v572
    %v578 = vmul.f32 1.0, %v577
    %v579 = vtanh.pop %v540
    %v580 = vmul.f32 %v563, %v474
    %v581 = vmul.f32 %v563, %v579
    %583 = vrot.lane.b32.xlu0 %v581, 64
    %v584 = vpop.permute.xlu0 %583
    %v586 = vadd.f32 %v580, %v584
    %v587 = vtanh.pop %v586
    %v588 = vmul.f32 %v578, %v587
    %590 = vrot.lane.b32.xlu0 %v588, 64
    %v591 = vpop.permute.xlu0 %590
    %s593 = scalar_lea.vmem [#allocation3], 4
    %594 = vst.msk [vmem:[%s593] sm:$0x3] %vm369, %v591
    %595 = vrot.lane.b32.xlu0 %v588, 32
    %v596 = vpop.permute.xlu0 %595
    %s598 = scalar_lea.vmem [#allocation4], 10
    %599 = vst.msk [vmem:[%s598] sm:$0x3] %vm369, %v596
    %s600 = scalar_lea.vmem [#allocation2], 12
    %v601 = vld [vmem:[%s600] sm:$0xf]
    %s602 = scalar_lea.vmem [#allocation2], 16
    %v603 = vld [vmem:[%s602] sm:$0xf]
    %605 = vst [vmem:[#allocation1] ss:$4 sm:$0xff] %v601
    %v606 = vld.sshfl [vmem:[#allocation1] sm:$0xff pattern:$0x73625140]
    %v607 = vld.sshfl [vmem:[#allocation1 + $0x8] sm:$0xff pattern:$0x73625140]
    %611 = vst [vmem:[#allocation1] ss:$4 sm:$0xff] %v603
    %v612 = vld.sshfl [vmem:[#allocation1] sm:$0xff pattern:$0x73625140]
    %v613 = vld.sshfl [vmem:[#allocation1 + $0x8] sm:$0xff pattern:$0x73625140]
    %v616 = vsel %vm229, %v606, %v612
    %v617 = vsel %vm230, %v607, %v613
    %v618 = vpack.c.bf16 %v588, %v588
    %620 = vrot.lane.b32.xlu0 %v618, 64
    %v621 = vpop.permute.xlu0 %620
    %v623 = vsel %vm285, %v621, 0
    %625 = vmatpush.bf16.msra.mxu0 0
    %626 = vmatpush.bf16.msra.mxu0 0
    %627 = vmatpush.bf16.msra.mxu0 0
    %628 = vmatpush.bf16.msra.mxu0 0
    %629 = vmatpush.bf16.msra.mxu0 %v275
    %630 = vmatpush.bf16.msra.mxu0 %v273
    %631 = vmatpush.bf16.msra.mxu0 %v271
    %632 = vmatpush.bf16.msra.mxu0 %v269
    %633 = vmatmul.bf16.gmra.mxu0 %v623
    %v634 = vpop.f32.mrf.mxu0
    %v635 = vadd.f32 0.0, %v634
    %v636 = vpop.f32.mrf.mxu0
    %637 = vdwg.mxu0
    %638 = vmatpush.bf16.msra.mxu0 0
    %639 = vmatpush.bf16.msra.mxu0 0
    %640 = vmatpush.bf16.msra.mxu0 0
    %641 = vmatpush.bf16.msra.mxu0 0
    %642 = vmatpush.bf16.msra.mxu0 %v276
    %643 = vmatpush.bf16.msra.mxu0 %v274
    %644 = vmatpush.bf16.msra.mxu0 %v272
    %645 = vmatpush.bf16.msra.mxu0 %v270
    %646 = vmatmul.bf16.gmra.mxu0 %v623
    %v647 = vpop.f32.mrf.mxu0
    %v648 = vadd.f32 0.0, %v647
    %v649 = vpop.f32.mrf.mxu0
    %650 = vdwg.mxu0
    %v651 = vadd.f32 %v616, %v635
    %v652 = vadd.f32 %v617, %v648
    %v653 = vxor.u32 %v651, 2147483648
    %v654 = vxor.u32 %v652, 2147483648
    %v655 = vmul.f32 %v653, 1.442695
    %v656 = vpow.pop %v655
    %v657 = vmul.f32 %v654, 1.442695
    %v658 = vpow.pop %v657
    %v659 = vadd.f32 %v656, 1.0
    %v660 = vadd.f32 %v658, 1.0
    %v661 = vrcp.pop %v659
    %v662 = vmul.f32 %v659, %v661
    %v663 = vsub.f32 1.0, %v662
    %v664 = vmul.f32 %v661, %v663
    %v665 = vadd.f32 %v661, %v664
    %vm666 = vweird.f32 %v659
    %vm667 = vweird.f32 %v661
    %vm668 = vmor %vm666, %vm667
    %v669 = vsel %vm668, %v661, %v665
    %v670 = vand.u32 2147483647, %v659
    %vm671 = vcmp.eq.f32.partialorder %v670, 8.507059e+37
    %v672 = vand.u32 %v659, 2147483648
    %v673 = vor.u32 1.1754944e-38, %v672
    %v674 = vsel %vm671, %v673, %v669
    %v675 = vmul.f32 1.0, %v674
    %v676 = vrcp.pop %v660
    %v677 = vmul.f32 %v660, %v676
    %v678 = vsub.f32 1.0, %v677
    %v679 = vmul.f32 %v676, %v678
    %v680 = vadd.f32 %v676, %v679
    %vm681 = vweird.f32 %v660
    %vm682 = vweird.f32 %v676
    %vm683 = vmor %vm681, %vm682
    %v684 = vsel %vm683, %v676, %v680
    %v685 = vand.u32 2147483647, %v660
    %vm686 = vcmp.eq.f32.partialorder %v685, 8.507059e+37
    %v687 = vand.u32 %v660, 2147483648
    %v688 = vor.u32 1.1754944e-38, %v687
    %v689 = vsel %vm686, %v688, %v684
    %v690 = vmul.f32 1.0, %v689
    %v691 = vtanh.pop %v652
    %v692 = vmul.f32 %v675, %v586
    %v693 = vmul.f32 %v675, %v691
    %695 = vrot.lane.b32.xlu0 %v693, 64
    %v696 = vpop.permute.xlu0 %695
    %v698 = vadd.f32 %v692, %v696
    %v699 = vtanh.pop %v698
    %v700 = vmul.f32 %v690, %v699
    %702 = vrot.lane.b32.xlu0 %v700, 64
    %v703 = vpop.permute.xlu0 %702
    %s705 = scalar_lea.vmem [#allocation3], 6
    %706 = vst.msk [vmem:[%s705] sm:$0x3] %vm369, %v703
    %707 = vrot.lane.b32.xlu0 %v700, 32
    %v708 = vpop.permute.xlu0 %707
    %s710 = scalar_lea.vmem [#allocation4], 8
    %711 = vst.msk [vmem:[%s710] sm:$0x3] %vm369, %v708
    %v712 = vld [vmem:[%s602] sm:$0xf]
    %v713 = vld [vmem:[%s600] sm:$0xf]
    %715 = vst [vmem:[#allocation1] ss:$4 sm:$0xff] %v712
    %v716 = vld.sshfl [vmem:[#allocation1] sm:$0xff pattern:$0x73625140]
    %v717 = vld.sshfl [vmem:[#allocation1 + $0x8] sm:$0xff pattern:$0x73625140]
    %721 = vst [vmem:[#allocation1] ss:$4 sm:$0xff] %v713
    %v722 = vld.sshfl [vmem:[#allocation1] sm:$0xff pattern:$0x73625140]
    %v723 = vld.sshfl [vmem:[#allocation1 + $0x8] sm:$0xff pattern:$0x73625140]
    %v726 = vsel %vm229, %v716, %v722
    %v727 = vsel %vm230, %v717, %v723
    %v728 = vpack.c.bf16 %v700, %v700
    %730 = vrot.lane.b32.xlu0 %v728, 64
    %v731 = vpop.permute.xlu0 %730
    %v733 = vsel %vm285, %v731, 0
    %735 = vmatpush.bf16.msra.mxu0 0
    %736 = vmatpush.bf16.msra.mxu0 0
    %737 = vmatpush.bf16.msra.mxu0 0
    %738 = vmatpush.bf16.msra.mxu0 0
    %739 = vmatpush.bf16.msra.mxu0 %v275
    %740 = vmatpush.bf16.msra.mxu0 %v273
    %741 = vmatpush.bf16.msra.mxu0 %v271
    %742 = vmatpush.bf16.msra.mxu0 %v269
    %743 = vmatmul.bf16.gmra.mxu0 %v733
    %v744 = vpop.f32.mrf.mxu0
    %v745 = vadd.f32 0.0, %v744
    %v746 = vpop.f32.mrf.mxu0
    %747 = vdwg.mxu0
    %748 = vmatpush.bf16.msra.mxu0 0
    %749 = vmatpush.bf16.msra.mxu0 0
    %750 = vmatpush.bf16.msra.mxu0 0
    %751 = vmatpush.bf16.msra.mxu0 0
    %752 = vmatpush.bf16.msra.mxu0 %v276
    %753 = vmatpush.bf16.msra.mxu0 %v274
    %754 = vmatpush.bf16.msra.mxu0 %v272
    %755 = vmatpush.bf16.msra.mxu0 %v270
    %756 = vmatmul.bf16.gmra.mxu0 %v733
    %v757 = vpop.f32.mrf.mxu0
    %v758 = vadd.f32 0.0, %v757
    %v759 = vpop.f32.mrf.mxu0
    %760 = vdwg.mxu0
    %v761 = vadd.f32 %v726, %v745
    %v762 = vadd.f32 %v727, %v758
    %v763 = vxor.u32 %v761, 2147483648
    %v764 = vxor.u32 %v762, 2147483648
    %v765 = vmul.f32 %v763, 1.442695
    %v766 = vpow.pop %v765
    %v767 = vmul.f32 %v764, 1.442695
    %v768 = vpow.pop %v767
    %v769 = vadd.f32 %v766, 1.0
    %v770 = vadd.f32 %v768, 1.0
    %v771 = vrcp.pop %v769
    %v772 = vmul.f32 %v769, %v771
    %v773 = vsub.f32 1.0, %v772
    %v774 = vmul.f32 %v771, %v773
    %v775 = vadd.f32 %v771, %v774
    %vm776 = vweird.f32 %v769
    %vm777 = vweird.f32 %v771
    %vm778 = vmor %vm776, %vm777
    %v779 = vsel %vm778, %v771, %v775
    %v780 = vand.u32 2147483647, %v769
    %vm781 = vcmp.eq.f32.partialorder %v780, 8.507059e+37
    %v782 = vand.u32 %v769, 2147483648
    %v783 = vor.u32 1.1754944e-38, %v782
    %v784 = vsel %vm781, %v783, %v779
    %v785 = vmul.f32 1.0, %v784
    %v786 = vrcp.pop %v770
    %v787 = vmul.f32 %v770, %v786
    %v788 = vsub.f32 1.0, %v787
    %v789 = vmul.f32 %v786, %v788
    %v790 = vadd.f32 %v786, %v789
    %vm791 = vweird.f32 %v770
    %vm792 = vweird.f32 %v786
    %vm793 = vmor %vm791, %vm792
    %v794 = vsel %vm793, %v786, %v790
    %v795 = vand.u32 2147483647, %v770
    %vm796 = vcmp.eq.f32.partialorder %v795, 8.507059e+37
    %v797 = vand.u32 %v770, 2147483648
    %v798 = vor.u32 1.1754944e-38, %v797
    %v799 = vsel %vm796, %v798, %v794
    %v800 = vmul.f32 1.0, %v799
    %v801 = vtanh.pop %v762
    %v802 = vmul.f32 %v785, %v698
    %v803 = vmul.f32 %v785, %v801
    %805 = vrot.lane.b32.xlu0 %v803, 64
    %v806 = vpop.permute.xlu0 %805
    %v808 = vadd.f32 %v802, %v806
    %v809 = vtanh.pop %v808
    %v810 = vmul.f32 %v800, %v809
    %812 = vrot.lane.b32.xlu0 %v810, 64
    %v813 = vpop.permute.xlu0 %812
    %s815 = scalar_lea.vmem [#allocation3], 8
    %816 = vst.msk [vmem:[%s815] sm:$0x3] %vm369, %v813
    %817 = vrot.lane.b32.xlu0 %v810, 32
    %v818 = vpop.permute.xlu0 %817
    %s820 = scalar_lea.vmem [#allocation4], 6
    %821 = vst.msk [vmem:[%s820] sm:$0x3] %vm369, %v818
    %v822 = vld [vmem:[%s490] sm:$0xf]
    %v823 = vld [vmem:[%s488] sm:$0xf]
    %825 = vst [vmem:[#allocation1] ss:$4 sm:$0xff] %v822
    %v826 = vld.sshfl [vmem:[#allocation1] sm:$0xff pattern:$0x73625140]
    %v827 = vld.sshfl [vmem:[#allocation1 + $0x8] sm:$0xff pattern:$0x73625140]
    %831 = vst [vmem:[#allocation1] ss:$4 sm:$0xff] %v823
    %v832 = vld.sshfl [vmem:[#allocation1] sm:$0xff pattern:$0x73625140]
    %v833 = vld.sshfl [vmem:[#allocation1 + $0x8] sm:$0xff pattern:$0x73625140]
    %v836 = vsel %vm229, %v826, %v832
    %v837 = vsel %vm230, %v827, %v833
    %v838 = vpack.c.bf16 %v810, %v810
    %840 = vrot.lane.b32.xlu0 %v838, 64
    %v841 = vpop.permute.xlu0 %840
    %v843 = vsel %vm285, %v841, 0
    %845 = vmatpush.bf16.msra.mxu0 0
    %846 = vmatpush.bf16.msra.mxu0 0
    %847 = vmatpush.bf16.msra.mxu0 0
    %848 = vmatpush.bf16.msra.mxu0 0
    %849 = vmatpush.bf16.msra.mxu0 %v275
    %850 = vmatpush.bf16.msra.mxu0 %v273
    %851 = vmatpush.bf16.msra.mxu0 %v271
    %852 = vmatpush.bf16.msra.mxu0 %v269
    %853 = vmatmul.bf16.gmra.mxu0 %v843
    %v854 = vpop.f32.mrf.mxu0
    %v855 = vadd.f32 0.0, %v854
    %v856 = vpop.f32.mrf.mxu0
    %857 = vdwg.mxu0
    %858 = vmatpush.bf16.msra.mxu0 0
    %859 = vmatpush.bf16.msra.mxu0 0
    %860 = vmatpush.bf16.msra.mxu0 0
    %861 = vmatpush.bf16.msra.mxu0 0
    %862 = vmatpush.bf16.msra.mxu0 %v276
    %863 = vmatpush.bf16.msra.mxu0 %v274
    %864 = vmatpush.bf16.msra.mxu0 %v272
    %865 = vmatpush.bf16.msra.mxu0 %v270
    %866 = vmatmul.bf16.gmra.mxu0 %v843
    %v867 = vpop.f32.mrf.mxu0
    %v868 = vadd.f32 0.0, %v867
    %v869 = vpop.f32.mrf.mxu0
    %870 = vdwg.mxu0
    %v871 = vadd.f32 %v836, %v855
    %v872 = vadd.f32 %v837, %v868
    %v873 = vxor.u32 %v871, 2147483648
    %v874 = vxor.u32 %v872, 2147483648
    %v875 = vmul.f32 %v873, 1.442695
    %v876 = vpow.pop %v875
    %v877 = vmul.f32 %v874, 1.442695
    %v878 = vpow.pop %v877
    %v879 = vadd.f32 %v876, 1.0
    %v880 = vadd.f32 %v878, 1.0
    %v881 = vrcp.pop %v879
    %v882 = vmul.f32 %v879, %v881
    %v883 = vsub.f32 1.0, %v882
    %v884 = vmul.f32 %v881, %v883
    %v885 = vadd.f32 %v881, %v884
    %vm886 = vweird.f32 %v879
    %vm887 = vweird.f32 %v881
    %vm888 = vmor %vm886, %vm887
    %v889 = vsel %vm888, %v881, %v885
    %v890 = vand.u32 2147483647, %v879
    %vm891 = vcmp.eq.f32.partialorder %v890, 8.507059e+37
    %v892 = vand.u32 %v879, 2147483648
    %v893 = vor.u32 1.1754944e-38, %v892
    %v894 = vsel %vm891, %v893, %v889
    %v895 = vmul.f32 1.0, %v894
    %v896 = vrcp.pop %v880
    %v897 = vmul.f32 %v880, %v896
    %v898 = vsub.f32 1.0, %v897
    %v899 = vmul.f32 %v896, %v898
    %v900 = vadd.f32 %v896, %v899
    %vm901 = vweird.f32 %v880
    %vm902 = vweird.f32 %v896
    %vm903 = vmor %vm901, %vm902
    %v904 = vsel %vm903, %v896, %v900
    %v905 = vand.u32 2147483647, %v880
    %vm906 = vcmp.eq.f32.partialorder %v905, 8.507059e+37
    %v907 = vand.u32 %v880, 2147483648
    %v908 = vor.u32 1.1754944e-38, %v907
    %v909 = vsel %vm906, %v908, %v904
    %v910 = vmul.f32 1.0, %v909
    %v911 = vtanh.pop %v872
    %v912 = vmul.f32 %v895, %v808
    %v913 = vmul.f32 %v895, %v911
    %915 = vrot.lane.b32.xlu0 %v913, 64
    %v916 = vpop.permute.xlu0 %915
    %v918 = vadd.f32 %v912, %v916
    %v919 = vtanh.pop %v918
    %v920 = vmul.f32 %v910, %v919
    %922 = vrot.lane.b32.xlu0 %v920, 64
    %v923 = vpop.permute.xlu0 %922
    %s925 = scalar_lea.vmem [#allocation3], 10
    %926 = vst.msk [vmem:[%s925] sm:$0x3] %vm369, %v923
    %927 = vrot.lane.b32.xlu0 %v920, 32
    %v928 = vpop.permute.xlu0 %927
    %s930 = scalar_lea.vmem [#allocation4], 4
    %931 = vst.msk [vmem:[%s930] sm:$0x3] %vm369, %v928
    %v932 = vld [vmem:[%s378] sm:$0xf]
    %v933 = vld [vmem:[%s376] sm:$0xf]
    %935 = vst [vmem:[#allocation1] ss:$4 sm:$0xff] %v932
    %v936 = vld.sshfl [vmem:[#allocation1] sm:$0xff pattern:$0x73625140]
    %v937 = vld.sshfl [vmem:[#allocation1 + $0x8] sm:$0xff pattern:$0x73625140]
    %941 = vst [vmem:[#allocation1] ss:$4 sm:$0xff] %v933
    %v942 = vld.sshfl [vmem:[#allocation1] sm:$0xff pattern:$0x73625140]
    %v943 = vld.sshfl [vmem:[#allocation1 + $0x8] sm:$0xff pattern:$0x73625140]
    %v946 = vsel %vm229, %v936, %v942
    %v947 = vsel %vm230, %v937, %v943
    %v948 = vpack.c.bf16 %v920, %v920
    %950 = vrot.lane.b32.xlu0 %v948, 64
    %v951 = vpop.permute.xlu0 %950
    %v953 = vsel %vm285, %v951, 0
    %955 = vmatpush.bf16.msra.mxu0 0
    %956 = vmatpush.bf16.msra.mxu0 0
    %957 = vmatpush.bf16.msra.mxu0 0
    %958 = vmatpush.bf16.msra.mxu0 0
    %959 = vmatpush.bf16.msra.mxu0 %v275
    %960 = vmatpush.bf16.msra.mxu0 %v273
    %961 = vmatpush.bf16.msra.mxu0 %v271
    %962 = vmatpush.bf16.msra.mxu0 %v269
    %963 = vmatmul.bf16.gmra.mxu0 %v953
    %v964 = vpop.f32.mrf.mxu0
    %v965 = vadd.f32 0.0, %v964
    %v966 = vpop.f32.mrf.mxu0
    %967 = vdwg.mxu0
    %968 = vmatpush.bf16.msra.mxu0 0
    %969 = vmatpush.bf16.msra.mxu0 0
    %970 = vmatpush.bf16.msra.mxu0 0
    %971 = vmatpush.bf16.msra.mxu0 0
    %972 = vmatpush.bf16.msra.mxu0 %v276
    %973 = vmatpush.bf16.msra.mxu0 %v274
    %974 = vmatpush.bf16.msra.mxu0 %v272
    %975 = vmatpush.bf16.msra.mxu0 %v270
    %976 = vmatmul.bf16.gmra.mxu0 %v953
    %v977 = vpop.f32.mrf.mxu0
    %v978 = vadd.f32 0.0, %v977
    %v979 = vpop.f32.mrf.mxu0
    %980 = vdwg.mxu0
    %v981 = vadd.f32 %v946, %v965
    %v982 = vadd.f32 %v947, %v978
    %v983 = vxor.u32 %v981, 2147483648
    %v984 = vxor.u32 %v982, 2147483648
    %v985 = vmul.f32 %v983, 1.442695
    %v986 = vpow.pop %v985
    %v987 = vmul.f32 %v984, 1.442695
    %v988 = vpow.pop %v987
    %v989 = vadd.f32 %v986, 1.0
    %v990 = vadd.f32 %v988, 1.0
    %v991 = vrcp.pop %v989
    %v992 = vmul.f32 %v989, %v991
    %v993 = vsub.f32 1.0, %v992
    %v994 = vmul.f32 %v991, %v993
    %v995 = vadd.f32 %v991, %v994
    %vm996 = vweird.f32 %v989
    %vm997 = vweird.f32 %v991
    %vm998 = vmor %vm996, %vm997
    %v999 = vsel %vm998, %v991, %v995
    %v1000 = vand.u32 2147483647, %v989
    %vm1001 = vcmp.eq.f32.partialorder %v1000, 8.507059e+37
    %v1002 = vand.u32 %v989, 2147483648
    %v1003 = vor.u32 1.1754944e-38, %v1002
    %v1004 = vsel %vm1001, %v1003, %v999
    %v1005 = vmul.f32 1.0, %v1004
    %v1006 = vrcp.pop %v990
    %v1007 = vmul.f32 %v990, %v1006
    %v1008 = vsub.f32 1.0, %v1007
    %v1009 = vmul.f32 %v1006, %v1008
    %v1010 = vadd.f32 %v1006, %v1009
    %vm1011 = vweird.f32 %v990
    %vm1012 = vweird.f32 %v1006
    %vm1013 = vmor %vm1011, %vm1012
    %v1014 = vsel %vm1013, %v1006, %v1010
    %v1015 = vand.u32 2147483647, %v990
    %vm1016 = vcmp.eq.f32.partialorder %v1015, 8.507059e+37
    %v1017 = vand.u32 %v990, 2147483648
    %v1018 = vor.u32 1.1754944e-38, %v1017
    %v1019 = vsel %vm1016, %v1018, %v1014
    %v1020 = vmul.f32 1.0, %v1019
    %v1021 = vtanh.pop %v982
    %v1022 = vmul.f32 %v1005, %v918
    %v1023 = vmul.f32 %v1005, %v1021
    %1025 = vrot.lane.b32.xlu0 %v1023, 64
    %v1026 = vpop.permute.xlu0 %1025
    %v1028 = vadd.f32 %v1022, %v1026
    %v1029 = vtanh.pop %v1028
    %v1030 = vmul.f32 %v1020, %v1029
    %1032 = vrot.lane.b32.xlu0 %v1030, 64
    %v1033 = vpop.permute.xlu0 %1032
    %s1035 = scalar_lea.vmem [#allocation3], 12
    %1036 = vst.msk [vmem:[%s1035] sm:$0x3] %vm369, %v1033
    %1037 = vrot.lane.b32.xlu0 %v1030, 32
    %v1038 = vpop.permute.xlu0 %1037
    %s1040 = scalar_lea.vmem [#allocation4], 2
    %1041 = vst.msk [vmem:[%s1040] sm:$0x3] %vm369, %v1038
    %v1042 = vld [vmem:[%s224] sm:$0xf]
    %v1043 = vld [vmem:[#allocation2] sm:$0xf]
    %1045 = vst [vmem:[#allocation1] ss:$4 sm:$0xff] %v1042
    %v1046 = vld.sshfl [vmem:[#allocation1] sm:$0xff pattern:$0x73625140]
    %v1047 = vld.sshfl [vmem:[#allocation1 + $0x8] sm:$0xff pattern:$0x73625140]
    %1051 = vst [vmem:[#allocation1] ss:$4 sm:$0xff] %v1043
    %v1052 = vld.sshfl [vmem:[#allocation1] sm:$0xff pattern:$0x73625140]
    %v1053 = vld.sshfl [vmem:[#allocation1 + $0x8] sm:$0xff pattern:$0x73625140]
    %v1056 = vsel %vm229, %v1046, %v1052
    %v1057 = vsel %vm230, %v1047, %v1053
    %v1058 = vpack.c.bf16 %v1030, %v1030
    %1060 = vrot.lane.b32.xlu0 %v1058, 64
    %v1061 = vpop.permute.xlu0 %1060
    %v1063 = vsel %vm285, %v1061, 0
    %1065 = vmatpush.bf16.msra.mxu0 0
    %1066 = vmatpush.bf16.msra.mxu0 0
    %1067 = vmatpush.bf16.msra.mxu0 0
    %1068 = vmatpush.bf16.msra.mxu0 0
    %1069 = vmatpush.bf16.msra.mxu0 %v275
    %1070 = vmatpush.bf16.msra.mxu0 %v273
    %1071 = vmatpush.bf16.msra.mxu0 %v271
    %1072 = vmatpush.bf16.msra.mxu0 %v269
    %1073 = vmatmul.bf16.gmra.mxu0 %v1063
    %v1074 = vpop.f32.mrf.mxu0
    %v1075 = vadd.f32 0.0, %v1074
    %v1076 = vpop.f32.mrf.mxu0
    %1077 = vdwg.mxu0
    %1078 = vmatpush.bf16.msra.mxu0 0
    %1079 = vmatpush.bf16.msra.mxu0 0
    %1080 = vmatpush.bf16.msra.mxu0 0
    %1081 = vmatpush.bf16.msra.mxu0 0
    %1082 = vmatpush.bf16.msra.mxu0 %v276
    %1083 = vmatpush.bf16.msra.mxu0 %v274
    %1084 = vmatpush.bf16.msra.mxu0 %v272
    %1085 = vmatpush.bf16.msra.mxu0 %v270
    %1086 = vmatmul.bf16.gmra.mxu0 %v1063
    %v1087 = vpop.f32.mrf.mxu0
    %v1088 = vadd.f32 0.0, %v1087
    %v1089 = vpop.f32.mrf.mxu0
    %1090 = vdwg.mxu0
    %v1091 = vadd.f32 %v1056, %v1075
    %v1092 = vadd.f32 %v1057, %v1088
    %v1093 = vxor.u32 %v1091, 2147483648
    %v1094 = vxor.u32 %v1092, 2147483648
    %v1095 = vmul.f32 %v1093, 1.442695
    %v1096 = vpow.pop %v1095
    %v1097 = vmul.f32 %v1094, 1.442695
    %v1098 = vpow.pop %v1097
    %v1099 = vadd.f32 %v1096, 1.0
    %v1100 = vadd.f32 %v1098, 1.0
    %v1101 = vrcp.pop %v1099
    %v1102 = vmul.f32 %v1099, %v1101
    %v1103 = vsub.f32 1.0, %v1102
    %v1104 = vmul.f32 %v1101, %v1103
    %v1105 = vadd.f32 %v1101, %v1104
    %vm1106 = vweird.f32 %v1099
    %vm1107 = vweird.f32 %v1101
    %vm1108 = vmor %vm1106, %vm1107
    %v1109 = vsel %vm1108, %v1101, %v1105
    %v1110 = vand.u32 2147483647, %v1099
    %vm1111 = vcmp.eq.f32.partialorder %v1110, 8.507059e+37
    %v1112 = vand.u32 %v1099, 2147483648
    %v1113 = vor.u32 1.1754944e-38, %v1112
    %v1114 = vsel %vm1111, %v1113, %v1109
    %v1115 = vmul.f32 1.0, %v1114
    %v1116 = vrcp.pop %v1100
    %v1117 = vmul.f32 %v1100, %v1116
    %v1118 = vsub.f32 1.0, %v1117
    %v1119 = vmul.f32 %v1116, %v1118
    %v1120 = vadd.f32 %v1116, %v1119
    %vm1121 = vweird.f32 %v1100
    %vm1122 = vweird.f32 %v1116
    %vm1123 = vmor %vm1121, %vm1122
    %v1124 = vsel %vm1123, %v1116, %v1120
    %v1125 = vand.u32 2147483647, %v1100
    %vm1126 = vcmp.eq.f32.partialorder %v1125, 8.507059e+37
    %v1127 = vand.u32 %v1100, 2147483648
    %v1128 = vor.u32 1.1754944e-38, %v1127
    %v1129 = vsel %vm1126, %v1128, %v1124
    %v1130 = vmul.f32 1.0, %v1129
    %v1131 = vtanh.pop %v1092
    %v1132 = vmul.f32 %v1115, %v1028
    %v1133 = vmul.f32 %v1115, %v1131
    %1135 = vrot.lane.b32.xlu0 %v1133, 64
    %v1136 = vpop.permute.xlu0 %1135
    %v1138 = vadd.f32 %v1132, %v1136
    %v1139 = vtanh.pop %v1138
    %v1140 = vmul.f32 %v1130, %v1139
    %1142 = vrot.lane.b32.xlu0 %v1140, 64
    %v1143 = vpop.permute.xlu0 %1142
    %s1145 = scalar_lea.vmem [#allocation3], 14
    %1146 = vst.msk [vmem:[%s1145] sm:$0x3] %vm369, %v1143
    %1147 = vrot.lane.b32.xlu0 %v1140, 32
    %v1148 = vpop.permute.xlu0 %1147
    %1150 = vst.msk [vmem:[#allocation4] sm:$0x3] %vm369, %v1148
    %v1151 = vld [vmem:[#allocation8] sm:$0xff]
    %v1152 = vld [vmem:[#allocation8 + $0x8] sm:$0xff]
    %v1153 = vld [vmem:[#allocation8 + $0x10] sm:$0xff]
    %v1154 = vld [vmem:[#allocation8 + $0x18] sm:$0xff]
    %v1155 = vld [vmem:[#allocation8 + $0x20] sm:$0xff]
    %v1156 = vld [vmem:[#allocation8 + $0x28] sm:$0xff]
    %v1157 = vld [vmem:[#allocation8 + $0x30] sm:$0xff]
    %v1158 = vld [vmem:[#allocation8 + $0x38] sm:$0xff]
    %v1159 = vld [vmem:[#allocation3] sm:$0x3]
    %v1160 = vld [vmem:[#allocation3 + $0x2] sm:$0x3]
    %v1161 = vld [vmem:[#allocation3 + $0x4] sm:$0x3]
    %v1162 = vld [vmem:[#allocation3 + $0x6] sm:$0x3]
    %v1163 = vld [vmem:[#allocation3 + $0x8] sm:$0x3]
    %v1164 = vld [vmem:[#allocation3 + $0xa] sm:$0x3]
    %v1165 = vld [vmem:[#allocation3 + $0xc] sm:$0x3]
    %v1166 = vld [vmem:[#allocation3 + $0xe] sm:$0x3]
    %1175 = vst [vmem:[#allocation1] ss:$4 sm:$0xff] %v1159
    %s1176 = scalar_lea.vmem [#allocation1], 1
    %1177 = vst [vmem:[%s1176] ss:$4 sm:$0xff] %v1160
    %s1178 = scalar_lea.vmem [#allocation1], 2
    %1179 = vst [vmem:[%s1178] ss:$4 sm:$0xff] %v1161
    %s1180 = scalar_lea.vmem [#allocation1], 3
    %1181 = vst [vmem:[%s1180] ss:$4 sm:$0xff] %v1162
    %s1182 = scalar_lea.vmem [#allocation1], 32
    %1183 = vst [vmem:[%s1182] ss:$4 sm:$0xff] %v1163
    %s1184 = scalar_lea.vmem [#allocation1], 33
    %1185 = vst [vmem:[%s1184] ss:$4 sm:$0xff] %v1164
    %s1186 = scalar_lea.vmem [#allocation1], 34
    %1187 = vst [vmem:[%s1186] ss:$4 sm:$0xff] %v1165
    %s1188 = scalar_lea.vmem [#allocation1], 35
    %1189 = vst [vmem:[%s1188] ss:$4 sm:$0xff] %v1166
    %v1190 = vld.sshfl [vmem:[#allocation1] sm:$0xff pattern:$0x73625140]
    %v1191 = vld.sshfl [vmem:[#allocation1 + $0x20] sm:$0xff pattern:$0x73625140]
    %v1194 = vpack.c.bf16 %v1191, %v1190
    %v1195 = vld [vmem:[#allocation4] sm:$0x3]
    %v1196 = vld [vmem:[#allocation4 + $0x2] sm:$0x3]
    %v1197 = vld [vmem:[#allocation4 + $0x4] sm:$0x3]
    %v1198 = vld [vmem:[#allocation4 + $0x6] sm:$0x3]
    %v1199 = vld [vmem:[#allocation4 + $0x8] sm:$0x3]
    %v1200 = vld [vmem:[#allocation4 + $0xa] sm:$0x3]
    %v1201 = vld [vmem:[#allocation4 + $0xc] sm:$0x3]
    %v1202 = vld [vmem:[#allocation4 + $0xe] sm:$0x3]
    %1211 = vst [vmem:[#allocation1] ss:$4 sm:$0xff] %v1195
    %s1212 = scalar_lea.vmem [#allocation1], 1
    %1213 = vst [vmem:[%s1212] ss:$4 sm:$0xff] %v1196
    %s1214 = scalar_lea.vmem [#allocation1], 2
    %1215 = vst [vmem:[%s1214] ss:$4 sm:$0xff] %v1197
    %s1216 = scalar_lea.vmem [#allocation1], 3
    %1217 = vst [vmem:[%s1216] ss:$4 sm:$0xff] %v1198
    %s1218 = scalar_lea.vmem [#allocation1], 32
    %1219 = vst [vmem:[%s1218] ss:$4 sm:$0xff] %v1199
    %s1220 = scalar_lea.vmem [#allocation1], 33
    %1221 = vst [vmem:[%s1220] ss:$4 sm:$0xff] %v1200
    %s1222 = scalar_lea.vmem [#allocation1], 34
    %1223 = vst [vmem:[%s1222] ss:$4 sm:$0xff] %v1201
    %s1224 = scalar_lea.vmem [#allocation1], 35
    %1225 = vst [vmem:[%s1224] ss:$4 sm:$0xff] %v1202
    %v1226 = vld.sshfl [vmem:[#allocation1] sm:$0xff pattern:$0x73625140]
    %v1227 = vld.sshfl [vmem:[#allocation1 + $0x20] sm:$0xff pattern:$0x73625140]
    %v1230 = vpack.c.bf16 %v1227, %v1226
    %v1235 = vunpack.c.l.b16 %v1155
    %v1236 = vunpack.c.h.b16 %v1155
    %v1237 = vunpack.c.l.b16 %v1156
    %v1238 = vunpack.c.h.b16 %v1156
    %v1239 = vunpack.c.l.b16 %v1157
    %v1240 = vunpack.c.h.b16 %v1157
    %v1241 = vunpack.c.l.b16 %v1158
    %v1242 = vunpack.c.h.b16 %v1158
    %v1243 = vpack.c.b16 %v1237, %v1235
    %v1244 = vpack.c.b16 %v1238, %v1236
    %v1245 = vpack.c.b16 %v1241, %v1239
    %v1246 = vpack.c.b16 %v1242, %v1240
    %vm1251 = vcmask 261120
    %v1253 = vsel %vm1251, %v1230, 0
    %1255 = vmatpush.bf16.msra.mxu0 0
    %1256 = vmatpush.bf16.msra.mxu0 0
    %1257 = vmatpush.bf16.msra.mxu0 0
    %1258 = vmatpush.bf16.msra.mxu0 0
    %1259 = vmatpush.bf16.msra.mxu0 0
    %1260 = vmatpush.bf16.msra.mxu0 0
    %1261 = vmatpush.bf16.msra.mxu0 %v1245
    %1262 = vmatpush.bf16.msra.mxu0 %v1243
    %1263 = vmatmul.bf16.gmra.mxu0 %v1253
    %v1264 = vpop.f32.mrf.mxu0
    %v1265 = vadd.f32 0.0, %v1264
    %v1266 = vpop.f32.mrf.mxu0
    %v1267 = vadd.f32 0.0, %v1266
    %1268 = vdwg.mxu0
    %1269 = vmatpush.bf16.msra.mxu0 0
    %1270 = vmatpush.bf16.msra.mxu0 0
    %1271 = vmatpush.bf16.msra.mxu0 0
    %1272 = vmatpush.bf16.msra.mxu0 0
    %1273 = vmatpush.bf16.msra.mxu0 0
    %1274 = vmatpush.bf16.msra.mxu0 0
    %1275 = vmatpush.bf16.msra.mxu0 %v1246
    %1276 = vmatpush.bf16.msra.mxu0 %v1244
    %1277 = vmatmul.bf16.gmra.mxu0 %v1253
    %v1278 = vpop.f32.mrf.mxu0
    %v1279 = vadd.f32 0.0, %v1278
    %v1280 = vpop.f32.mrf.mxu0
    %v1281 = vadd.f32 0.0, %v1280
    %1282 = vdwg.mxu0
    %v1287 = vunpack.c.l.b16 %v1151
    %v1288 = vunpack.c.h.b16 %v1151
    %v1289 = vunpack.c.l.b16 %v1152
    %v1290 = vunpack.c.h.b16 %v1152
    %v1291 = vunpack.c.l.b16 %v1153
    %v1292 = vunpack.c.h.b16 %v1153
    %v1293 = vunpack.c.l.b16 %v1154
    %v1294 = vunpack.c.h.b16 %v1154
    %v1295 = vpack.c.b16 %v1289, %v1287
    %v1296 = vpack.c.b16 %v1290, %v1288
    %v1297 = vpack.c.b16 %v1293, %v1291
    %v1298 = vpack.c.b16 %v1294, %v1292
    %v1304 = vsel %vm1251, %v1194, 0
    %1306 = vmatpush.bf16.msra.mxu0 0
    %1307 = vmatpush.bf16.msra.mxu0 0
    %1308 = vmatpush.bf16.msra.mxu0 0
    %1309 = vmatpush.bf16.msra.mxu0 0
    %1310 = vmatpush.bf16.msra.mxu0 0
    %1311 = vmatpush.bf16.msra.mxu0 0
    %1312 = vmatpush.bf16.msra.mxu0 %v1297
    %1313 = vmatpush.bf16.msra.mxu0 %v1295
    %1314 = vmatmul.bf16.gmra.mxu0 %v1304
    %v1315 = vpop.f32.mrf.mxu0
    %v1316 = vadd.f32 %v1265, %v1315
    %v1317 = vpop.f32.mrf.mxu0
    %v1318 = vadd.f32 %v1267, %v1317
    %1319 = vdwg.mxu0
    %1320 = vmatpush.bf16.msra.mxu0 0
    %1321 = vmatpush.bf16.msra.mxu0 0
    %1322 = vmatpush.bf16.msra.mxu0 0
    %1323 = vmatpush.bf16.msra.mxu0 0
    %1324 = vmatpush.bf16.msra.mxu0 0
    %1325 = vmatpush.bf16.msra.mxu0 0
    %1326 = vmatpush.bf16.msra.mxu0 %v1298
    %1327 = vmatpush.bf16.msra.mxu0 %v1296
    %1328 = vmatmul.bf16.gmra.mxu0 %v1304
    %v1329 = vpop.f32.mrf.mxu0
    %v1330 = vadd.f32 %v1279, %v1329
    %v1331 = vpop.f32.mrf.mxu0
    %v1332 = vadd.f32 %v1281, %v1331
    %1333 = vdwg.mxu0
    %v1334 = vld [vmem:[%s7] sm:$0x3]
    %v1336 = vperm.slane %v1334, 0
    %v1337 = vperm.slane %v1334, 1
    %v1340 = vadd.f32 %v1316, %v1336
    %v1341 = vadd.f32 %v1330, %v1337
    %v1342 = vadd.f32 %v1318, %v1336
    %v1343 = vadd.f32 %v1332, %v1337
    %v1348 = vrot.slane %v1341, 6
    %v1349 = vrot.slane %v1343, 6
    %v1350 = vsel %vm181, %v1340, %v1348
    %v1351 = vsel %vm183, %v1340, %v1348
    %v1352 = vrot.slane %v1351, 2
    %v1353 = vsel %vm186, %v1340, %v1348
    %v1354 = vrot.slane %v1353, 4
    %v1355 = vsel %vm189, %v1348, %v1340
    %v1356 = vrot.slane %v1355, 6
    %v1357 = vsel %vm181, %v1342, %v1349
    %v1358 = vsel %vm183, %v1342, %v1349
    %v1359 = vrot.slane %v1358, 2
    %v1360 = vsel %vm186, %v1342, %v1349
    %v1361 = vrot.slane %v1360, 4
    %v1362 = vsel %vm189, %v1349, %v1342
    %v1363 = vrot.slane %v1362, 6
    %1372 = vst [vmem:[#allocation2] sm:$0xf] %v1350
    %1373 = vst [vmem:[#allocation2 + $0x4] sm:$0xf] %v1352
    %1374 = vst [vmem:[#allocation2 + $0x8] sm:$0xf] %v1354
    %1375 = vst [vmem:[#allocation2 + $0xc] sm:$0xf] %v1356
    %1376 = vst [vmem:[#allocation2 + $0x10] sm:$0xf] %v1357
    %1377 = vst [vmem:[#allocation2 + $0x14] sm:$0xf] %v1359
    %1378 = vst [vmem:[#allocation2 + $0x18] sm:$0xf] %v1361
    %1379 = vst [vmem:[#allocation2 + $0x1c] sm:$0xf] %v1363
    %v1380 = vld [vmem:[#allocation10] sm:$0xff]
    %v1381 = vld [vmem:[#allocation10 + $0x8] sm:$0xff]
    %v1382 = vld [vmem:[#allocation10 + $0x10] sm:$0xff]
    %v1383 = vld [vmem:[#allocation10 + $0x18] sm:$0xff]
    %v1384 = vld [vmem:[#allocation10 + $0x20] sm:$0xff]
    %v1385 = vld [vmem:[#allocation10 + $0x28] sm:$0xff]
    %v1386 = vld [vmem:[#allocation10 + $0x30] sm:$0xff]
    %v1387 = vld [vmem:[#allocation10 + $0x38] sm:$0xff]
    %v1388 = vld [vmem:[#allocation2] sm:$0xf]
    %v1389 = vld [vmem:[%s224] sm:$0xf]
    %1391 = vst [vmem:[#allocation1] ss:$4 sm:$0xff] %v1388
    %v1392 = vld.sshfl [vmem:[#allocation1] sm:$0xff pattern:$0x73625140]
    %v1393 = vld.sshfl [vmem:[#allocation1 + $0x8] sm:$0xff pattern:$0x73625140]
    %1397 = vst [vmem:[#allocation1] ss:$4 sm:$0xff] %v1389
    %v1398 = vld.sshfl [vmem:[#allocation1] sm:$0xff pattern:$0x73625140]
    %v1399 = vld.sshfl [vmem:[#allocation1 + $0x8] sm:$0xff pattern:$0x73625140]
    %v1402 = vsel %vm229, %v1392, %v1398
    %v1403 = vsel %vm230, %v1393, %v1399
    %v1412 = vunpack.c.l.b16 %v1380
    %v1413 = vunpack.c.h.b16 %v1380
    %v1414 = vunpack.c.l.b16 %v1381
    %v1415 = vunpack.c.h.b16 %v1381
    %v1416 = vunpack.c.l.b16 %v1382
    %v1417 = vunpack.c.h.b16 %v1382
    %v1418 = vunpack.c.l.b16 %v1383
    %v1419 = vunpack.c.h.b16 %v1383
    %v1420 = vunpack.c.l.b16 %v1384
    %v1421 = vunpack.c.h.b16 %v1384
    %v1422 = vunpack.c.l.b16 %v1385
    %v1423 = vunpack.c.h.b16 %v1385
    %v1424 = vunpack.c.l.b16 %v1386
    %v1425 = vunpack.c.h.b16 %v1386
    %v1426 = vunpack.c.l.b16 %v1387
    %v1427 = vunpack.c.h.b16 %v1387
    %v1428 = vpack.c.b16 %v1414, %v1412
    %v1429 = vpack.c.b16 %v1415, %v1413
    %v1430 = vpack.c.b16 %v1418, %v1416
    %v1431 = vpack.c.b16 %v1419, %v1417
    %v1432 = vpack.c.b16 %v1422, %v1420
    %v1433 = vpack.c.b16 %v1423, %v1421
    %v1434 = vpack.c.b16 %v1426, %v1424
    %v1435 = vpack.c.b16 %v1427, %v1425
    %1444 = vmatpush.bf16.msra.mxu0 0
    %1445 = vmatpush.bf16.msra.mxu0 0
    %1446 = vmatpush.bf16.msra.mxu0 0
    %1447 = vmatpush.bf16.msra.mxu0 0
    %1448 = vmatpush.bf16.msra.mxu0 %v1434
    %1449 = vmatpush.bf16.msra.mxu0 %v1432
    %1450 = vmatpush.bf16.msra.mxu0 %v1430
    %1451 = vmatpush.bf16.msra.mxu0 %v1428
    %1452 = vmatmul.bf16.gmra.mxu0 %v287
    %v1453 = vpop.f32.mrf.mxu0
    %v1454 = vadd.f32 0.0, %v1453
    %v1455 = vpop.f32.mrf.mxu0
    %1456 = vdwg.mxu0
    %1457 = vmatpush.bf16.msra.mxu0 0
    %1458 = vmatpush.bf16.msra.mxu0 0
    %1459 = vmatpush.bf16.msra.mxu0 0
    %1460 = vmatpush.bf16.msra.mxu0 0
    %1461 = vmatpush.bf16.msra.mxu0 %v1435
    %1462 = vmatpush.bf16.msra.mxu0 %v1433
    %1463 = vmatpush.bf16.msra.mxu0 %v1431
    %1464 = vmatpush.bf16.msra.mxu0 %v1429
    %1465 = vmatmul.bf16.gmra.mxu0 %v287
    %v1466 = vpop.f32.mrf.mxu0
    %v1467 = vadd.f32 0.0, %v1466
    %v1468 = vpop.f32.mrf.mxu0
    %1469 = vdwg.mxu0
    %v1470 = vadd.f32 %v1402, %v1454
    %v1471 = vadd.f32 %v1403, %v1467
    %v1472 = vxor.u32 %v1470, 2147483648
    %v1473 = vxor.u32 %v1471, 2147483648
    %v1474 = vmul.f32 %v1472, 1.442695
    %v1475 = vpow.pop %v1474
    %v1476 = vmul.f32 %v1473, 1.442695
    %v1477 = vpow.pop %v1476
    %v1478 = vadd.f32 %v1475, 1.0
    %v1479 = vadd.f32 %v1477, 1.0
    %v1480 = vrcp.pop %v1478
    %v1481 = vmul.f32 %v1478, %v1480
    %v1482 = vsub.f32 1.0, %v1481
    %v1483 = vmul.f32 %v1480, %v1482
    %v1484 = vadd.f32 %v1480, %v1483
    %vm1485 = vweird.f32 %v1478
    %vm1486 = vweird.f32 %v1480
    %vm1487 = vmor %vm1485, %vm1486
    %v1488 = vsel %vm1487, %v1480, %v1484
    %v1489 = vand.u32 2147483647, %v1478
    %vm1490 = vcmp.eq.f32.partialorder %v1489, 8.507059e+37
    %v1491 = vand.u32 %v1478, 2147483648
    %v1492 = vor.u32 1.1754944e-38, %v1491
    %v1493 = vsel %vm1490, %v1492, %v1488
    %v1494 = vmul.f32 1.0, %v1493
    %v1495 = vrcp.pop %v1479
    %v1496 = vmul.f32 %v1479, %v1495
    %v1497 = vsub.f32 1.0, %v1496
    %v1498 = vmul.f32 %v1495, %v1497
    %v1499 = vadd.f32 %v1495, %v1498
    %vm1500 = vweird.f32 %v1479
    %vm1501 = vweird.f32 %v1495
    %vm1502 = vmor %vm1500, %vm1501
    %v1503 = vsel %vm1502, %v1495, %v1499
    %v1504 = vand.u32 2147483647, %v1479
    %vm1505 = vcmp.eq.f32.partialorder %v1504, 8.507059e+37
    %v1506 = vand.u32 %v1479, 2147483648
    %v1507 = vor.u32 1.1754944e-38, %v1506
    %v1508 = vsel %vm1505, %v1507, %v1503
    %v1509 = vmul.f32 1.0, %v1508
    %v1510 = vtanh.pop %v1471
    %v1511 = vmul.f32 %v1494, 0.0
    %v1512 = vmul.f32 %v1494, %v1510
    %1514 = vrot.lane.b32.xlu0 %v1512, 64
    %v1515 = vpop.permute.xlu0 %1514
    %v1517 = vadd.f32 %v1511, %v1515
    %v1518 = vtanh.pop %v1517
    %v1519 = vmul.f32 %v1509, %v1518
    %v1520 = vmax.f32 %v1519, 0.0
    %v1521 = vld [vmem:[%s376] sm:$0xf]
    %v1522 = vld [vmem:[%s378] sm:$0xf]
    %1524 = vst [vmem:[#allocation1] ss:$4 sm:$0xff] %v1521
    %v1525 = vld.sshfl [vmem:[#allocation1] sm:$0xff pattern:$0x73625140]
    %v1526 = vld.sshfl [vmem:[#allocation1 + $0x8] sm:$0xff pattern:$0x73625140]
    %1530 = vst [vmem:[#allocation1] ss:$4 sm:$0xff] %v1522
    %v1531 = vld.sshfl [vmem:[#allocation1] sm:$0xff pattern:$0x73625140]
    %v1532 = vld.sshfl [vmem:[#allocation1 + $0x8] sm:$0xff pattern:$0x73625140]
    %v1535 = vsel %vm229, %v1525, %v1531
    %v1536 = vsel %vm230, %v1526, %v1532
    %v1537 = vpack.c.bf16 %v1519, %v1519
    %1539 = vrot.lane.b32.xlu0 %v1537, 64
    %v1540 = vpop.permute.xlu0 %1539
    %v1542 = vsel %vm285, %v1540, 0
    %1544 = vmatpush.bf16.msra.mxu0 0
    %1545 = vmatpush.bf16.msra.mxu0 0
    %1546 = vmatpush.bf16.msra.mxu0 0
    %1547 = vmatpush.bf16.msra.mxu0 0
    %1548 = vmatpush.bf16.msra.mxu0 %v1434
    %1549 = vmatpush.bf16.msra.mxu0 %v1432
    %1550 = vmatpush.bf16.msra.mxu0 %v1430
    %1551 = vmatpush.bf16.msra.mxu0 %v1428
    %1552 = vmatmul.bf16.gmra.mxu0 %v1542
    %v1553 = vpop.f32.mrf.mxu0
    %v1554 = vadd.f32 0.0, %v1553
    %v1555 = vpop.f32.mrf.mxu0
    %1556 = vdwg.mxu0
    %1557 = vmatpush.bf16.msra.mxu0 0
    %1558 = vmatpush.bf16.msra.mxu0 0
    %1559 = vmatpush.bf16.msra.mxu0 0
    %1560 = vmatpush.bf16.msra.mxu0 0
    %1561 = vmatpush.bf16.msra.mxu0 %v1435
    %1562 = vmatpush.bf16.msra.mxu0 %v1433
    %1563 = vmatpush.bf16.msra.mxu0 %v1431
    %1564 = vmatpush.bf16.msra.mxu0 %v1429
    %1565 = vmatmul.bf16.gmra.mxu0 %v1542
    %v1566 = vpop.f32.mrf.mxu0
    %v1567 = vadd.f32 0.0, %v1566
    %v1568 = vpop.f32.mrf.mxu0
    %1569 = vdwg.mxu0
    %v1570 = vadd.f32 %v1535, %v1554
    %v1571 = vadd.f32 %v1536, %v1567
    %v1572 = vxor.u32 %v1570, 2147483648
    %v1573 = vxor.u32 %v1571, 2147483648
    %v1574 = vmul.f32 %v1572, 1.442695
    %v1575 = vpow.pop %v1574
    %v1576 = vmul.f32 %v1573, 1.442695
    %v1577 = vpow.pop %v1576
    %v1578 = vadd.f32 %v1575, 1.0
    %v1579 = vadd.f32 %v1577, 1.0
    %v1580 = vrcp.pop %v1578
    %v1581 = vmul.f32 %v1578, %v1580
    %v1582 = vsub.f32 1.0, %v1581
    %v1583 = vmul.f32 %v1580, %v1582
    %v1584 = vadd.f32 %v1580, %v1583
    %vm1585 = vweird.f32 %v1578
    %vm1586 = vweird.f32 %v1580
    %vm1587 = vmor %vm1585, %vm1586
    %v1588 = vsel %vm1587, %v1580, %v1584
    %v1589 = vand.u32 2147483647, %v1578
    %vm1590 = vcmp.eq.f32.partialorder %v1589, 8.507059e+37
    %v1591 = vand.u32 %v1578, 2147483648
    %v1592 = vor.u32 1.1754944e-38, %v1591
    %v1593 = vsel %vm1590, %v1592, %v1588
    %v1594 = vmul.f32 1.0, %v1593
    %v1595 = vrcp.pop %v1579
    %v1596 = vmul.f32 %v1579, %v1595
    %v1597 = vsub.f32 1.0, %v1596
    %v1598 = vmul.f32 %v1595, %v1597
    %v1599 = vadd.f32 %v1595, %v1598
    %vm1600 = vweird.f32 %v1579
    %vm1601 = vweird.f32 %v1595
    %vm1602 = vmor %vm1600, %vm1601
    %v1603 = vsel %vm1602, %v1595, %v1599
    %v1604 = vand.u32 2147483647, %v1579
    %vm1605 = vcmp.eq.f32.partialorder %v1604, 8.507059e+37
    %v1606 = vand.u32 %v1579, 2147483648
    %v1607 = vor.u32 1.1754944e-38, %v1606
    %v1608 = vsel %vm1605, %v1607, %v1603
    %v1609 = vmul.f32 1.0, %v1608
    %v1610 = vtanh.pop %v1571
    %v1611 = vmul.f32 %v1594, %v1517
    %v1612 = vmul.f32 %v1594, %v1610
    %1614 = vrot.lane.b32.xlu0 %v1612, 64
    %v1615 = vpop.permute.xlu0 %1614
    %v1617 = vadd.f32 %v1611, %v1615
    %v1618 = vtanh.pop %v1617
    %v1619 = vmul.f32 %v1609, %v1618
    %v1620 = vmax.f32 %v1520, %v1619
    %v1621 = vld [vmem:[%s488] sm:$0xf]
    %v1622 = vld [vmem:[%s490] sm:$0xf]
    %1624 = vst [vmem:[#allocation1] ss:$4 sm:$0xff] %v1621
    %v1625 = vld.sshfl [vmem:[#allocation1] sm:$0xff pattern:$0x73625140]
    %v1626 = vld.sshfl [vmem:[#allocation1 + $0x8] sm:$0xff pattern:$0x73625140]
    %1630 = vst [vmem:[#allocation1] ss:$4 sm:$0xff] %v1622
    %v1631 = vld.sshfl [vmem:[#allocation1] sm:$0xff pattern:$0x73625140]
    %v1632 = vld.sshfl [vmem:[#allocation1 + $0x8] sm:$0xff pattern:$0x73625140]
    %v1635 = vsel %vm229, %v1625, %v1631
    %v1636 = vsel %vm230, %v1626, %v1632
    %v1637 = vpack.c.bf16 %v1619, %v1619
    %1639 = vrot.lane.b32.xlu0 %v1637, 64
    %v1640 = vpop.permute.xlu0 %1639
    %v1642 = vsel %vm285, %v1640, 0
    %1644 = vmatpush.bf16.msra.mxu0 0
    %1645 = vmatpush.bf16.msra.mxu0 0
    %1646 = vmatpush.bf16.msra.mxu0 0
    %1647 = vmatpush.bf16.msra.mxu0 0
    %1648 = vmatpush.bf16.msra.mxu0 %v1434
    %1649 = vmatpush.bf16.msra.mxu0 %v1432
    %1650 = vmatpush.bf16.msra.mxu0 %v1430
    %1651 = vmatpush.bf16.msra.mxu0 %v1428
    %1652 = vmatmul.bf16.gmra.mxu0 %v1642
    %v1653 = vpop.f32.mrf.mxu0
    %v1654 = vadd.f32 0.0, %v1653
    %v1655 = vpop.f32.mrf.mxu0
    %1656 = vdwg.mxu0
    %1657 = vmatpush.bf16.msra.mxu0 0
    %1658 = vmatpush.bf16.msra.mxu0 0
    %1659 = vmatpush.bf16.msra.mxu0 0
    %1660 = vmatpush.bf16.msra.mxu0 0
    %1661 = vmatpush.bf16.msra.mxu0 %v1435
    %1662 = vmatpush.bf16.msra.mxu0 %v1433
    %1663 = vmatpush.bf16.msra.mxu0 %v1431
    %1664 = vmatpush.bf16.msra.mxu0 %v1429
    %1665 = vmatmul.bf16.gmra.mxu0 %v1642
    %v1666 = vpop.f32.mrf.mxu0
    %v1667 = vadd.f32 0.0, %v1666
    %v1668 = vpop.f32.mrf.mxu0
    %1669 = vdwg.mxu0
    %v1670 = vadd.f32 %v1635, %v1654
    %v1671 = vadd.f32 %v1636, %v1667
    %v1672 = vxor.u32 %v1670, 2147483648
    %v1673 = vxor.u32 %v1671, 2147483648
    %v1674 = vmul.f32 %v1672, 1.442695
    %v1675 = vpow.pop %v1674
    %v1676 = vmul.f32 %v1673, 1.442695
    %v1677 = vpow.pop %v1676
    %v1678 = vadd.f32 %v1675, 1.0
    %v1679 = vadd.f32 %v1677, 1.0
    %v1680 = vrcp.pop %v1678
    %v1681 = vmul.f32 %v1678, %v1680
    %v1682 = vsub.f32 1.0, %v1681
    %v1683 = vmul.f32 %v1680, %v1682
    %v1684 = vadd.f32 %v1680, %v1683
    %vm1685 = vweird.f32 %v1678
    %vm1686 = vweird.f32 %v1680
    %vm1687 = vmor %vm1685, %vm1686
    %v1688 = vsel %vm1687, %v1680, %v1684
    %v1689 = vand.u32 2147483647, %v1678
    %vm1690 = vcmp.eq.f32.partialorder %v1689, 8.507059e+37
    %v1691 = vand.u32 %v1678, 2147483648
    %v1692 = vor.u32 1.1754944e-38, %v1691
    %v1693 = vsel %vm1690, %v1692, %v1688
    %v1694 = vmul.f32 1.0, %v1693
    %v1695 = vrcp.pop %v1679
    %v1696 = vmul.f32 %v1679, %v1695
    %v1697 = vsub.f32 1.0, %v1696
    %v1698 = vmul.f32 %v1695, %v1697
    %v1699 = vadd.f32 %v1695, %v1698
    %vm1700 = vweird.f32 %v1679
    %vm1701 = vweird.f32 %v1695
    %vm1702 = vmor %vm1700, %vm1701
    %v1703 = vsel %vm1702, %v1695, %v1699
    %v1704 = vand.u32 2147483647, %v1679
    %vm1705 = vcmp.eq.f32.partialorder %v1704, 8.507059e+37
    %v1706 = vand.u32 %v1679, 2147483648
    %v1707 = vor.u32 1.1754944e-38, %v1706
    %v1708 = vsel %vm1705, %v1707, %v1703
    %v1709 = vmul.f32 1.0, %v1708
    %v1710 = vtanh.pop %v1671
    %v1711 = vmul.f32 %v1694, %v1617
    %v1712 = vmul.f32 %v1694, %v1710
    %1714 = vrot.lane.b32.xlu0 %v1712, 64
    %v1715 = vpop.permute.xlu0 %1714
    %v1717 = vadd.f32 %v1711, %v1715
    %v1718 = vtanh.pop %v1717
    %v1719 = vmul.f32 %v1709, %v1718
    %v1720 = vmax.f32 %v1620, %v1719
    %v1721 = vld [vmem:[%s600] sm:$0xf]
    %v1722 = vld [vmem:[%s602] sm:$0xf]
    %1724 = vst [vmem:[#allocation1] ss:$4 sm:$0xff] %v1721
    %v1725 = vld.sshfl [vmem:[#allocation1] sm:$0xff pattern:$0x73625140]
    %v1726 = vld.sshfl [vmem:[#allocation1 + $0x8] sm:$0xff pattern:$0x73625140]
    %1730 = vst [vmem:[#allocation1] ss:$4 sm:$0xff] %v1722
    %v1731 = vld.sshfl [vmem:[#allocation1] sm:$0xff pattern:$0x73625140]
    %v1732 = vld.sshfl [vmem:[#allocation1 + $0x8] sm:$0xff pattern:$0x73625140]
    %v1735 = vsel %vm229, %v1725, %v1731
    %v1736 = vsel %vm230, %v1726, %v1732
    %v1737 = vpack.c.bf16 %v1719, %v1719
    %1739 = vrot.lane.b32.xlu0 %v1737, 64
    %v1740 = vpop.permute.xlu0 %1739
    %v1742 = vsel %vm285, %v1740, 0
    %1744 = vmatpush.bf16.msra.mxu0 0
    %1745 = vmatpush.bf16.msra.mxu0 0
    %1746 = vmatpush.bf16.msra.mxu0 0
    %1747 = vmatpush.bf16.msra.mxu0 0
    %1748 = vmatpush.bf16.msra.mxu0 %v1434
    %1749 = vmatpush.bf16.msra.mxu0 %v1432
    %1750 = vmatpush.bf16.msra.mxu0 %v1430
    %1751 = vmatpush.bf16.msra.mxu0 %v1428
    %1752 = vmatmul.bf16.gmra.mxu0 %v1742
    %v1753 = vpop.f32.mrf.mxu0
    %v1754 = vadd.f32 0.0, %v1753
    %v1755 = vpop.f32.mrf.mxu0
    %1756 = vdwg.mxu0
    %1757 = vmatpush.bf16.msra.mxu0 0
    %1758 = vmatpush.bf16.msra.mxu0 0
    %1759 = vmatpush.bf16.msra.mxu0 0
    %1760 = vmatpush.bf16.msra.mxu0 0
    %1761 = vmatpush.bf16.msra.mxu0 %v1435
    %1762 = vmatpush.bf16.msra.mxu0 %v1433
    %1763 = vmatpush.bf16.msra.mxu0 %v1431
    %1764 = vmatpush.bf16.msra.mxu0 %v1429
    %1765 = vmatmul.bf16.gmra.mxu0 %v1742
    %v1766 = vpop.f32.mrf.mxu0
    %v1767 = vadd.f32 0.0, %v1766
    %v1768 = vpop.f32.mrf.mxu0
    %1769 = vdwg.mxu0
    %v1770 = vadd.f32 %v1735, %v1754
    %v1771 = vadd.f32 %v1736, %v1767
    %v1772 = vxor.u32 %v1770, 2147483648
    %v1773 = vxor.u32 %v1771, 2147483648
    %v1774 = vmul.f32 %v1772, 1.442695
    %v1775 = vpow.pop %v1774
    %v1776 = vmul.f32 %v1773, 1.442695
    %v1777 = vpow.pop %v1776
    %v1778 = vadd.f32 %v1775, 1.0
    %v1779 = vadd.f32 %v1777, 1.0
    %v1780 = vrcp.pop %v1778
    %v1781 = vmul.f32 %v1778, %v1780
    %v1782 = vsub.f32 1.0, %v1781
    %v1783 = vmul.f32 %v1780, %v1782
    %v1784 = vadd.f32 %v1780, %v1783
    %vm1785 = vweird.f32 %v1778
    %vm1786 = vweird.f32 %v1780
    %vm1787 = vmor %vm1785, %vm1786
    %v1788 = vsel %vm1787, %v1780, %v1784
    %v1789 = vand.u32 2147483647, %v1778
    %vm1790 = vcmp.eq.f32.partialorder %v1789, 8.507059e+37
    %v1791 = vand.u32 %v1778, 2147483648
    %v1792 = vor.u32 1.1754944e-38, %v1791
    %v1793 = vsel %vm1790, %v1792, %v1788
    %v1794 = vmul.f32 1.0, %v1793
    %v1795 = vrcp.pop %v1779
    %v1796 = vmul.f32 %v1779, %v1795
    %v1797 = vsub.f32 1.0, %v1796
    %v1798 = vmul.f32 %v1795, %v1797
    %v1799 = vadd.f32 %v1795, %v1798
    %vm1800 = vweird.f32 %v1779
    %vm1801 = vweird.f32 %v1795
    %vm1802 = vmor %vm1800, %vm1801
    %v1803 = vsel %vm1802, %v1795, %v1799
    %v1804 = vand.u32 2147483647, %v1779
    %vm1805 = vcmp.eq.f32.partialorder %v1804, 8.507059e+37
    %v1806 = vand.u32 %v1779, 2147483648
    %v1807 = vor.u32 1.1754944e-38, %v1806
    %v1808 = vsel %vm1805, %v1807, %v1803
    %v1809 = vmul.f32 1.0, %v1808
    %v1810 = vtanh.pop %v1771
    %v1811 = vmul.f32 %v1794, %v1717
    %v1812 = vmul.f32 %v1794, %v1810
    %1814 = vrot.lane.b32.xlu0 %v1812, 64
    %v1815 = vpop.permute.xlu0 %1814
    %v1817 = vadd.f32 %v1811, %v1815
    %v1818 = vtanh.pop %v1817
    %v1819 = vmul.f32 %v1809, %v1818
    %v1820 = vmax.f32 %v1720, %v1819
    %1821 = vst [vmem:[#allocation1] ss:$4 sm:$0xff] %v1722
    %v1822 = vld.sshfl [vmem:[#allocation1] sm:$0xff pattern:$0x73625140]
    %v1823 = vld.sshfl [vmem:[#allocation1 + $0x8] sm:$0xff pattern:$0x73625140]
    %1826 = vst [vmem:[#allocation1] ss:$4 sm:$0xff] %v1721
    %v1827 = vld.sshfl [vmem:[#allocation1] sm:$0xff pattern:$0x73625140]
    %v1828 = vld.sshfl [vmem:[#allocation1 + $0x8] sm:$0xff pattern:$0x73625140]
    %v1831 = vsel %vm229, %v1822, %v1827
    %v1832 = vsel %vm230, %v1823, %v1828
    %v1833 = vpack.c.bf16 %v1819, %v1819
    %1835 = vrot.lane.b32.xlu0 %v1833, 64
    %v1836 = vpop.permute.xlu0 %1835
    %v1838 = vsel %vm285, %v1836, 0
    %1840 = vmatpush.bf16.msra.mxu0 0
    %1841 = vmatpush.bf16.msra.mxu0 0
    %1842 = vmatpush.bf16.msra.mxu0 0
    %1843 = vmatpush.bf16.msra.mxu0 0
    %1844 = vmatpush.bf16.msra.mxu0 %v1434
    %1845 = vmatpush.bf16.msra.mxu0 %v1432
    %1846 = vmatpush.bf16.msra.mxu0 %v1430
    %1847 = vmatpush.bf16.msra.mxu0 %v1428
    %1848 = vmatmul.bf16.gmra.mxu0 %v1838
    %v1849 = vpop.f32.mrf.mxu0
    %v1850 = vadd.f32 0.0, %v1849
    %v1851 = vpop.f32.mrf.mxu0
    %1852 = vdwg.mxu0
    %1853 = vmatpush.bf16.msra.mxu0 0
    %1854 = vmatpush.bf16.msra.mxu0 0
    %1855 = vmatpush.bf16.msra.mxu0 0
    %1856 = vmatpush.bf16.msra.mxu0 0
    %1857 = vmatpush.bf16.msra.mxu0 %v1435
    %1858 = vmatpush.bf16.msra.mxu0 %v1433
    %1859 = vmatpush.bf16.msra.mxu0 %v1431
    %1860 = vmatpush.bf16.msra.mxu0 %v1429
    %1861 = vmatmul.bf16.gmra.mxu0 %v1838
    %v1862 = vpop.f32.mrf.mxu0
    %v1863 = vadd.f32 0.0, %v1862
    %v1864 = vpop.f32.mrf.mxu0
    %1865 = vdwg.mxu0
    %v1866 = vadd.f32 %v1831, %v1850
    %v1867 = vadd.f32 %v1832, %v1863
    %v1868 = vxor.u32 %v1866, 2147483648
    %v1869 = vxor.u32 %v1867, 2147483648
    %v1870 = vmul.f32 %v1868, 1.442695
    %v1871 = vpow.pop %v1870
    %v1872 = vmul.f32 %v1869, 1.442695
    %v1873 = vpow.pop %v1872
    %v1874 = vadd.f32 %v1871, 1.0
    %v1875 = vadd.f32 %v1873, 1.0
    %v1876 = vrcp.pop %v1874
    %v1877 = vmul.f32 %v1874, %v1876
    %v1878 = vsub.f32 1.0, %v1877
    %v1879 = vmul.f32 %v1876, %v1878
    %v1880 = vadd.f32 %v1876, %v1879
    %vm1881 = vweird.f32 %v1874
    %vm1882 = vweird.f32 %v1876
    %vm1883 = vmor %vm1881, %vm1882
    %v1884 = vsel %vm1883, %v1876, %v1880
    %v1885 = vand.u32 2147483647, %v1874
    %vm1886 = vcmp.eq.f32.partialorder %v1885, 8.507059e+37
    %v1887 = vand.u32 %v1874, 2147483648
    %v1888 = vor.u32 1.1754944e-38, %v1887
    %v1889 = vsel %vm1886, %v1888, %v1884
    %v1890 = vmul.f32 1.0, %v1889
    %v1891 = vrcp.pop %v1875
    %v1892 = vmul.f32 %v1875, %v1891
    %v1893 = vsub.f32 1.0, %v1892
    %v1894 = vmul.f32 %v1891, %v1893
    %v1895 = vadd.f32 %v1891, %v1894
    %vm1896 = vweird.f32 %v1875
    %vm1897 = vweird.f32 %v1891
    %vm1898 = vmor %vm1896, %vm1897
    %v1899 = vsel %vm1898, %v1891, %v1895
    %v1900 = vand.u32 2147483647, %v1875
    %vm1901 = vcmp.eq.f32.partialorder %v1900, 8.507059e+37
    %v1902 = vand.u32 %v1875, 2147483648
    %v1903 = vor.u32 1.1754944e-38, %v1902
    %v1904 = vsel %vm1901, %v1903, %v1899
    %v1905 = vmul.f32 1.0, %v1904
    %v1906 = vtanh.pop %v1867
    %v1907 = vmul.f32 %v1890, %v1817
    %v1908 = vmul.f32 %v1890, %v1906
    %1910 = vrot.lane.b32.xlu0 %v1908, 64
    %v1911 = vpop.permute.xlu0 %1910
    %v1913 = vadd.f32 %v1907, %v1911
    %v1914 = vtanh.pop %v1913
    %v1915 = vmul.f32 %v1905, %v1914
    %v1916 = vmax.f32 %v1820, %v1915
    %1917 = vst [vmem:[#allocation1] ss:$4 sm:$0xff] %v1622
    %v1918 = vld.sshfl [vmem:[#allocation1] sm:$0xff pattern:$0x73625140]
    %v1919 = vld.sshfl [vmem:[#allocation1 + $0x8] sm:$0xff pattern:$0x73625140]
    %1922 = vst [vmem:[#allocation1] ss:$4 sm:$0xff] %v1621
    %v1923 = vld.sshfl [vmem:[#allocation1] sm:$0xff pattern:$0x73625140]
    %v1924 = vld.sshfl [vmem:[#allocation1 + $0x8] sm:$0xff pattern:$0x73625140]
    %v1927 = vsel %vm229, %v1918, %v1923
    %v1928 = vsel %vm230, %v1919, %v1924
    %v1929 = vpack.c.bf16 %v1915, %v1915
    %1931 = vrot.lane.b32.xlu0 %v1929, 64
    %v1932 = vpop.permute.xlu0 %1931
    %v1934 = vsel %vm285, %v1932, 0
    %1936 = vmatpush.bf16.msra.mxu0 0
    %1937 = vmatpush.bf16.msra.mxu0 0
    %1938 = vmatpush.bf16.msra.mxu0 0
    %1939 = vmatpush.bf16.msra.mxu0 0
    %1940 = vmatpush.bf16.msra.mxu0 %v1434
    %1941 = vmatpush.bf16.msra.mxu0 %v1432
    %1942 = vmatpush.bf16.msra.mxu0 %v1430
    %1943 = vmatpush.bf16.msra.mxu0 %v1428
    %1944 = vmatmul.bf16.gmra.mxu0 %v1934
    %v1945 = vpop.f32.mrf.mxu0
    %v1946 = vadd.f32 0.0, %v1945
    %v1947 = vpop.f32.mrf.mxu0
    %1948 = vdwg.mxu0
    %1949 = vmatpush.bf16.msra.mxu0 0
    %1950 = vmatpush.bf16.msra.mxu0 0
    %1951 = vmatpush.bf16.msra.mxu0 0
    %1952 = vmatpush.bf16.msra.mxu0 0
    %1953 = vmatpush.bf16.msra.mxu0 %v1435
    %1954 = vmatpush.bf16.msra.mxu0 %v1433
    %1955 = vmatpush.bf16.msra.mxu0 %v1431
    %1956 = vmatpush.bf16.msra.mxu0 %v1429
    %1957 = vmatmul.bf16.gmra.mxu0 %v1934
    %v1958 = vpop.f32.mrf.mxu0
    %v1959 = vadd.f32 0.0, %v1958
    %v1960 = vpop.f32.mrf.mxu0
    %1961 = vdwg.mxu0
    %v1962 = vadd.f32 %v1927, %v1946
    %v1963 = vadd.f32 %v1928, %v1959
    %v1964 = vxor.u32 %v1962, 2147483648
    %v1965 = vxor.u32 %v1963, 2147483648
    %v1966 = vmul.f32 %v1964, 1.442695
    %v1967 = vpow.pop %v1966
    %v1968 = vmul.f32 %v1965, 1.442695
    %v1969 = vpow.pop %v1968
    %v1970 = vadd.f32 %v1967, 1.0
    %v1971 = vadd.f32 %v1969, 1.0
    %v1972 = vrcp.pop %v1970
    %v1973 = vmul.f32 %v1970, %v1972
    %v1974 = vsub.f32 1.0, %v1973
    %v1975 = vmul.f32 %v1972, %v1974
    %v1976 = vadd.f32 %v1972, %v1975
    %vm1977 = vweird.f32 %v1970
    %vm1978 = vweird.f32 %v1972
    %vm1979 = vmor %vm1977, %vm1978
    %v1980 = vsel %vm1979, %v1972, %v1976
    %v1981 = vand.u32 2147483647, %v1970
    %vm1982 = vcmp.eq.f32.partialorder %v1981, 8.507059e+37
    %v1983 = vand.u32 %v1970, 2147483648
    %v1984 = vor.u32 1.1754944e-38, %v1983
    %v1985 = vsel %vm1982, %v1984, %v1980
    %v1986 = vmul.f32 1.0, %v1985
    %v1987 = vrcp.pop %v1971
    %v1988 = vmul.f32 %v1971, %v1987
    %v1989 = vsub.f32 1.0, %v1988
    %v1990 = vmul.f32 %v1987, %v1989
    %v1991 = vadd.f32 %v1987, %v1990
    %vm1992 = vweird.f32 %v1971
    %vm1993 = vweird.f32 %v1987
    %vm1994 = vmor %vm1992, %vm1993
    %v1995 = vsel %vm1994, %v1987, %v1991
    %v1996 = vand.u32 2147483647, %v1971
    %vm1997 = vcmp.eq.f32.partialorder %v1996, 8.507059e+37
    %v1998 = vand.u32 %v1971, 2147483648
    %v1999 = vor.u32 1.1754944e-38, %v1998
    %v2000 = vsel %vm1997, %v1999, %v1995
    %v2001 = vmul.f32 1.0, %v2000
    %v2002 = vtanh.pop %v1963
    %v2003 = vmul.f32 %v1986, %v1913
    %v2004 = vmul.f32 %v1986, %v2002
    %2006 = vrot.lane.b32.xlu0 %v2004, 64
    %v2007 = vpop.permute.xlu0 %2006
    %v2009 = vadd.f32 %v2003, %v2007
    %v2010 = vtanh.pop %v2009
    %v2011 = vmul.f32 %v2001, %v2010
    %v2012 = vmax.f32 %v1916, %v2011
    %2013 = vst [vmem:[#allocation1] ss:$4 sm:$0xff] %v1522
    %v2014 = vld.sshfl [vmem:[#allocation1] sm:$0xff pattern:$0x73625140]
    %v2015 = vld.sshfl [vmem:[#allocation1 + $0x8] sm:$0xff pattern:$0x73625140]
    %2018 = vst [vmem:[#allocation1] ss:$4 sm:$0xff] %v1521
    %v2019 = vld.sshfl [vmem:[#allocation1] sm:$0xff pattern:$0x73625140]
    %v2020 = vld.sshfl [vmem:[#allocation1 + $0x8] sm:$0xff pattern:$0x73625140]
    %v2023 = vsel %vm229, %v2014, %v2019
    %v2024 = vsel %vm230, %v2015, %v2020
    %v2025 = vpack.c.bf16 %v2011, %v2011
    %2027 = vrot.lane.b32.xlu0 %v2025, 64
    %v2028 = vpop.permute.xlu0 %2027
    %v2030 = vsel %vm285, %v2028, 0
    %2032 = vmatpush.bf16.msra.mxu0 0
    %2033 = vmatpush.bf16.msra.mxu0 0
    %2034 = vmatpush.bf16.msra.mxu0 0
    %2035 = vmatpush.bf16.msra.mxu0 0
    %2036 = vmatpush.bf16.msra.mxu0 %v1434
    %2037 = vmatpush.bf16.msra.mxu0 %v1432
    %2038 = vmatpush.bf16.msra.mxu0 %v1430
    %2039 = vmatpush.bf16.msra.mxu0 %v1428
    %2040 = vmatmul.bf16.gmra.mxu0 %v2030
    %v2041 = vpop.f32.mrf.mxu0
    %v2042 = vadd.f32 0.0, %v2041
    %v2043 = vpop.f32.mrf.mxu0
    %2044 = vdwg.mxu0
    %2045 = vmatpush.bf16.msra.mxu0 0
    %2046 = vmatpush.bf16.msra.mxu0 0
    %2047 = vmatpush.bf16.msra.mxu0 0
    %2048 = vmatpush.bf16.msra.mxu0 0
    %2049 = vmatpush.bf16.msra.mxu0 %v1435
    %2050 = vmatpush.bf16.msra.mxu0 %v1433
    %2051 = vmatpush.bf16.msra.mxu0 %v1431
    %2052 = vmatpush.bf16.msra.mxu0 %v1429
    %2053 = vmatmul.bf16.gmra.mxu0 %v2030
    %v2054 = vpop.f32.mrf.mxu0
    %v2055 = vadd.f32 0.0, %v2054
    %v2056 = vpop.f32.mrf.mxu0
    %2057 = vdwg.mxu0
    %v2058 = vadd.f32 %v2023, %v2042
    %v2059 = vadd.f32 %v2024, %v2055
    %v2060 = vxor.u32 %v2058, 2147483648
    %v2061 = vxor.u32 %v2059, 2147483648
    %v2062 = vmul.f32 %v2060, 1.442695
    %v2063 = vpow.pop %v2062
    %v2064 = vmul.f32 %v2061, 1.442695
    %v2065 = vpow.pop %v2064
    %v2066 = vadd.f32 %v2063, 1.0
    %v2067 = vadd.f32 %v2065, 1.0
    %v2068 = vrcp.pop %v2066
    %v2069 = vmul.f32 %v2066, %v2068
    %v2070 = vsub.f32 1.0, %v2069
    %v2071 = vmul.f32 %v2068, %v2070
    %v2072 = vadd.f32 %v2068, %v2071
    %vm2073 = vweird.f32 %v2066
    %vm2074 = vweird.f32 %v2068
    %vm2075 = vmor %vm2073, %vm2074
    %v2076 = vsel %vm2075, %v2068, %v2072
    %v2077 = vand.u32 2147483647, %v2066
    %vm2078 = vcmp.eq.f32.partialorder %v2077, 8.507059e+37
    %v2079 = vand.u32 %v2066, 2147483648
    %v2080 = vor.u32 1.1754944e-38, %v2079
    %v2081 = vsel %vm2078, %v2080, %v2076
    %v2082 = vmul.f32 1.0, %v2081
    %v2083 = vrcp.pop %v2067
    %v2084 = vmul.f32 %v2067, %v2083
    %v2085 = vsub.f32 1.0, %v2084
    %v2086 = vmul.f32 %v2083, %v2085
    %v2087 = vadd.f32 %v2083, %v2086
    %vm2088 = vweird.f32 %v2067
    %vm2089 = vweird.f32 %v2083
    %vm2090 = vmor %vm2088, %vm2089
    %v2091 = vsel %vm2090, %v2083, %v2087
    %v2092 = vand.u32 2147483647, %v2067
    %vm2093 = vcmp.eq.f32.partialorder %v2092, 8.507059e+37
    %v2094 = vand.u32 %v2067, 2147483648
    %v2095 = vor.u32 1.1754944e-38, %v2094
    %v2096 = vsel %vm2093, %v2095, %v2091
    %v2097 = vmul.f32 1.0, %v2096
    %v2098 = vtanh.pop %v2059
    %v2099 = vmul.f32 %v2082, %v2009
    %v2100 = vmul.f32 %v2082, %v2098
    %2102 = vrot.lane.b32.xlu0 %v2100, 64
    %v2103 = vpop.permute.xlu0 %2102
    %v2105 = vadd.f32 %v2099, %v2103
    %v2106 = vtanh.pop %v2105
    %v2107 = vmul.f32 %v2097, %v2106
    %v2108 = vmax.f32 %v2012, %v2107
    %2109 = vst [vmem:[#allocation1] ss:$4 sm:$0xff] %v1389
    %v2110 = vld.sshfl [vmem:[#allocation1] sm:$0xff pattern:$0x73625140]
    %v2111 = vld.sshfl [vmem:[#allocation1 + $0x8] sm:$0xff pattern:$0x73625140]
    %2114 = vst [vmem:[#allocation1] ss:$4 sm:$0xff] %v1388
    %v2115 = vld.sshfl [vmem:[#allocation1] sm:$0xff pattern:$0x73625140]
    %v2116 = vld.sshfl [vmem:[#allocation1 + $0x8] sm:$0xff pattern:$0x73625140]
    %v2119 = vsel %vm229, %v2110, %v2115
    %v2120 = vsel %vm230, %v2111, %v2116
    %v2121 = vpack.c.bf16 %v2107, %v2107
    %2123 = vrot.lane.b32.xlu0 %v2121, 64
    %v2124 = vpop.permute.xlu0 %2123
    %v2126 = vsel %vm285, %v2124, 0
    %2128 = vmatpush.bf16.msra.mxu0 0
    %2129 = vmatpush.bf16.msra.mxu0 0
    %2130 = vmatpush.bf16.msra.mxu0 0
    %2131 = vmatpush.bf16.msra.mxu0 0
    %2132 = vmatpush.bf16.msra.mxu0 %v1434
    %2133 = vmatpush.bf16.msra.mxu0 %v1432
    %2134 = vmatpush.bf16.msra.mxu0 %v1430
    %2135 = vmatpush.bf16.msra.mxu0 %v1428
    %2136 = vmatmul.bf16.gmra.mxu0 %v2126
    %v2137 = vpop.f32.mrf.mxu0
    %v2138 = vadd.f32 0.0, %v2137
    %v2139 = vpop.f32.mrf.mxu0
    %2140 = vdwg.mxu0
    %2141 = vmatpush.bf16.msra.mxu0 0
    %2142 = vmatpush.bf16.msra.mxu0 0
    %2143 = vmatpush.bf16.msra.mxu0 0
    %2144 = vmatpush.bf16.msra.mxu0 0
    %2145 = vmatpush.bf16.msra.mxu0 %v1435
    %2146 = vmatpush.bf16.msra.mxu0 %v1433
    %2147 = vmatpush.bf16.msra.mxu0 %v1431
    %2148 = vmatpush.bf16.msra.mxu0 %v1429
    %2149 = vmatmul.bf16.gmra.mxu0 %v2126
    %v2150 = vpop.f32.mrf.mxu0
    %v2151 = vadd.f32 0.0, %v2150
    %v2152 = vpop.f32.mrf.mxu0
    %2153 = vdwg.mxu0
    %v2154 = vadd.f32 %v2119, %v2138
    %v2155 = vadd.f32 %v2120, %v2151
    %v2156 = vxor.u32 %v2154, 2147483648
    %v2157 = vxor.u32 %v2155, 2147483648
    %v2158 = vmul.f32 %v2156, 1.442695
    %v2159 = vpow.pop %v2158
    %v2160 = vmul.f32 %v2157, 1.442695
    %v2161 = vpow.pop %v2160
    %v2162 = vadd.f32 %v2159, 1.0
    %v2163 = vadd.f32 %v2161, 1.0
    %v2164 = vrcp.pop %v2162
    %v2165 = vmul.f32 %v2162, %v2164
    %v2166 = vsub.f32 1.0, %v2165
    %v2167 = vmul.f32 %v2164, %v2166
    %v2168 = vadd.f32 %v2164, %v2167
    %vm2169 = vweird.f32 %v2162
    %vm2170 = vweird.f32 %v2164
    %vm2171 = vmor %vm2169, %vm2170
    %v2172 = vsel %vm2171, %v2164, %v2168
    %v2173 = vand.u32 2147483647, %v2162
    %vm2174 = vcmp.eq.f32.partialorder %v2173, 8.507059e+37
    %v2175 = vand.u32 %v2162, 2147483648
    %v2176 = vor.u32 1.1754944e-38, %v2175
    %v2177 = vsel %vm2174, %v2176, %v2172
    %v2178 = vmul.f32 1.0, %v2177
    %v2179 = vrcp.pop %v2163
    %v2180 = vmul.f32 %v2163, %v2179
    %v2181 = vsub.f32 1.0, %v2180
    %v2182 = vmul.f32 %v2179, %v2181
    %v2183 = vadd.f32 %v2179, %v2182
    %vm2184 = vweird.f32 %v2163
    %vm2185 = vweird.f32 %v2179
    %vm2186 = vmor %vm2184, %vm2185
    %v2187 = vsel %vm2186, %v2179, %v2183
    %v2188 = vand.u32 2147483647, %v2163
    %vm2189 = vcmp.eq.f32.partialorder %v2188, 8.507059e+37
    %v2190 = vand.u32 %v2163, 2147483648
    %v2191 = vor.u32 1.1754944e-38, %v2190
    %v2192 = vsel %vm2189, %v2191, %v2187
    %v2193 = vmul.f32 1.0, %v2192
    %v2194 = vtanh.pop %v2155
    %v2195 = vmul.f32 %v2178, %v2105
    %v2196 = vmul.f32 %v2178, %v2194
    %2198 = vrot.lane.b32.xlu0 %v2196, 64
    %v2199 = vpop.permute.xlu0 %2198
    %v2201 = vadd.f32 %v2195, %v2199
    %v2202 = vtanh.pop %v2201
    %v2203 = vmul.f32 %v2193, %v2202
    %v2204 = vmax.f32 %v2108, %v2203
    %v2205 = vld [vmem:[%s0] sm:$0x3]
    %v2206 = vld [vmem:[%s0 + $0x2] sm:$0x3]
    %v2207 = vld [vmem:[%s0 + $0x4] sm:$0x3]
    %v2208 = vld [vmem:[%s0 + $0x6] sm:$0x3]
    %v2209 = vld [vmem:[%s0 + $0x8] sm:$0x3]
    %v2210 = vld [vmem:[%s0 + $0xa] sm:$0x3]
    %v2211 = vld [vmem:[%s0 + $0xc] sm:$0x3]
    %v2212 = vld [vmem:[%s0 + $0xe] sm:$0x3]
    %vm2213 = vcmask 123904
    %v2214 = vsel %vm2213, %v2205, -inf
    %v2215 = vsel %vm2213, %v2206, -inf
    %v2216 = vsel %vm2213, %v2207, -inf
    %v2217 = vsel %vm2213, %v2208, -inf
    %v2218 = vsel %vm2213, %v2209, -inf
    %v2219 = vmax.f32 %v2214, %v2218
    %v2220 = vsel %vm2213, %v2210, -inf
    %v2221 = vmax.f32 %v2215, %v2220
    %v2222 = vsel %vm2213, %v2211, -inf
    %v2223 = vmax.f32 %v2216, %v2222
    %v2224 = vsel %vm2213, %v2212, -inf
    %v2225 = vmax.f32 %v2217, %v2224
    %v2226 = vmax.f32 %v2219, %v2221
    %v2227 = vmax.f32 %v2223, %v2225
    %v2228 = vmax.f32 %v2226, %v2227
    %v2229 = vmax.f32 %v2228, 0.0
    %v2230 = vld [vmem:[%s8] sm:$0xff]
    %v2231 = vld [vmem:[%s8 + $0x8] sm:$0xff]
    %v2232 = vld [vmem:[%s9] sm:$0xff]
    %v2233 = vld [vmem:[%s9 + $0x8] sm:$0xff]
    %v2234 = vld [vmem:[%s9 + $0x10] sm:$0xff]
    %v2235 = vld [vmem:[%s9 + $0x18] sm:$0xff]
    %v2236 = vld [vmem:[%s9 + $0x20] sm:$0xff]
    %v2237 = vld [vmem:[%s9 + $0x28] sm:$0xff]
    %v2238 = vld [vmem:[%s9 + $0x30] sm:$0xff]
    %v2239 = vld [vmem:[%s9 + $0x38] sm:$0xff]
    %2241 = vrot.lane.b32.xlu0 %v2204, 64
    %v2242 = vpop.permute.xlu0 %2241
    %v2243 = vsel %vm285, %v2242, 0
    %2245 = vmatpush.msra.mxu0 0.0
    %2246 = vmatpush.msra.mxu0 0.0
    %2247 = vmatpush.msra.mxu0 0.0
    %2248 = vmatpush.msra.mxu0 0.0
    %2249 = vmatpush.msra.mxu0 0.0
    %2250 = vmatpush.msra.mxu0 0.0
    %2251 = vmatpush.msra.mxu0 0.0
    %2252 = vmatpush.msra.mxu0 0.0
    %2253 = vmatpush.msra.mxu0 %v2239
    %2254 = vmatpush.msra.mxu0 %v2238
    %2255 = vmatpush.msra.mxu0 %v2237
    %2256 = vmatpush.msra.mxu0 %v2236
    %2257 = vmatpush.msra.mxu0 %v2235
    %2258 = vmatpush.msra.mxu0 %v2234
    %2259 = vmatpush.msra.mxu0 %v2233
    %2260 = vmatpush.msra.mxu0 %v2232
    %2261 = vmatmul.f32.gmra.mxu0 %v2243
    %v2262 = vpop.f32.mrf.mxu0
    %v2263 = vadd.f32 0.0, %v2262
    %2264 = vdwg.mxu0
    %v2266 = vsel %vm143, %v2229, 0
    %2268 = vmatpush.msra.mxu0 0.0
    %2269 = vmatpush.msra.mxu0 0.0
    %2270 = vmatpush.msra.mxu0 0.0
    %2271 = vmatpush.msra.mxu0 0.0
    %2272 = vmatpush.msra.mxu0 0.0
    %2273 = vmatpush.msra.mxu0 0.0
    %2274 = vmatpush.msra.mxu0 0.0
    %2275 = vmatpush.msra.mxu0 0.0
    %2276 = vmatpush.msra.mxu0 0.0
    %2277 = vmatpush.msra.mxu0 0.0
    %2278 = vmatpush.msra.mxu0 0.0
    %2279 = vmatpush.msra.mxu0 0.0
    %2280 = vmatpush.msra.mxu0 0.0
    %2281 = vmatpush.msra.mxu0 0.0
    %2282 = vmatpush.msra.mxu0 %v2231
    %2283 = vmatpush.msra.mxu0 %v2230
    %2284 = vmatmul.f32.gmra.mxu0 %v2266
    %v2285 = vpop.f32.mrf.mxu0
    %v2286 = vadd.f32 %v2263, %v2285
    %2287 = vdwg.mxu0
    %v2288 = vld [vmem:[%s10] sm:$0x1]
    %v2290 = vperm.slane %v2288, 0
    %v2292 = vadd.f32 %v2286, %v2290
    %vm2293 = vcmask 25600
    %v2294 = vsel %vm2293, %v2292, -inf
    %2295 = vmax.xlane.f32.xlu0 %v2294
    %v2296 = vpop.xlane.xlu0 %2295
    %v2297 = vsub.f32 %v2292, %v2296
    %v2298 = vmul.f32 %v2297, 1.442695
    %v2299 = vpow.pop %v2298
    %v2300 = vsel %vm2293, %v2299, 0.0
    %2301 = vadd.xlane.f32.xlu0 %v2300
    %v2302 = vpop.xlane.xlu0 %2301
    %v2303 = vlog2.pop %v2302
    %v2304 = vmul.f32 %v2303, 0.6931472
    %v2305 = vadd.f32 %v2296, %v2304
    %v2306 = vsub.f32 %v2292, %v2305
    %2307 = vst.msk [vmem:[#allocation11] sm:$0x3] %vm2293, %v2306
    // Predicated region
    $region58: #{tpu_custom_call.1} parent=1 // pred_check
      _
    $region59: #{tpu_custom_call.1} parent=1 // pred_check_branch
      %2309 = sbr.rel (0) target = $region61
    $region60: #{tpu_custom_call.1} parent=1 // pred_region
      %2311 = vsyncadd [#allocation7], 0
      %s2313 = sshll.u32 [#allocation11], 4
      %s2314 = int_to_ptr.vmem [resolvable:$true] %s2313
      %s2315 = sshll.u32 %s11, 4
      %s2316 = int_to_ptr.hbm [resolvable:$true] %s2315
      %2318 = dma.vmem_to_hbm [thread:$0]  %s2314, 32, %s2316, [#allocation7]
    $region61: #{tpu_custom_call.1} parent=1 // pred_fallthru
      _
    // Predicated region
    $region62: #{tpu_custom_call.1} parent=1 // pred_check
      _
    $region63: #{tpu_custom_call.1} parent=1 // pred_check_branch
      %2320 = sbr.rel (0) target = $region65
    $region64: #{tpu_custom_call.1} parent=1 // pred_region
      %2322 = dma.done [#allocation7], 32
    $region65: #{tpu_custom_call.1} parent=1 // pred_fallthru
      _
    %2323 = vsyncpa [#allocation6], 1
    %2324 = vsyncpa [#allocation9], 1
    %2325 = vsyncpa [#allocation7], 1

</llo_original>
